<compile_context>
chip_gen: v5e
topology: v5e:2x2
jax: 0.10.0
libtpu: 0.0.40
codegen_flags: <defaults>
</compile_context>

<pallas_src>
import jax
import jax.numpy as jnp
from jax.experimental import pallas as pl
from jax.experimental.pallas import tpu as pltpu


# ----------------------------- Pallas kernels ------------------------------ #

def _conv_prelu_pool_kernel(x_ref, w_ref, bias_ref, alpha_ref, o_ref):
    """Fused conv-as-matmul + 2x2/stride-2 max-pool + bias + PReLU.

    x: (4, TM, K) bf16 — the 4 pool-window taps, lane-grouped im2col rows.
    w: (K, C) bf16 block-diagonal weight.  bias: (1, C) f32 (tiled per group).
    alpha: (1, 1) f32 scalar in SMEM.  Output: (TM, C) bf16 pooled activation.
    """
    x = x_ref[...]                                   # (4, tm, K)
    t, tm, k = x.shape
    # One long MXU push (RHS held across 4x more LHS rows); the leading-dim
    # reshapes don't cross the (8,128) tile, so they are free.
    acc = jnp.dot(x.reshape(t * tm, k), w_ref[...],
                  preferred_element_type=jnp.float32)  # (4*tm, C) f32
    acc = acc.reshape(t, tm, acc.shape[-1])
    # Bias is tap-invariant and PReLU is monotone for alpha >= 0 (default 0.25),
    # so applying them once AFTER the 4-tap max is exact and 4x cheaper.
    z = jnp.max(acc, axis=0) + bias_ref[...]           # (tm, C) f32
    a = alpha_ref[0, 0]
    o_ref[...] = jnp.where(z > 0, z, a * z).astype(o_ref.dtype)


def _fc_fused_kernel(x_ref, w1_ref, b1_ref, alpha_ref, w2_ref, b2_ref, o_ref):
    """Fused Linear(K->H) + PReLU + Linear(H->C); both weights live in VMEM."""
    h = jnp.dot(x_ref[...], w1_ref[...], preferred_element_type=jnp.float32)
    h = h + b1_ref[...]
    a = alpha_ref[0, 0]
    h = jnp.where(h > 0, h, a * h)
    h = h.astype(w2_ref.dtype)                        # bf16 back into the MXU
    out = jnp.dot(h, w2_ref[...], preferred_element_type=jnp.float32)
    o_ref[...] = (out + b2_ref[...]).astype(o_ref.dtype)


# ------------------------------ wrappers ----------------------------------- #

_SMEM_SPEC = pl.BlockSpec(memory_space=pltpu.MemorySpace.SMEM)


def _round_up(x, m):
    return -(-x // m) * m


def _pick_tm(m, tm_max, min_steps=4):
    """Row tile: multiple of 8, targeting >= min_steps grid steps so both v7x
    TensorCores get work and the DMA pipeline stays warm, capped for VMEM."""
    return max(8, min(_round_up(pl.cdiv(m, min_steps), 8),
                      tm_max, _round_up(m, 8)))


def conv_prelu_pool(taps, w_bd, bias_row, alpha, *, tm_max):
    """Fused conv + PReLU + 2x2 max-pool.

    taps: (4, M, K) bf16 stacked pool-tap im2col rows (lane-grouped).
    w_bd: (K, C) bf16 block-diagonal weight.  bias_row: (1, C) f32.
    Returns (M, C) bf16 with C == 128 (lane-dense stores).
    """
    T, M, K = taps.shape
    C = w_bd.shape[1]
    tm = _pick_tm(M, tm_max)
    grid = (pl.cdiv(M, tm),)

    cost = pl.CostEstimate(
        flops=2 * T * M * K * C,
        transcendentals=0,
        bytes_accessed=(T * M * K + K * C + M * C) * 2)

    return pl.pallas_call(
        _conv_prelu_pool_kernel,
        out_shape=jax.ShapeDtypeStruct((M, C), jnp.bfloat16),
        grid=grid,
        in_specs=[pl.BlockSpec((T, tm, K), lambda i: (0, i, 0)),
                  pl.BlockSpec((K, C), lambda i: (0, 0)),
                  pl.BlockSpec((1, C), lambda i: (0, 0)),
                  _SMEM_SPEC],
        out_specs=pl.BlockSpec((tm, C), lambda i: (i, 0)),
        compiler_params=pltpu.CompilerParams(
            dimension_semantics=("parallel",)),
        cost_estimate=cost,
    )(taps, w_bd, bias_row, jnp.asarray(alpha, jnp.float32).reshape(1, 1))


def fc_prelu_fc(x, w1, b1, a1, w2, b2, *, tm_max=1024):
    """y = (PReLU(x @ w1 + b1)) @ w2 + b2, fused in a single pallas_call."""
    M, K = x.shape
    H = w1.shape[1]
    C = w2.shape[1]
    tm = _pick_tm(M, tm_max)
    grid = (pl.cdiv(M, tm),)

    cost = pl.CostEstimate(
        flops=2 * M * K * H + 2 * M * H * C,
        transcendentals=0,
        bytes_accessed=(M * K + K * H + H * C) * 2 + M * C * 4)

    return pl.pallas_call(
        _fc_fused_kernel,
        out_shape=jax.ShapeDtypeStruct((M, C), jnp.float32),
        grid=grid,
        in_specs=[pl.BlockSpec((tm, K), lambda i: (i, 0)),
                  pl.BlockSpec((K, H), lambda i: (0, 0)),
                  pl.BlockSpec((1, H), lambda i: (0, 0)),
                  _SMEM_SPEC,
                  pl.BlockSpec((H, C), lambda i: (0, 0)),
                  pl.BlockSpec((1, C), lambda i: (0, 0))],
        out_specs=pl.BlockSpec((tm, C), lambda i: (i, 0)),
        compiler_params=pltpu.CompilerParams(
            dimension_semantics=("parallel",)),
        cost_estimate=cost,
    )(x.astype(jnp.bfloat16),
      w1,
      b1.reshape(1, -1).astype(jnp.float32),
      jnp.asarray(a1, jnp.float32).reshape(1, 1),
      w2,
      b2.reshape(1, -1).astype(jnp.float32))


# ------------------------- XLA-side im2col glue ----------------------------- #

def im2col_pool_taps_grouped(x, k, *, group, pad_k_to):
    """Stacked, lane-grouped pool-tap im2col matrices.

    x: (N, H, W, C) NHWC.  For each of the 4 taps of a 2x2/stride-2 pool
    window, builds the im2col patch matrix of the k x k valid conv at the
    pooled output positions, with `group` adjacent pooled-x positions packed
    into one row (lanes ordered (group_pos, ky, kx, c_in), each group's K
    zero-padded to `pad_k_to`).

    Returns (4, N*OH2*(OW2//group), group*pad_k_to) with rows ordered
    (n, pooled_y, pooled_x // group).
    """
    N, H, W, C = x.shape
    OH, OW = H - k + 1, W - k + 1
    oh2, ow2 = OH // 2, OW // 2
    kk = k * k * C
    assert pad_k_to >= kk and ow2 % group == 0

    taps = []
    for ty in range(2):
        for tx in range(2):
            pieces = [x[:, ty + ky: ty + ky + 2 * oh2: 2,
                        tx + kx: tx + kx + 2 * ow2: 2, :]
                      for ky in range(k) for kx in range(k)]
            p = jnp.stack(pieces, axis=3)             # (N, oh2, ow2, k*k, C)
            p = p.reshape(N, oh2, ow2, kk)
            if pad_k_to > kk:
                p = jnp.pad(p, ((0, 0), (0, 0), (0, 0), (0, pad_k_to - kk)))
            p = p.reshape(N * oh2 * (ow2 // group), group * pad_k_to)
            taps.append(p)
    return jnp.stack(taps, axis=0)


# ------------------------------ parameters --------------------------------- #

def _block_diag(w, g):
    """g x g block-diagonal replication of w (K, C) -> (g*K, g*C)."""
    k, c = w.shape
    out = jnp.zeros((g * k, g * c), w.dtype)
    for i in range(g):
        out = out.at[i * k:(i + 1) * k, i * c:(i + 1) * c].set(w)
    return out


def init_params(key):
    ks = jax.random.split(key, 8)
    scale = 0.05

    # Conv2d(1, 32, 5): logical weight rows ordered (kH, kW, Cin) -> (25, 32)
    # (torch (Cout,Cin,kH,kW) would map via .transpose(2,3,1,0).reshape(25,32)).
    # K padded 25 -> 32, then 4x block-diag so 4 pooled-x positions share one
    # 128-lane output row.
    w1 = scale * jax.random.normal(ks[0], (5 * 5 * 1, 32), jnp.float32)
    w1_bd = _block_diag(jnp.pad(w1, ((0, 7), (0, 0))), 4)          # (128, 128)
    b1 = scale * jax.random.normal(ks[1], (32,), jnp.float32)

    # Conv2d(32, 64, 5): (kH,kW,Cin,Cout) flattened -> (800, 64); K padded
    # 800 -> 896 (7x128), then 2x block-diag -> (1792, 128).
    w2 = scale * jax.random.normal(ks[2], (5 * 5 * 32, 64), jnp.float32)
    w2_bd = _block_diag(jnp.pad(w2, ((0, 96), (0, 0))), 2)         # (1792, 128)
    b2 = scale * jax.random.normal(ks[3], (64,), jnp.float32)

    # Linear(64*4*4, 256): torch weight.T acts on an NCHW flatten (c, h, w).
    # Generate it in that row order, then permute the rows once into NHWC
    # flatten order (h, w, c) so the runtime transpose before flatten vanishes.
    wf1_chw = scale * jax.random.normal(ks[4], (64 * 4 * 4, 256), jnp.float32)
    wf1 = (wf1_chw.reshape(64, 4, 4, 256)
                  .transpose(1, 2, 0, 3)
                  .reshape(64 * 4 * 4, 256))

    wf2 = scale * jax.random.normal(ks[6], (256, 256), jnp.float32)

    return {
        "w1_bd": w1_bd.astype(jnp.bfloat16),
        "b1_row": jnp.tile(b1, 4).reshape(1, 128),          # f32, lane-grouped
        "a1": jnp.float32(0.25),                             # nn.PReLU() default
        "w2_bd": w2_bd.astype(jnp.bfloat16),
        "b2_row": jnp.tile(b2, 2).reshape(1, 128),
        "a2": jnp.float32(0.25),
        "wf1": wf1.astype(jnp.bfloat16),
        "bf1": scale * jax.random.normal(ks[5], (256,), jnp.float32),
        "af1": jnp.float32(0.25),
        "wf2": wf2.astype(jnp.bfloat16),
        "bf2": scale * jax.random.normal(ks[7], (256,), jnp.float32),
    }


# ------------------------------ forward pass -------------------------------- #

def embedding_net_forward(x_nchw, params):
    """EmbeddingNet: conv(1,32,5)+PReLU+pool, conv(32,64,5)+PReLU+pool,
    Linear(1024,256)+PReLU, Linear(256,256)."""
    n = x_nchw.shape[0]
    x = jnp.transpose(x_nchw, (0, 2, 3, 1)).astype(jnp.bfloat16)  # (n,28,28,1)

    # Conv1 + PReLU + MaxPool -> lane-dense (n*36, 128) == (n, 12, 12, 32).
    taps1 = im2col_pool_taps_grouped(x, 5, group=4, pad_k_to=32)  # (4, n*36, 128)
    h1 = conv_prelu_pool(taps1, params["w1_bd"], params["b1_row"], params["a1"],
                         tm_max=1024)
    h1 = h1.reshape(n, 12, 3, 4, 32).reshape(n, 12, 12, 32)       # pure reshape

    # Conv2 + PReLU + MaxPool -> lane-dense (n*8, 128) == (n, 4, 4, 64).
    taps2 = im2col_pool_taps_grouped(h1, 5, group=2, pad_k_to=896)  # (4, n*8, 1792)
    h2 = conv_prelu_pool(taps2, params["w2_bd"], params["b2_row"], params["a2"],
                         tm_max=256)
    h2 = h2.reshape(n, 4, 2, 2, 64).reshape(n, 4, 4, 64)          # pure reshape

    # Flatten is a pure reshape (NHWC order); wf1 rows were pre-permuted at
    # init to match PyTorch's channel-first view(n, -1).
    flat = h2.reshape(n, 64 * 4 * 4)

    # fc: Linear(1024,256) + PReLU + Linear(256,256), fused in one kernel.
    return fc_prelu_fc(flat, params["wf1"], params["bf1"], params["af1"],
                       params["wf2"], params["bf2"], tm_max=1024)


def get_embedding(x, params):
    return embedding_net_forward(x, params)


def triplet_net_forward(x1, x2, x3, params):
    """TripletNet.forward: one 3N-sample embedding pass, then split."""
    n = x1.shape[0]
    x = jnp.concatenate([x1, x2, x3], axis=0)
    emb = embedding_net_forward(x, params)
    return emb[:n], emb[n:2 * n], emb[2 * n:]


# --------------------------------- main ------------------------------------- #

if __name__ == "__main__":
    key = jax.random.PRNGKey(0)
    k1, k2, k3, kp = jax.random.split(key, 4)
    # Input must be 28x28 so the conv stack produces the 64*4*4 FC features.
    x1 = jax.random.normal(k1, (2, 1, 28, 28), jnp.float32)
    x2 = jax.random.normal(k2, (2, 1, 28, 28), jnp.float32)
    x3 = jax.random.normal(k3, (2, 1, 28, 28), jnp.float32)
    params = init_params(kp)

    fwd = jax.jit(triplet_net_forward)
    o1, o2, o3 = fwd(x1, x2, x3, params)
    jax.block_until_ready((o1, o2, o3))
    assert o1.shape == (2, 256), o1.shape
    assert o2.shape == (2, 256), o2.shape
    assert o3.shape == (2, 256), o3.shape
    print("KERNEL_OK")
</pallas_src>

<mosaic_0001>
module attributes {stable_mosaic.version = 11 : i64} {
  func.func @_conv_prelu_pool_kernel(%arg0: i32, %arg1: memref<4x56x128xbf16, #tpu.memory_space<vmem>>, %arg2: memref<128x128xbf16, #tpu.memory_space<vmem>>, %arg3: memref<1x128xf32, #tpu.memory_space<vmem>>, %arg4: memref<1x1xf32, #tpu.memory_space<smem>>, %arg5: memref<56x128xbf16, #tpu.memory_space<vmem>>) attributes {dimension_semantics = [#tpu.dimension_semantics<parallel>], iteration_bounds = array<i64: 4>, scalar_prefetch = 0 : i64, scratch_operands = 0 : i64, tpu.core_type = #tpu.core_type<tc>, window_params = [{transform_indices = @transform_0, window_bounds = array<i64: 4, 56, 128>}, {pipeline_mode = #tpu.pipeline_mode<synchronous>, transform_indices = @transform_1, window_bounds = array<i64: 128, 128>}, {pipeline_mode = #tpu.pipeline_mode<synchronous>, transform_indices = @transform_2, window_bounds = array<i64: 1, 128>}, {transform_indices = @transform_3, window_bounds = array<i64: 1, 1>}, {transform_indices = @transform_4, window_bounds = array<i64: 56, 128>}]} {
    %c0 = arith.constant 0 : index
    %c0_0 = arith.constant 0 : index
    %c0_1 = arith.constant 0 : index
    %0 = vector.load %arg1[%c0, %c0_0, %c0_1] : memref<4x56x128xbf16, #tpu.memory_space<vmem>>, vector<4x56x128xbf16>
    %1 = vector.shape_cast %0 : vector<4x56x128xbf16> to vector<224x128xbf16>
    %c0_2 = arith.constant 0 : index
    %c0_3 = arith.constant 0 : index
    %2 = vector.load %arg2[%c0_2, %c0_3] : memref<128x128xbf16, #tpu.memory_space<vmem>>, vector<128x128xbf16>
    %cst = arith.constant dense<0.000000e+00> : vector<224x128xf32>
    %3 = tpu.matmul %1, %2, %cst {dimension_numbers = #tpu.dot_dimension_numbers<[1], [0], [0], [1], [0, 0, 1, 1], [], []>} : vector<224x128xbf16>, vector<128x128xbf16>, vector<224x128xf32> -> vector<224x128xf32>
    %4 = vector.shape_cast %3 : vector<224x128xf32> to vector<4x56x128xf32>
    %cst_4 = arith.constant dense<0xFF800000> : vector<56x128xf32>
    %5 = vector.multi_reduction <maximumf>, %4, %cst_4 [0] : vector<4x56x128xf32> to vector<56x128xf32>
    %c0_5 = arith.constant 0 : index
    %c0_6 = arith.constant 0 : index
    %6 = vector.load %arg3[%c0_5, %c0_6] : memref<1x128xf32, #tpu.memory_space<vmem>>, vector<1x128xf32>
    %7 = vector.broadcast %6 : vector<1x128xf32> to vector<56x128xf32>
    %8 = arith.addf %5, %7 : vector<56x128xf32>
    %c0_7 = arith.constant 0 : index
    %c0_8 = arith.constant 0 : index
    %9 = memref.load %arg4[%c0_7, %c0_8] : memref<1x1xf32, #tpu.memory_space<smem>>
    %cst_9 = arith.constant 0.000000e+00 : f32
    %10 = vector.broadcast %cst_9 : f32 to vector<56x128xf32>
    %11 = arith.cmpf ogt, %8, %10 : vector<56x128xf32>
    %12 = vector.broadcast %9 : f32 to vector<56x128xf32>
    %13 = arith.mulf %12, %8 : vector<56x128xf32>
    %14 = arith.select %11, %8, %13 : vector<56x128xi1>, vector<56x128xf32>
    %15 = arith.truncf %14 : vector<56x128xf32> to vector<56x128xbf16>
    %c0_10 = arith.constant 0 : index
    %c0_11 = arith.constant 0 : index
    %16 = vector.load %arg5[%c0_10, %c0_11] : memref<56x128xbf16, #tpu.memory_space<vmem>>, vector<56x128xbf16>
    tpu.vector_store %arg5[%c0_10, %c0_11], %15 {strides = array<i32>} : memref<56x128xbf16, #tpu.memory_space<vmem>>, vector<56x128xbf16>,
    return
  }
  func.func @transform_0(%arg0: i32) -> (i32, i32, i32) {
    %c0_i32 = arith.constant 0 : i32
    %c0_i32_0 = arith.constant 0 : i32
    %c0_i32_1 = arith.constant 0 : i32
    return %c0_i32, %arg0, %c0_i32_0 : i32, i32, i32
  }
  func.func @transform_1(%arg0: i32) -> (i32, i32) {
    %c0_i32 = arith.constant 0 : i32
    %c0_i32_0 = arith.constant 0 : i32
    %c0_i32_1 = arith.constant 0 : i32
    return %c0_i32, %c0_i32_0 : i32, i32
  }
  func.func @transform_2(%arg0: i32) -> (i32, i32) {
    %c0_i32 = arith.constant 0 : i32
    %c0_i32_0 = arith.constant 0 : i32
    %c0_i32_1 = arith.constant 0 : i32
    return %c0_i32, %c0_i32_0 : i32, i32
  }
  func.func @transform_3(%arg0: i32) -> (i32, i32) {
    %c0_i32 = arith.constant 0 : i32
    %c0_i32_0 = arith.constant 0 : i32
    %c0_i32_1 = arith.constant 0 : i32
    return %c0_i32, %c0_i32_0 : i32, i32
  }
  func.func @transform_4(%arg0: i32) -> (i32, i32) {
    %c0_i32 = arith.constant 0 : i32
    %c0_i32_0 = arith.constant 0 : i32
    return %arg0, %c0_i32 : i32, i32
  }
}

module attributes {stable_mosaic.version = 11 : i64} {
  func.func @_conv_prelu_pool_kernel(%arg0: i32, %arg1: memref<4x16x1792xbf16, #tpu.memory_space<vmem>>, %arg2: memref<1792x128xbf16, #tpu.memory_space<vmem>>, %arg3: memref<1x128xf32, #tpu.memory_space<vmem>>, %arg4: memref<1x1xf32, #tpu.memory_space<smem>>, %arg5: memref<16x128xbf16, #tpu.memory_space<vmem>>) attributes {dimension_semantics = [#tpu.dimension_semantics<parallel>], iteration_bounds = array<i64: 3>, scalar_prefetch = 0 : i64, scratch_operands = 0 : i64, tpu.core_type = #tpu.core_type<tc>, window_params = [{transform_indices = @transform_0, window_bounds = array<i64: 4, 16, 1792>}, {pipeline_mode = #tpu.pipeline_mode<synchronous>, transform_indices = @transform_1, window_bounds = array<i64: 1792, 128>}, {pipeline_mode = #tpu.pipeline_mode<synchronous>, transform_indices = @transform_2, window_bounds = array<i64: 1, 128>}, {transform_indices = @transform_3, window_bounds = array<i64: 1, 1>}, {transform_indices = @transform_4, window_bounds = array<i64: 16, 128>}]} {
    %c0 = arith.constant 0 : index
    %c0_0 = arith.constant 0 : index
    %c0_1 = arith.constant 0 : index
    %0 = vector.load %arg1[%c0, %c0_0, %c0_1] : memref<4x16x1792xbf16, #tpu.memory_space<vmem>>, vector<4x16x1792xbf16>
    %1 = vector.shape_cast %0 : vector<4x16x1792xbf16> to vector<64x1792xbf16>
    %c0_2 = arith.constant 0 : index
    %c0_3 = arith.constant 0 : index
    %2 = vector.load %arg2[%c0_2, %c0_3] : memref<1792x128xbf16, #tpu.memory_space<vmem>>, vector<1792x128xbf16>
    %cst = arith.constant dense<0.000000e+00> : vector<64x128xf32>
    %3 = tpu.matmul %1, %2, %cst {dimension_numbers = #tpu.dot_dimension_numbers<[1], [0], [0], [1], [0, 0, 1, 1], [], []>} : vector<64x1792xbf16>, vector<1792x128xbf16>, vector<64x128xf32> -> vector<64x128xf32>
    %4 = vector.shape_cast %3 : vector<64x128xf32> to vector<4x16x128xf32>
    %cst_4 = arith.constant dense<0xFF800000> : vector<16x128xf32>
    %5 = vector.multi_reduction <maximumf>, %4, %cst_4 [0] : vector<4x16x128xf32> to vector<16x128xf32>
    %c0_5 = arith.constant 0 : index
    %c0_6 = arith.constant 0 : index
    %6 = vector.load %arg3[%c0_5, %c0_6] : memref<1x128xf32, #tpu.memory_space<vmem>>, vector<1x128xf32>
    %7 = vector.broadcast %6 : vector<1x128xf32> to vector<16x128xf32>
    %8 = arith.addf %5, %7 : vector<16x128xf32>
    %c0_7 = arith.constant 0 : index
    %c0_8 = arith.constant 0 : index
    %9 = memref.load %arg4[%c0_7, %c0_8] : memref<1x1xf32, #tpu.memory_space<smem>>
    %cst_9 = arith.constant 0.000000e+00 : f32
    %10 = vector.broadcast %cst_9 : f32 to vector<16x128xf32>
    %11 = arith.cmpf ogt, %8, %10 : vector<16x128xf32>
    %12 = vector.broadcast %9 : f32 to vector<16x128xf32>
    %13 = arith.mulf %12, %8 : vector<16x128xf32>
    %14 = arith.select %11, %8, %13 : vector<16x128xi1>, vector<16x128xf32>
    %15 = arith.truncf %14 : vector<16x128xf32> to vector<16x128xbf16>
    %c0_10 = arith.constant 0 : index
    %c0_11 = arith.constant 0 : index
    %16 = vector.load %arg5[%c0_10, %c0_11] : memref<16x128xbf16, #tpu.memory_space<vmem>>, vector<16x128xbf16>
    tpu.vector_store %arg5[%c0_10, %c0_11], %15 {strides = array<i32>} : memref<16x128xbf16, #tpu.memory_space<vmem>>, vector<16x128xbf16>,
    return
  }
  func.func @transform_0(%arg0: i32) -> (i32, i32, i32) {
    %c0_i32 = arith.constant 0 : i32
    %c0_i32_0 = arith.constant 0 : i32
    %c0_i32_1 = arith.constant 0 : i32
    return %c0_i32, %arg0, %c0_i32_0 : i32, i32, i32
  }
  func.func @transform_1(%arg0: i32) -> (i32, i32) {
    %c0_i32 = arith.constant 0 : i32
    %c0_i32_0 = arith.constant 0 : i32
    %c0_i32_1 = arith.constant 0 : i32
    return %c0_i32, %c0_i32_0 : i32, i32
  }
  func.func @transform_2(%arg0: i32) -> (i32, i32) {
    %c0_i32 = arith.constant 0 : i32
    %c0_i32_0 = arith.constant 0 : i32
    %c0_i32_1 = arith.constant 0 : i32
    return %c0_i32, %c0_i32_0 : i32, i32
  }
  func.func @transform_3(%arg0: i32) -> (i32, i32) {
    %c0_i32 = arith.constant 0 : i32
    %c0_i32_0 = arith.constant 0 : i32
    %c0_i32_1 = arith.constant 0 : i32
    return %c0_i32, %c0_i32_0 : i32, i32
  }
  func.func @transform_4(%arg0: i32) -> (i32, i32) {
    %c0_i32 = arith.constant 0 : i32
    %c0_i32_0 = arith.constant 0 : i32
    return %arg0, %c0_i32 : i32, i32
  }
}

module attributes {stable_mosaic.version = 11 : i64} {
  func.func @_fc_fused_kernel(%arg0: i32, %arg1: memref<8x1024xbf16, #tpu.memory_space<vmem>>, %arg2: memref<1024x256xbf16, #tpu.memory_space<vmem>>, %arg3: memref<1x256xf32, #tpu.memory_space<vmem>>, %arg4: memref<1x1xf32, #tpu.memory_space<smem>>, %arg5: memref<256x256xbf16, #tpu.memory_space<vmem>>, %arg6: memref<1x256xf32, #tpu.memory_space<vmem>>, %arg7: memref<8x256xf32, #tpu.memory_space<vmem>>) attributes {dimension_semantics = [#tpu.dimension_semantics<parallel>], iteration_bounds = array<i64: 1>, scalar_prefetch = 0 : i64, scratch_operands = 0 : i64, tpu.core_type = #tpu.core_type<tc>, window_params = [{transform_indices = @transform_0, window_bounds = array<i64: 8, 1024>}, {pipeline_mode = #tpu.pipeline_mode<synchronous>, transform_indices = @transform_1, window_bounds = array<i64: 1024, 256>}, {pipeline_mode = #tpu.pipeline_mode<synchronous>, transform_indices = @transform_2, window_bounds = array<i64: 1, 256>}, {transform_indices = @transform_3, window_bounds = array<i64: 1, 1>}, {pipeline_mode = #tpu.pipeline_mode<synchronous>, transform_indices = @transform_4, window_bounds = array<i64: 256, 256>}, {pipeline_mode = #tpu.pipeline_mode<synchronous>, transform_indices = @transform_5, window_bounds = array<i64: 1, 256>}, {transform_indices = @transform_6, window_bounds = array<i64: 8, 256>}]} {
    %c0 = arith.constant 0 : index
    %c0_0 = arith.constant 0 : index
    %0 = vector.load %arg1[%c0, %c0_0] : memref<8x1024xbf16, #tpu.memory_space<vmem>>, vector<8x1024xbf16>
    %c0_1 = arith.constant 0 : index
    %c0_2 = arith.constant 0 : index
    %1 = vector.load %arg2[%c0_1, %c0_2] : memref<1024x256xbf16, #tpu.memory_space<vmem>>, vector<1024x256xbf16>
    %cst = arith.constant dense<0.000000e+00> : vector<8x256xf32>
    %2 = tpu.matmul %0, %1, %cst {dimension_numbers = #tpu.dot_dimension_numbers<[1], [0], [0], [1], [0, 0, 1, 1], [], []>} : vector<8x1024xbf16>, vector<1024x256xbf16>, vector<8x256xf32> -> vector<8x256xf32>
    %c0_3 = arith.constant 0 : index
    %c0_4 = arith.constant 0 : index
    %3 = vector.load %arg3[%c0_3, %c0_4] : memref<1x256xf32, #tpu.memory_space<vmem>>, vector<1x256xf32>
    %4 = vector.broadcast %3 : vector<1x256xf32> to vector<8x256xf32>
    %5 = arith.addf %2, %4 : vector<8x256xf32>
    %c0_5 = arith.constant 0 : index
    %c0_6 = arith.constant 0 : index
    %6 = memref.load %arg4[%c0_5, %c0_6] : memref<1x1xf32, #tpu.memory_space<smem>>
    %cst_7 = arith.constant 0.000000e+00 : f32
    %7 = vector.broadcast %cst_7 : f32 to vector<8x256xf32>
    %8 = arith.cmpf ogt, %5, %7 : vector<8x256xf32>
    %9 = vector.broadcast %6 : f32 to vector<8x256xf32>
    %10 = arith.mulf %9, %5 : vector<8x256xf32>
    %11 = arith.select %8, %5, %10 : vector<8x256xi1>, vector<8x256xf32>
    %12 = arith.truncf %11 : vector<8x256xf32> to vector<8x256xbf16>
    %c0_8 = arith.constant 0 : index
    %c0_9 = arith.constant 0 : index
    %13 = vector.load %arg5[%c0_8, %c0_9] : memref<256x256xbf16, #tpu.memory_space<vmem>>, vector<256x256xbf16>
    %cst_10 = arith.constant dense<0.000000e+00> : vector<8x256xf32>
    %14 = tpu.matmul %12, %13, %cst_10 {dimension_numbers = #tpu.dot_dimension_numbers<[1], [0], [0], [1], [0, 0, 1, 1], [], []>} : vector<8x256xbf16>, vector<256x256xbf16>, vector<8x256xf32> -> vector<8x256xf32>
    %c0_11 = arith.constant 0 : index
    %c0_12 = arith.constant 0 : index
    %15 = vector.load %arg6[%c0_11, %c0_12] : memref<1x256xf32, #tpu.memory_space<vmem>>, vector<1x256xf32>
    %16 = vector.broadcast %15 : vector<1x256xf32> to vector<8x256xf32>
    %17 = arith.addf %14, %16 : vector<8x256xf32>
    %c0_13 = arith.constant 0 : index
    %c0_14 = arith.constant 0 : index
    %18 = vector.load %arg7[%c0_13, %c0_14] : memref<8x256xf32, #tpu.memory_space<vmem>>, vector<8x256xf32>
    tpu.vector_store %arg7[%c0_13, %c0_14], %17 {strides = array<i32>} : memref<8x256xf32, #tpu.memory_space<vmem>>, vector<8x256xf32>,
    return
  }
  func.func @transform_0(%arg0: i32) -> (i32, i32) {
    %c0_i32 = arith.constant 0 : i32
    %c0_i32_0 = arith.constant 0 : i32
    return %arg0, %c0_i32 : i32, i32
  }
  func.func @transform_1(%arg0: i32) -> (i32, i32) {
    %c0_i32 = arith.constant 0 : i32
    %c0_i32_0 = arith.constant 0 : i32
    %c0_i32_1 = arith.constant 0 : i32
    return %c0_i32, %c0_i32_0 : i32, i32
  }
  func.func @transform_2(%arg0: i32) -> (i32, i32) {
    %c0_i32 = arith.constant 0 : i32
    %c0_i32_0 = arith.constant 0 : i32
    %c0_i32_1 = arith.constant 0 : i32
    return %c0_i32, %c0_i32_0 : i32, i32
  }
  func.func @transform_3(%arg0: i32) -> (i32, i32) {
    %c0_i32 = arith.constant 0 : i32
    %c0_i32_0 = arith.constant 0 : i32
    %c0_i32_1 = arith.constant 0 : i32
    return %c0_i32, %c0_i32_0 : i32, i32
  }
  func.func @transform_4(%arg0: i32) -> (i32, i32) {
    %c0_i32 = arith.constant 0 : i32
    %c0_i32_0 = arith.constant 0 : i32
    %c0_i32_1 = arith.constant 0 : i32
    return %c0_i32, %c0_i32_0 : i32, i32
  }
  func.func @transform_5(%arg0: i32) -> (i32, i32) {
    %c0_i32 = arith.constant 0 : i32
    %c0_i32_0 = arith.constant 0 : i32
    %c0_i32_1 = arith.constant 0 : i32
    return %c0_i32, %c0_i32_0 : i32, i32
  }
  func.func @transform_6(%arg0: i32) -> (i32, i32) {
    %c0_i32 = arith.constant 0 : i32
    %c0_i32_0 = arith.constant 0 : i32
    return %arg0, %c0_i32 : i32, i32
  }
}

</mosaic_0001>

<llo_original>
// kernel: triplet_net_forward.3
$region0: #{triplet_net_forward.3}
  #allocation0 [shape = 'u32[]', space=smem, size = 0x4, offset = 0x4, fixed_abs, tag = 'smem constant byte address 0x4 - core index']
  #allocation1 [shape = 'u32[72,128]{1,0:T(1,128)}', space=vmem, size = 0x9000, scoped, tag = 'internal scratch']
  #allocation2 [shape = 'f32[1,1]{1,0:T(1,128)S(6)}', space=smem, size = 0x200, scoped, tag = 'scoped memory for triplet_net_forward.3']
  %s0 = inlined_call_operand.vmem [shape: bf16[4,216,128], index: 0, kind: input, shape index: {}]
  %s1 = inlined_call_operand.vmem [shape: bf16[128,128], index: 1, kind: input, shape index: {}]
  %s2 = inlined_call_operand.vmem [shape: f32[1,128], index: 2, kind: input, shape index: {}]
  %s3 = inlined_call_operand.<no memory space> [shape: f32[1,1], index: 3, kind: input, shape index: {}]
  %s4 = inlined_call_operand.vmem [shape: bf16[216,128], index: 4, kind: output, shape index: {}]
  %s5 = sld [smem:[#allocation0]]
  $region155: #{triplet_net_forward.3} parent=0
    _
  %s7 = ssub.s32 1, %s5
  %s8 = scalar_select 0, %s7, %s5
  %9 = sst [smem:[#allocation2]] %s3
  $region1: #{triplet_net_forward.3} parent=0
    #allocation3 [shape = 'u8[114688]{0}', space=vmem, size = 0x1c000, scoped, tag = 'input window, operand 0']
    #allocation4 [shape = 'u8[28672]{0}', space=vmem, size = 0x7000, scoped, tag = 'output window, operand 0']
    loop: start=0, step=1, limit=6
    $region2: #{triplet_net_forward.3} parent=1 // loop_pre_header
      _
    $region3: #{triplet_net_forward.3} parent=1 // loop_header
      %s11 = sphi 0, %s15
      %p12 = scmp.ge.s32.totalorder %s11, 6
      %s21 = sphi 0, %s23
      %s24 = sphi 0, %s21
      %s25 = sphi 0, %s24
      %s41 = sphi 0, %s25
      %s45 = sphi 0, %s45
      %s47 = sphi 0, %s45
      %s48 = sphi 0, %s47
      %s62 = sphi 0, %s48
      %s66 = sphi 0, %s66
      %s68 = sphi 0, %s66
      %s69 = sphi 0, %s68
      %s83 = sphi 0, %s69
      %s87 = sphi 0, %s87
      %s89 = sphi 0, %s87
      %s90 = sphi 0, %s89
      %s104 = sphi 0, %s90
      %s110 = sphi 0, %s112
      %s113 = sphi 0, %s110
      %s114 = sphi 0, %s113
      %s130 = sphi 0, %s114
    $region4: #{triplet_net_forward.3} parent=1 // loop_header_branch
      %14 = sbr.rel (%p12) target = $region8
    $region5: #{triplet_net_forward.3} parent=1 // loop_body
      %s16 = ssub.s32 %s11, 1
      %s17 = ssub.s32 %s11, 2
      %s18 = sadd.s32 %s11, 1
      %s19 = ssub.s32 %s11, %s18
      %p20 = scmp.eq.s32.totalorder %s19, 0
      %s22 = sadd.s32 %s21, 1
      %s23 = scalar_select %p20, %s21, %s22
      %p26 = pneg %p20
      %p27 = scmp.eq.s32.totalorder %s11, 3
      %p28 = por %p26, %p27
      %p29 = scmp.ne.s32.totalorder %s21, %s24
      %p30 = scmp.eq.s32.totalorder %s11, 0
      %p31 = por %p29, %p30
      %p32 = scmp.ne.s32.totalorder %s21, %s24
      %p33 = scmp.eq.s32.totalorder %s16, 3
      %p34 = por %p32, %p33
      %p35 = scmp.ne.s32.totalorder %s24, %s25
      %p36 = scmp.eq.s32.totalorder %s16, 0
      %p37 = por %p35, %p36
      %p38 = scmp.ne.s32.totalorder %s24, %s25
      %p39 = scmp.eq.s32.totalorder %s17, 3
      %p40 = por %p38, %p39
      %p42 = scmp.ne.s32.totalorder %s25, %s41
      %p43 = scmp.eq.s32.totalorder %s17, 0
      %p44 = por %p42, %p43
      %s46 = sadd.s32 %s45, 1
      %p49 = scmp.eq.s32.totalorder %s11, 3
      %p50 = scmp.ne.s32.totalorder %s45, %s47
      %p51 = scmp.eq.s32.totalorder %s11, 0
      %p52 = por %p50, %p51
      %p53 = scmp.ne.s32.totalorder %s45, %s47
      %p54 = scmp.eq.s32.totalorder %s16, 3
      %p55 = por %p53, %p54
      %p56 = scmp.ne.s32.totalorder %s47, %s48
      %p57 = scmp.eq.s32.totalorder %s16, 0
      %p58 = por %p56, %p57
      %p59 = scmp.ne.s32.totalorder %s47, %s48
      %p60 = scmp.eq.s32.totalorder %s17, 3
      %p61 = por %p59, %p60
      %p63 = scmp.ne.s32.totalorder %s48, %s62
      %p64 = scmp.eq.s32.totalorder %s17, 0
      %p65 = por %p63, %p64
      %s67 = sadd.s32 %s66, 1
      %p70 = scmp.eq.s32.totalorder %s11, 3
      %p71 = scmp.ne.s32.totalorder %s66, %s68
      %p72 = scmp.eq.s32.totalorder %s11, 0
      %p73 = por %p71, %p72
      %p74 = scmp.ne.s32.totalorder %s66, %s68
      %p75 = scmp.eq.s32.totalorder %s16, 3
      %p76 = por %p74, %p75
      %p77 = scmp.ne.s32.totalorder %s68, %s69
      %p78 = scmp.eq.s32.totalorder %s16, 0
      %p79 = por %p77, %p78
      %p80 = scmp.ne.s32.totalorder %s68, %s69
      %p81 = scmp.eq.s32.totalorder %s17, 3
      %p82 = por %p80, %p81
      %p84 = scmp.ne.s32.totalorder %s69, %s83
      %p85 = scmp.eq.s32.totalorder %s17, 0
      %p86 = por %p84, %p85
      %s88 = sadd.s32 %s87, 1
      %p91 = scmp.eq.s32.totalorder %s11, 3
      %p92 = scmp.ne.s32.totalorder %s87, %s89
      %p93 = scmp.eq.s32.totalorder %s11, 0
      %p94 = por %p92, %p93
      %p95 = scmp.ne.s32.totalorder %s87, %s89
      %p96 = scmp.eq.s32.totalorder %s16, 3
      %p97 = por %p95, %p96
      %p98 = scmp.ne.s32.totalorder %s89, %s90
      %p99 = scmp.eq.s32.totalorder %s16, 0
      %p100 = por %p98, %p99
      %p101 = scmp.ne.s32.totalorder %s89, %s90
      %p102 = scmp.eq.s32.totalorder %s17, 3
      %p103 = por %p101, %p102
      %p105 = scmp.ne.s32.totalorder %s90, %s104
      %p106 = scmp.eq.s32.totalorder %s17, 0
      %p107 = por %p105, %p106
      %s108 = ssub.s32 %s11, %s18
      %p109 = scmp.eq.s32.totalorder %s108, 0
      %s111 = sadd.s32 %s110, 1
      %s112 = scalar_select %p109, %s110, %s111
      %p115 = pneg %p109
      %p116 = scmp.eq.s32.totalorder %s11, 3
      %p117 = por %p115, %p116
      %p118 = scmp.ne.s32.totalorder %s110, %s113
      %p119 = scmp.eq.s32.totalorder %s11, 0
      %p120 = por %p118, %p119
      %p121 = scmp.ne.s32.totalorder %s110, %s113
      %p122 = scmp.eq.s32.totalorder %s16, 3
      %p123 = por %p121, %p122
      %p124 = scmp.ne.s32.totalorder %s113, %s114
      %p125 = scmp.eq.s32.totalorder %s16, 0
      %p126 = por %p124, %p125
      %p127 = scmp.ne.s32.totalorder %s113, %s114
      %p128 = scmp.eq.s32.totalorder %s17, 3
      %p129 = por %p127, %p128
      %p131 = scmp.ne.s32.totalorder %s114, %s130
      %p132 = scmp.eq.s32.totalorder %s17, 0
      %p133 = por %p131, %p132
      %p134 = scmp.le.s32.totalorder 1, %s11
      %p135 = scmp.lt.s32.totalorder %s11, 5
      %p136 = pnand %p134, %p135
      %p137 = pneg %p136
      // Predicated region
      $region9: #{triplet_net_forward.3} parent=5 // pred_check
        _
      $region10: #{triplet_net_forward.3} parent=5 // pred_check_branch
        %139 = sbr.rel (%p136) target = $region12
      $region11: #{triplet_net_forward.3} parent=5 // pred_region
        %s140 = ssub.s32 %s11, 1
        // Predicated region
        $region13: #{triplet_net_forward.3} parent=11 // pred_check
          %p141 = pneg %p58
        $region14: #{triplet_net_forward.3} parent=11 // pred_check_branch
          %143 = sbr.rel (%p141) target = $region16
        $region15: #{triplet_net_forward.3} parent=11 // pred_region
          _
        $region16: #{triplet_net_forward.3} parent=11 // pred_fallthru
          _
        // Predicated region
        $region17: #{triplet_net_forward.3} parent=11 // pred_check
          %p144 = pneg %p79
        $region18: #{triplet_net_forward.3} parent=11 // pred_check_branch
          %146 = sbr.rel (%p144) target = $region20
        $region19: #{triplet_net_forward.3} parent=11 // pred_region
          _
        $region20: #{triplet_net_forward.3} parent=11 // pred_fallthru
          _
        // Predicated region
        $region21: #{triplet_net_forward.3} parent=11 // pred_check
          %p147 = pneg %p100
        $region22: #{triplet_net_forward.3} parent=11 // pred_check_branch
          %149 = sbr.rel (%p147) target = $region24
        $region23: #{triplet_net_forward.3} parent=11 // pred_region
          _
        $region24: #{triplet_net_forward.3} parent=11 // pred_fallthru
          _
      $region12: #{triplet_net_forward.3} parent=5 // pred_fallthru
        _
      %p150 = scmp.lt.s32.totalorder %s11, 4
      // Predicated region
      $region25: #{triplet_net_forward.3} parent=5 // pred_check
        %p151 = pneg %p150
      $region26: #{triplet_net_forward.3} parent=5 // pred_check_branch
        %153 = sbr.rel (%p151) target = $region28
      $region27: #{triplet_net_forward.3} parent=5 // pred_region
        // Predicated region
        $region29: #{triplet_net_forward.3} parent=27 // pred_check
          %p154 = pneg %p31
        $region30: #{triplet_net_forward.3} parent=27 // pred_check_branch
          %156 = sbr.rel (%p154) target = $region32
        $region31: #{triplet_net_forward.3} parent=27 // pred_region
          %s157 = sand.u32 %s21, 1
          %s158 = sand.u32 %s21, 1
          %s159 = smul.addr %s158, 112
          %s160 = scalar_lea.vmem [#allocation3], %s159
          %s161 = smul.u32 7, %s11
          %s162 = ssub.s32 27, %s161
          %p163 = scmp.lt.s32.totalorder %s162, 7
          %s164 = scalar_select %p163, %s162, 7
          %s165 = smul.u32 16, %s164
          %p166 = scmp.ne.s32.totalorder 0, %s165
          %s167 = smul.addr %s161, 4
          %s168 = scalar_lea.vmem %s0, %s167
          // Predicated region
          $region33: #{triplet_net_forward.3} parent=31 // pred_check
            %p169 = pneg %p166
          $region34: #{triplet_net_forward.3} parent=31 // pred_check_branch
            %171 = sbr.rel (%p169) target = $region36
          $region35: #{triplet_net_forward.3} parent=31 // pred_region
            // Predicated region
            $region37: #{triplet_net_forward.3} parent=35 // pred_check
              _
            $region38: #{triplet_net_forward.3} parent=35 // pred_check_branch
              %173 = sbr.rel target = $region40
            $region39: #{triplet_net_forward.3} parent=35 // pred_region
              // Predicated region
              $region59: #{triplet_net_forward.3} parent=39 // pred_check
                _
              $region60: #{triplet_net_forward.3} parent=39 // pred_check_branch
                %284 = sbr.rel (0) target = $region62
              $region61: #{triplet_net_forward.3} parent=39 // pred_region
                %s285 = sdiv.u32.pop %s164, 7
                %s286 = srem.u32.pop %s164, 7
                // While loop
                $region63: #{triplet_net_forward.3} parent=61 // loop_pre_header
                  _
                $region64: #{triplet_net_forward.3} parent=61 // loop_header
                  %s288 = sphi 0, %s290
                  %p289 = scmp.ge.s32.totalorder %s288, %s285
                  %s293 = sphi 0, %s298
                  %s294 = sphi %s168, %s301
                  %s295 = sphi %s160, %s302
                $region65: #{triplet_net_forward.3} parent=61 // loop_header_branch
                  %292 = sbr.rel (%p289) target = $region69
                $region66: #{triplet_net_forward.3} parent=61 // loop_body
                  %s296 = sadd.s32 1, %s293
                  %p297 = scmp.ge.s32.totalorder %s296, %s285
                  %s298 = scalar_select %p297, 0, %s296
                  %s299 = smul.u32 %s298, 28
                  %s300 = smul.u32 %s298, 28
                  %s301 = scalar_lea.vmem %s168, %s299
                  %s302 = scalar_lea.vmem %s160, %s300 [#allocation3]
                $region67: #{triplet_net_forward.3} parent=61 // loop_footer
                  %s290 = sadd.s32 %s288, 1
                $region68: #{triplet_net_forward.3} parent=61 // loop_footer_branch
                  %287 = sbr.rel target = $region64
                $region69: #{triplet_net_forward.3} parent=61 // loop_exit
                  _
                %s303 = sdiv.u32.pop %s164, 7
                %s304 = srem.u32.pop %s164, 7
                %s305 = smul.u32 %s303, 7
                %s306 = smul.u32 4, %s305
                %s307 = scalar_lea.vmem %s168, %s306
                %s308 = smul.u32 4, %s305
                %s309 = scalar_lea.vmem %s160, %s308 [#allocation3]
                // While loop
                $region70: #{triplet_net_forward.3} parent=61 // loop_pre_header
                  _
                $region71: #{triplet_net_forward.3} parent=61 // loop_header
                  %s311 = sphi 0, %s313
                  %p312 = scmp.ge.s32.totalorder %s311, %s304
                  %s316 = sphi 0, %s321
                  %s317 = sphi %s307, %s324
                  %s318 = sphi %s309, %s325
                $region72: #{triplet_net_forward.3} parent=61 // loop_header_branch
                  %315 = sbr.rel (%p312) target = $region76
                $region73: #{triplet_net_forward.3} parent=61 // loop_body
                  %s319 = sadd.s32 1, %s316
                  %p320 = scmp.ge.s32.totalorder %s319, %s304
                  %s321 = scalar_select %p320, 0, %s319
                  %s322 = smul.u32 %s321, 4
                  %s323 = smul.u32 %s321, 4
                  %s324 = scalar_lea.vmem %s307, %s322
                  %s325 = scalar_lea.vmem %s309, %s323 [#allocation3]
                $region74: #{triplet_net_forward.3} parent=61 // loop_footer
                  %s313 = sadd.s32 %s311, 1
                $region75: #{triplet_net_forward.3} parent=61 // loop_footer_branch
                  %310 = sbr.rel target = $region71
                $region76: #{triplet_net_forward.3} parent=61 // loop_exit
                  _
                %s327 = ssub.s32 16, 1
                %s328 = sdiv.u32.pop %s164, 7
                %s329 = srem.u32.pop %s164, 7
                // While loop
                $region77: #{triplet_net_forward.3} parent=61 // loop_pre_header
                  _
                $region78: #{triplet_net_forward.3} parent=61 // loop_header
                  %s331 = sphi 0, %s333
                  %p332 = scmp.ge.s32.totalorder %s331, %s328
                  %s336 = sphi 0, %s397
                  %s337 = sphi %s168, %s400
                  %s338 = sphi %s160, %s401
                $region79: #{triplet_net_forward.3} parent=61 // loop_header_branch
                  %335 = sbr.rel (%p332) target = $region83
                $region80: #{triplet_net_forward.3} parent=61 // loop_body
                  %v339 = vld [vmem:[%s337] sm:%s327]
                  %340 = vst [vmem:[%s338] sm:%s327] %v339
                  %v341 = vld [vmem:[%s337 + $0x4] sm:%s327]
                  %342 = vst [vmem:[%s338 + $0x4] sm:%s327] %v341
                  %v343 = vld [vmem:[%s337 + $0x8] sm:%s327]
                  %344 = vst [vmem:[%s338 + $0x8] sm:%s327] %v343
                  %v345 = vld [vmem:[%s337 + $0xc] sm:%s327]
                  %346 = vst [vmem:[%s338 + $0xc] sm:%s327] %v345
                  %v347 = vld [vmem:[%s337 + $0x10] sm:%s327]
                  %348 = vst [vmem:[%s338 + $0x10] sm:%s327] %v347
                  %v349 = vld [vmem:[%s337 + $0x14] sm:%s327]
                  %350 = vst [vmem:[%s338 + $0x14] sm:%s327] %v349
                  %v351 = vld [vmem:[%s337 + $0x18] sm:%s327]
                  %352 = vst [vmem:[%s338 + $0x18] sm:%s327] %v351
                  %v353 = vld [vmem:[%s337 + $0x6c] sm:%s327]
                  %354 = vst [vmem:[%s338 + $0x1c] sm:%s327] %v353
                  %v355 = vld [vmem:[%s337 + $0x70] sm:%s327]
                  %356 = vst [vmem:[%s338 + $0x20] sm:%s327] %v355
                  %v357 = vld [vmem:[%s337 + $0x74] sm:%s327]
                  %358 = vst [vmem:[%s338 + $0x24] sm:%s327] %v357
                  %v359 = vld [vmem:[%s337 + $0x78] sm:%s327]
                  %360 = vst [vmem:[%s338 + $0x28] sm:%s327] %v359
                  %v361 = vld [vmem:[%s337 + $0x7c] sm:%s327]
                  %362 = vst [vmem:[%s338 + $0x2c] sm:%s327] %v361
                  %v363 = vld [vmem:[%s337 + $0x80] sm:%s327]
                  %364 = vst [vmem:[%s338 + $0x30] sm:%s327] %v363
                  %v365 = vld [vmem:[%s337 + $0x84] sm:%s327]
                  %366 = vst [vmem:[%s338 + $0x34] sm:%s327] %v365
                  %v367 = vld [vmem:[%s337 + $0xd8] sm:%s327]
                  %368 = vst [vmem:[%s338 + $0x38] sm:%s327] %v367
                  %v369 = vld [vmem:[%s337 + $0xdc] sm:%s327]
                  %370 = vst [vmem:[%s338 + $0x3c] sm:%s327] %v369
                  %v371 = vld [vmem:[%s337 + $0xe0] sm:%s327]
                  %372 = vst [vmem:[%s338 + $0x40] sm:%s327] %v371
                  %v373 = vld [vmem:[%s337 + $0xe4] sm:%s327]
                  %374 = vst [vmem:[%s338 + $0x44] sm:%s327] %v373
                  %v375 = vld [vmem:[%s337 + $0xe8] sm:%s327]
                  %376 = vst [vmem:[%s338 + $0x48] sm:%s327] %v375
                  %v377 = vld [vmem:[%s337 + $0xec] sm:%s327]
                  %378 = vst [vmem:[%s338 + $0x4c] sm:%s327] %v377
                  %v379 = vld [vmem:[%s337 + $0xf0] sm:%s327]
                  %380 = vst [vmem:[%s338 + $0x50] sm:%s327] %v379
                  %v381 = vld [vmem:[%s337 + $0x144] sm:%s327]
                  %382 = vst [vmem:[%s338 + $0x54] sm:%s327] %v381
                  %v383 = vld [vmem:[%s337 + $0x148] sm:%s327]
                  %384 = vst [vmem:[%s338 + $0x58] sm:%s327] %v383
                  %v385 = vld [vmem:[%s337 + $0x14c] sm:%s327]
                  %386 = vst [vmem:[%s338 + $0x5c] sm:%s327] %v385
                  %v387 = vld [vmem:[%s337 + $0x150] sm:%s327]
                  %388 = vst [vmem:[%s338 + $0x60] sm:%s327] %v387
                  %v389 = vld [vmem:[%s337 + $0x154] sm:%s327]
                  %390 = vst [vmem:[%s338 + $0x64] sm:%s327] %v389
                  %v391 = vld [vmem:[%s337 + $0x158] sm:%s327]
                  %392 = vst [vmem:[%s338 + $0x68] sm:%s327] %v391
                  %v393 = vld [vmem:[%s337 + $0x15c] sm:%s327]
                  %394 = vst [vmem:[%s338 + $0x6c] sm:%s327] %v393
                  %s395 = sadd.s32 1, %s336
                  %p396 = scmp.ge.s32.totalorder %s395, %s328
                  %s397 = scalar_select %p396, 0, %s395
                  %s398 = smul.u32 %s397, 28
                  %s399 = smul.u32 %s397, 28
                  %s400 = scalar_lea.vmem %s168, %s398
                  %s401 = scalar_lea.vmem %s160, %s399 [#allocation3]
                $region81: #{triplet_net_forward.3} parent=61 // loop_footer
                  %s333 = sadd.s32 %s331, 1
                $region82: #{triplet_net_forward.3} parent=61 // loop_footer_branch
                  %330 = sbr.rel target = $region78
                $region83: #{triplet_net_forward.3} parent=61 // loop_exit
                  _
                %s402 = sdiv.u32.pop %s164, 7
                %s403 = srem.u32.pop %s164, 7
                %s404 = smul.u32 %s402, 7
                %s405 = smul.u32 4, %s404
                %s406 = scalar_lea.vmem %s168, %s405
                %s407 = smul.u32 4, %s404
                %s408 = scalar_lea.vmem %s160, %s407 [#allocation3]
                // While loop
                $region84: #{triplet_net_forward.3} parent=61 // loop_pre_header
                  _
                $region85: #{triplet_net_forward.3} parent=61 // loop_header
                  %s410 = sphi 0, %s412
                  %p411 = scmp.ge.s32.totalorder %s410, %s403
                  %s415 = sphi 0, %s428
                  %s416 = sphi %s406, %s431
                  %s417 = sphi %s408, %s432
                $region86: #{triplet_net_forward.3} parent=61 // loop_header_branch
                  %414 = sbr.rel (%p411) target = $region90
                $region87: #{triplet_net_forward.3} parent=61 // loop_body
                  %v418 = vld [vmem:[%s416] sm:%s327]
                  %419 = vst [vmem:[%s417] sm:%s327] %v418
                  %v420 = vld [vmem:[%s416 + $0x6c] sm:%s327]
                  %421 = vst [vmem:[%s417 + $0x1c] sm:%s327] %v420
                  %v422 = vld [vmem:[%s416 + $0xd8] sm:%s327]
                  %423 = vst [vmem:[%s417 + $0x38] sm:%s327] %v422
                  %v424 = vld [vmem:[%s416 + $0x144] sm:%s327]
                  %425 = vst [vmem:[%s417 + $0x54] sm:%s327] %v424
                  %s426 = sadd.s32 1, %s415
                  %p427 = scmp.ge.s32.totalorder %s426, %s403
                  %s428 = scalar_select %p427, 0, %s426
                  %s429 = smul.u32 %s428, 4
                  %s430 = smul.u32 %s428, 4
                  %s431 = scalar_lea.vmem %s406, %s429
                  %s432 = scalar_lea.vmem %s408, %s430 [#allocation3]
                $region88: #{triplet_net_forward.3} parent=61 // loop_footer
                  %s412 = sadd.s32 %s410, 1
                $region89: #{triplet_net_forward.3} parent=61 // loop_footer_branch
                  %409 = sbr.rel target = $region85
                $region90: #{triplet_net_forward.3} parent=61 // loop_exit
                  _
              $region62: #{triplet_net_forward.3} parent=39 // pred_fallthru
                _
            $region40: #{triplet_net_forward.3} parent=35 // pred_fallthru
              _
            // Predicated region
            $region41: #{triplet_net_forward.3} parent=35 // pred_check
              _
            $region42: #{triplet_net_forward.3} parent=35 // pred_check_branch
              %175 = sbr.rel (0) target = $region44
            $region43: #{triplet_net_forward.3} parent=35 // pred_region
              %s177 = ssub.s32 16, 1
              %s178 = sdiv.u32.pop %s164, 7
              %s179 = srem.u32.pop %s164, 7
              // While loop
              $region45: #{triplet_net_forward.3} parent=43 // loop_pre_header
                _
              $region46: #{triplet_net_forward.3} parent=43 // loop_header
                %s181 = sphi 0, %s183
                %p182 = scmp.ge.s32.totalorder %s181, %s178
                %s186 = sphi 0, %s247
                %s187 = sphi %s168, %s250
                %s188 = sphi %s160, %s251
              $region47: #{triplet_net_forward.3} parent=43 // loop_header_branch
                %185 = sbr.rel (%p182) target = $region51
              $region48: #{triplet_net_forward.3} parent=43 // loop_body
                %v189 = vld [vmem:[%s187] sm:%s177]
                %190 = vst [vmem:[%s188] sm:%s177] %v189
                %v191 = vld [vmem:[%s187 + $0x4] sm:%s177]
                %192 = vst [vmem:[%s188 + $0x4] sm:%s177] %v191
                %v193 = vld [vmem:[%s187 + $0x8] sm:%s177]
                %194 = vst [vmem:[%s188 + $0x8] sm:%s177] %v193
                %v195 = vld [vmem:[%s187 + $0xc] sm:%s177]
                %196 = vst [vmem:[%s188 + $0xc] sm:%s177] %v195
                %v197 = vld [vmem:[%s187 + $0x10] sm:%s177]
                %198 = vst [vmem:[%s188 + $0x10] sm:%s177] %v197
                %v199 = vld [vmem:[%s187 + $0x14] sm:%s177]
                %200 = vst [vmem:[%s188 + $0x14] sm:%s177] %v199
                %v201 = vld [vmem:[%s187 + $0x18] sm:%s177]
                %202 = vst [vmem:[%s188 + $0x18] sm:%s177] %v201
                %v203 = vld [vmem:[%s187 + $0x6c] sm:%s177]
                %204 = vst [vmem:[%s188 + $0x1c] sm:%s177] %v203
                %v205 = vld [vmem:[%s187 + $0x70] sm:%s177]
                %206 = vst [vmem:[%s188 + $0x20] sm:%s177] %v205
                %v207 = vld [vmem:[%s187 + $0x74] sm:%s177]
                %208 = vst [vmem:[%s188 + $0x24] sm:%s177] %v207
                %v209 = vld [vmem:[%s187 + $0x78] sm:%s177]
                %210 = vst [vmem:[%s188 + $0x28] sm:%s177] %v209
                %v211 = vld [vmem:[%s187 + $0x7c] sm:%s177]
                %212 = vst [vmem:[%s188 + $0x2c] sm:%s177] %v211
                %v213 = vld [vmem:[%s187 + $0x80] sm:%s177]
                %214 = vst [vmem:[%s188 + $0x30] sm:%s177] %v213
                %v215 = vld [vmem:[%s187 + $0x84] sm:%s177]
                %216 = vst [vmem:[%s188 + $0x34] sm:%s177] %v215
                %v217 = vld [vmem:[%s187 + $0xd8] sm:%s177]
                %218 = vst [vmem:[%s188 + $0x38] sm:%s177] %v217
                %v219 = vld [vmem:[%s187 + $0xdc] sm:%s177]
                %220 = vst [vmem:[%s188 + $0x3c] sm:%s177] %v219
                %v221 = vld [vmem:[%s187 + $0xe0] sm:%s177]
                %222 = vst [vmem:[%s188 + $0x40] sm:%s177] %v221
                %v223 = vld [vmem:[%s187 + $0xe4] sm:%s177]
                %224 = vst [vmem:[%s188 + $0x44] sm:%s177] %v223
                %v225 = vld [vmem:[%s187 + $0xe8] sm:%s177]
                %226 = vst [vmem:[%s188 + $0x48] sm:%s177] %v225
                %v227 = vld [vmem:[%s187 + $0xec] sm:%s177]
                %228 = vst [vmem:[%s188 + $0x4c] sm:%s177] %v227
                %v229 = vld [vmem:[%s187 + $0xf0] sm:%s177]
                %230 = vst [vmem:[%s188 + $0x50] sm:%s177] %v229
                %v231 = vld [vmem:[%s187 + $0x144] sm:%s177]
                %232 = vst [vmem:[%s188 + $0x54] sm:%s177] %v231
                %v233 = vld [vmem:[%s187 + $0x148] sm:%s177]
                %234 = vst [vmem:[%s188 + $0x58] sm:%s177] %v233
                %v235 = vld [vmem:[%s187 + $0x14c] sm:%s177]
                %236 = vst [vmem:[%s188 + $0x5c] sm:%s177] %v235
                %v237 = vld [vmem:[%s187 + $0x150] sm:%s177]
                %238 = vst [vmem:[%s188 + $0x60] sm:%s177] %v237
                %v239 = vld [vmem:[%s187 + $0x154] sm:%s177]
                %240 = vst [vmem:[%s188 + $0x64] sm:%s177] %v239
                %v241 = vld [vmem:[%s187 + $0x158] sm:%s177]
                %242 = vst [vmem:[%s188 + $0x68] sm:%s177] %v241
                %v243 = vld [vmem:[%s187 + $0x15c] sm:%s177]
                %244 = vst [vmem:[%s188 + $0x6c] sm:%s177] %v243
                %s245 = sadd.s32 1, %s186
                %p246 = scmp.ge.s32.totalorder %s245, %s178
                %s247 = scalar_select %p246, 0, %s245
                %s248 = smul.u32 %s247, 28
                %s249 = smul.u32 %s247, 28
                %s250 = scalar_lea.vmem %s168, %s248
                %s251 = scalar_lea.vmem %s160, %s249 [#allocation3]
              $region49: #{triplet_net_forward.3} parent=43 // loop_footer
                %s183 = sadd.s32 %s181, 1
              $region50: #{triplet_net_forward.3} parent=43 // loop_footer_branch
                %180 = sbr.rel target = $region46
              $region51: #{triplet_net_forward.3} parent=43 // loop_exit
                _
              %s252 = sdiv.u32.pop %s164, 7
              %s253 = srem.u32.pop %s164, 7
              %s254 = smul.u32 %s252, 7
              %s255 = smul.u32 4, %s254
              %s256 = scalar_lea.vmem %s168, %s255
              %s257 = smul.u32 4, %s254
              %s258 = scalar_lea.vmem %s160, %s257 [#allocation3]
              // While loop
              $region52: #{triplet_net_forward.3} parent=43 // loop_pre_header
                _
              $region53: #{triplet_net_forward.3} parent=43 // loop_header
                %s260 = sphi 0, %s262
                %p261 = scmp.ge.s32.totalorder %s260, %s253
                %s265 = sphi 0, %s278
                %s266 = sphi %s256, %s281
                %s267 = sphi %s258, %s282
              $region54: #{triplet_net_forward.3} parent=43 // loop_header_branch
                %264 = sbr.rel (%p261) target = $region58
              $region55: #{triplet_net_forward.3} parent=43 // loop_body
                %v268 = vld [vmem:[%s266] sm:%s177]
                %269 = vst [vmem:[%s267] sm:%s177] %v268
                %v270 = vld [vmem:[%s266 + $0x6c] sm:%s177]
                %271 = vst [vmem:[%s267 + $0x1c] sm:%s177] %v270
                %v272 = vld [vmem:[%s266 + $0xd8] sm:%s177]
                %273 = vst [vmem:[%s267 + $0x38] sm:%s177] %v272
                %v274 = vld [vmem:[%s266 + $0x144] sm:%s177]
                %275 = vst [vmem:[%s267 + $0x54] sm:%s177] %v274
                %s276 = sadd.s32 1, %s265
                %p277 = scmp.ge.s32.totalorder %s276, %s253
                %s278 = scalar_select %p277, 0, %s276
                %s279 = smul.u32 %s278, 4
                %s280 = smul.u32 %s278, 4
                %s281 = scalar_lea.vmem %s256, %s279
                %s282 = scalar_lea.vmem %s258, %s280 [#allocation3]
              $region56: #{triplet_net_forward.3} parent=43 // loop_footer
                %s262 = sadd.s32 %s260, 1
              $region57: #{triplet_net_forward.3} parent=43 // loop_footer_branch
                %259 = sbr.rel target = $region53
              $region58: #{triplet_net_forward.3} parent=43 // loop_exit
                _
            $region44: #{triplet_net_forward.3} parent=35 // pred_fallthru
              _
          $region36: #{triplet_net_forward.3} parent=31 // pred_fallthru
            _
          %433 = vnop
        $region32: #{triplet_net_forward.3} parent=27 // pred_fallthru
          _
      $region28: #{triplet_net_forward.3} parent=5 // pred_fallthru
        _
      %p434 = scmp.le.s32.totalorder 1, %s11
      %p435 = scmp.lt.s32.totalorder %s11, 5
      %p436 = pnand %p434, %p435
      %p437 = pneg %p436
      // Predicated region
      $region91: #{triplet_net_forward.3} parent=5 // pred_check
        _
      $region92: #{triplet_net_forward.3} parent=5 // pred_check_branch
        %439 = sbr.rel (%p436) target = $region94
      $region93: #{triplet_net_forward.3} parent=5 // pred_region
        %s440 = ssub.s32 %s11, 1
        %s441 = sand.u32 %s24, 1
        %s442 = sand.u32 %s24, 1
        %s443 = smul.addr %s442, 112
        %s444 = scalar_lea.vmem [#allocation3], %s443
        // Predicated region
        $region95: #{triplet_net_forward.3} parent=93 // pred_check
          %p445 = pneg %p37
        $region96: #{triplet_net_forward.3} parent=93 // pred_check_branch
          %447 = sbr.rel (%p445) target = $region98
        $region97: #{triplet_net_forward.3} parent=93 // pred_region
          _
        $region98: #{triplet_net_forward.3} parent=93 // pred_fallthru
          _
        %s448 = sand.u32 %s24, 1
        %s449 = sand.u32 %s24, 1
        %s450 = smul.addr %s449, 112
        %s451 = scalar_lea.vmem [#allocation3], %s450
        %p452 = pneg %p37
        %p453 = pneg %p34
        %p454 = pneg %p58
        %p455 = pneg %p55
        %p456 = pneg %p79
        %p457 = pneg %p76
        %p458 = pneg %p100
        %p459 = pneg %p97
        %p460 = pneg %p126
        %p461 = pneg %p123
        %s462 = sand.u32 %s113, 1
        %s463 = sand.u32 %s113, 1
        %s464 = smul.addr %s463, 28
        %s465 = scalar_lea.vmem [#allocation4], %s464
        %s466 = smul.u32 7, %s16
        %s467 = ssub.s32 27, %s466
        %p468 = scmp.lt.s32.totalorder %s467, 7
        %s469 = scalar_select %p468, %s467, 7
        %s470 = smul.u32 16, %s469
        %s471 = smul.u32 7, %s16
        %s472 = ssub.s32 27, %s471
        %p473 = scmp.lt.s32.totalorder %s472, 7
        %s474 = scalar_select %p473, %s472, 7
        %s475 = smul.u32 4, %s474
        %v476 = vld [vmem:[%s444] sm:$0xf]
        %v477 = vld [vmem:[%s444 + $0x4] sm:$0xf]
        %v478 = vld [vmem:[%s444 + $0x8] sm:$0xf]
        %v479 = vld [vmem:[%s444 + $0xc] sm:$0xf]
        %v480 = vld [vmem:[%s444 + $0x10] sm:$0xf]
        %v481 = vld [vmem:[%s444 + $0x14] sm:$0xf]
        %v482 = vld [vmem:[%s444 + $0x18] sm:$0xf]
        %v483 = vld [vmem:[%s444 + $0x1c] sm:$0xf]
        %v484 = vld [vmem:[%s444 + $0x20] sm:$0xf]
        %v485 = vld [vmem:[%s444 + $0x24] sm:$0xf]
        %v486 = vld [vmem:[%s444 + $0x28] sm:$0xf]
        %v487 = vld [vmem:[%s444 + $0x2c] sm:$0xf]
        %v488 = vld [vmem:[%s444 + $0x30] sm:$0xf]
        %v489 = vld [vmem:[%s444 + $0x34] sm:$0xf]
        %v490 = vld [vmem:[%s444 + $0x38] sm:$0xf]
        %v491 = vld [vmem:[%s444 + $0x3c] sm:$0xf]
        %v492 = vld [vmem:[%s444 + $0x40] sm:$0xf]
        %v493 = vld [vmem:[%s444 + $0x44] sm:$0xf]
        %v494 = vld [vmem:[%s444 + $0x48] sm:$0xf]
        %v495 = vld [vmem:[%s444 + $0x4c] sm:$0xf]
        %v496 = vld [vmem:[%s444 + $0x50] sm:$0xf]
        %v497 = vld [vmem:[%s444 + $0x54] sm:$0xf]
        %v498 = vld [vmem:[%s444 + $0x58] sm:$0xf]
        %v499 = vld [vmem:[%s444 + $0x5c] sm:$0xf]
        %v500 = vld [vmem:[%s444 + $0x60] sm:$0xf]
        %v501 = vld [vmem:[%s444 + $0x64] sm:$0xf]
        %v502 = vld [vmem:[%s444 + $0x68] sm:$0xf]
        %v503 = vld [vmem:[%s444 + $0x6c] sm:$0xf]
        %v504 = vld [vmem:[%s1] sm:$0xf]
        %v505 = vld [vmem:[%s1 + $0x4] sm:$0xf]
        %v506 = vld [vmem:[%s1 + $0x8] sm:$0xf]
        %v507 = vld [vmem:[%s1 + $0xc] sm:$0xf]
        %v508 = vld [vmem:[%s1 + $0x10] sm:$0xf]
        %v509 = vld [vmem:[%s1 + $0x14] sm:$0xf]
        %v510 = vld [vmem:[%s1 + $0x18] sm:$0xf]
        %v511 = vld [vmem:[%s1 + $0x1c] sm:$0xf]
        %v512 = vld [vmem:[%s1 + $0x20] sm:$0xf]
        %v513 = vld [vmem:[%s1 + $0x24] sm:$0xf]
        %v514 = vld [vmem:[%s1 + $0x28] sm:$0xf]
        %v515 = vld [vmem:[%s1 + $0x2c] sm:$0xf]
        %v516 = vld [vmem:[%s1 + $0x30] sm:$0xf]
        %v517 = vld [vmem:[%s1 + $0x34] sm:$0xf]
        %v518 = vld [vmem:[%s1 + $0x38] sm:$0xf]
        %v519 = vld [vmem:[%s1 + $0x3c] sm:$0xf]
        %v548 = vunpack.c.l.b16 %v476
        %v549 = vunpack.c.l.b16 %v477
        %v550 = vunpack.c.l.b16 %v478
        %v551 = vunpack.c.l.b16 %v479
        %v552 = vunpack.c.l.b16 %v480
        %v553 = vunpack.c.l.b16 %v481
        %v554 = vunpack.c.l.b16 %v482
        %v555 = vunpack.c.l.b16 %v483
        %v556 = vunpack.c.l.b16 %v484
        %v557 = vunpack.c.l.b16 %v485
        %v558 = vunpack.c.l.b16 %v486
        %v559 = vunpack.c.l.b16 %v487
        %v560 = vunpack.c.l.b16 %v488
        %v561 = vunpack.c.l.b16 %v489
        %v562 = vunpack.c.l.b16 %v490
        %v563 = vunpack.c.l.b16 %v491
        %v564 = vunpack.c.l.b16 %v492
        %v565 = vunpack.c.l.b16 %v493
        %v566 = vunpack.c.l.b16 %v494
        %v567 = vunpack.c.l.b16 %v495
        %v568 = vunpack.c.l.b16 %v496
        %v569 = vunpack.c.l.b16 %v497
        %v570 = vunpack.c.l.b16 %v498
        %v571 = vunpack.c.l.b16 %v499
        %v572 = vunpack.c.l.b16 %v500
        %v573 = vunpack.c.l.b16 %v501
        %v574 = vunpack.c.l.b16 %v502
        %v575 = vunpack.c.l.b16 %v503
        %v576 = vpack.c.b16 %v549, %v548
        %v577 = vpack.c.b16 %v551, %v550
        %v578 = vpack.c.b16 %v553, %v552
        %v579 = vpack.c.b16 %v555, %v554
        %v580 = vpack.c.b16 %v557, %v556
        %v581 = vpack.c.b16 %v559, %v558
        %v582 = vpack.c.b16 %v561, %v560
        %v583 = vpack.c.b16 %v563, %v562
        %v584 = vpack.c.b16 %v565, %v564
        %v585 = vpack.c.b16 %v567, %v566
        %v586 = vpack.c.b16 %v569, %v568
        %v587 = vpack.c.b16 %v571, %v570
        %v588 = vpack.c.b16 %v573, %v572
        %v589 = vpack.c.b16 %v575, %v574
        %v620 = vunpack.c.l.b16 %v504
        %v621 = vunpack.c.l.b16 %v505
        %v622 = vunpack.c.l.b16 %v506
        %v623 = vunpack.c.l.b16 %v507
        %v624 = vunpack.c.l.b16 %v508
        %v625 = vunpack.c.l.b16 %v509
        %v626 = vunpack.c.l.b16 %v510
        %v627 = vunpack.c.l.b16 %v511
        %v628 = vunpack.c.l.b16 %v512
        %v629 = vunpack.c.l.b16 %v513
        %v630 = vunpack.c.l.b16 %v514
        %v631 = vunpack.c.l.b16 %v515
        %v632 = vunpack.c.l.b16 %v516
        %v633 = vunpack.c.l.b16 %v517
        %v634 = vunpack.c.l.b16 %v518
        %v635 = vunpack.c.l.b16 %v519
        %v636 = vpack.c.b16 %v621, %v620
        %v637 = vpack.c.b16 %v623, %v622
        %v638 = vpack.c.b16 %v625, %v624
        %v639 = vpack.c.b16 %v627, %v626
        %v640 = vpack.c.b16 %v629, %v628
        %v641 = vpack.c.b16 %v631, %v630
        %v642 = vpack.c.b16 %v633, %v632
        %v643 = vpack.c.b16 %v635, %v634
        %652 = vmatpush.bf16.msra.mxu0 %v643
        %653 = vmatpush.bf16.msra.mxu0 %v642
        %654 = vmatpush.bf16.msra.mxu0 %v641
        %655 = vmatpush.bf16.msra.mxu0 %v640
        %656 = vmatpush.bf16.msra.mxu0 %v639
        %657 = vmatpush.bf16.msra.mxu0 %v638
        %658 = vmatpush.bf16.msra.mxu0 %v637
        %659 = vmatpush.bf16.msra.mxu0 %v636
        %660 = vmatmul.bf16.gmra.mxu0 %v576
        %v661 = vpop.f32.mrf.mxu0
        %v662 = vadd.f32 0.0, %v661
        %v663 = vpop.f32.mrf.mxu0
        %v664 = vadd.f32 0.0, %v663
        %665 = vmatmul.bf16.gmra.mxu0 %v577
        %v666 = vpop.f32.mrf.mxu0
        %v667 = vadd.f32 0.0, %v666
        %v668 = vpop.f32.mrf.mxu0
        %v669 = vadd.f32 0.0, %v668
        %670 = vmatmul.bf16.gmra.mxu0 %v578
        %v671 = vpop.f32.mrf.mxu0
        %v672 = vadd.f32 0.0, %v671
        %v673 = vpop.f32.mrf.mxu0
        %v674 = vadd.f32 0.0, %v673
        %675 = vmatmul.bf16.gmra.mxu0 %v579
        %v676 = vpop.f32.mrf.mxu0
        %v677 = vadd.f32 0.0, %v676
        %v678 = vpop.f32.mrf.mxu0
        %v679 = vadd.f32 0.0, %v678
        %680 = vmatmul.bf16.gmra.mxu0 %v580
        %v681 = vpop.f32.mrf.mxu0
        %v682 = vadd.f32 0.0, %v681
        %v683 = vpop.f32.mrf.mxu0
        %v684 = vadd.f32 0.0, %v683
        %685 = vmatmul.bf16.gmra.mxu0 %v581
        %v686 = vpop.f32.mrf.mxu0
        %v687 = vadd.f32 0.0, %v686
        %v688 = vpop.f32.mrf.mxu0
        %v689 = vadd.f32 0.0, %v688
        %690 = vmatmul.bf16.gmra.mxu0 %v582
        %v691 = vpop.f32.mrf.mxu0
        %v692 = vadd.f32 0.0, %v691
        %v693 = vpop.f32.mrf.mxu0
        %v694 = vadd.f32 0.0, %v693
        %695 = vmatmul.bf16.gmra.mxu0 %v583
        %v696 = vpop.f32.mrf.mxu0
        %v697 = vadd.f32 0.0, %v696
        %v698 = vpop.f32.mrf.mxu0
        %v699 = vadd.f32 0.0, %v698
        %700 = vmatmul.bf16.gmra.mxu0 %v584
        %v701 = vpop.f32.mrf.mxu0
        %v702 = vadd.f32 0.0, %v701
        %v703 = vpop.f32.mrf.mxu0
        %v704 = vadd.f32 0.0, %v703
        %705 = vmatmul.bf16.gmra.mxu0 %v585
        %v706 = vpop.f32.mrf.mxu0
        %v707 = vadd.f32 0.0, %v706
        %v708 = vpop.f32.mrf.mxu0
        %v709 = vadd.f32 0.0, %v708
        %710 = vmatmul.bf16.gmra.mxu0 %v586
        %v711 = vpop.f32.mrf.mxu0
        %v712 = vadd.f32 0.0, %v711
        %v713 = vpop.f32.mrf.mxu0
        %v714 = vadd.f32 0.0, %v713
        %715 = vmatmul.bf16.gmra.mxu0 %v587
        %v716 = vpop.f32.mrf.mxu0
        %v717 = vadd.f32 0.0, %v716
        %v718 = vpop.f32.mrf.mxu0
        %v719 = vadd.f32 0.0, %v718
        %720 = vmatmul.bf16.gmra.mxu0 %v588
        %v721 = vpop.f32.mrf.mxu0
        %v722 = vadd.f32 0.0, %v721
        %v723 = vpop.f32.mrf.mxu0
        %v724 = vadd.f32 0.0, %v723
        %725 = vmatmul.bf16.gmra.mxu0 %v589
        %v726 = vpop.f32.mrf.mxu0
        %v727 = vadd.f32 0.0, %v726
        %v728 = vpop.f32.mrf.mxu0
        %v729 = vadd.f32 0.0, %v728
        %730 = vdwg.mxu0
        %v731 = vmax.f32 %v662, %v679
        %v732 = vmax.f32 %v731, %v697
        %v733 = vmax.f32 %v732, %v714
        %v734 = vmax.f32 %v664, %v682
        %v735 = vmax.f32 %v734, %v699
        %v736 = vmax.f32 %v735, %v717
        %v737 = vmax.f32 %v667, %v684
        %v738 = vmax.f32 %v737, %v702
        %v739 = vmax.f32 %v738, %v719
        %v740 = vmax.f32 %v669, %v687
        %v741 = vmax.f32 %v740, %v704
        %v742 = vmax.f32 %v741, %v722
        %v743 = vmax.f32 %v672, %v689
        %v744 = vmax.f32 %v743, %v707
        %v745 = vmax.f32 %v744, %v724
        %v746 = vmax.f32 %v674, %v692
        %v747 = vmax.f32 %v746, %v709
        %v748 = vmax.f32 %v747, %v727
        %v749 = vmax.f32 %v677, %v694
        %v750 = vmax.f32 %v749, %v712
        %v751 = vmax.f32 %v750, %v729
        %v752 = vld [vmem:[%s2] sm:$0x1]
        %v754 = vperm.slane %v752, 0
        %v756 = vadd.f32 %v733, %v754
        %v757 = vadd.f32 %v736, %v754
        %v758 = vadd.f32 %v739, %v754
        %v759 = vadd.f32 %v742, %v754
        %v760 = vadd.f32 %v745, %v754
        %v761 = vadd.f32 %v748, %v754
        %v762 = vadd.f32 %v751, %v754
        %s763 = sld [smem:[#allocation2]]
        %vm764 = vcmp.gt.f32.partialorder %v756, 0.0
        %vm765 = vcmp.gt.f32.partialorder %v757, 0.0
        %vm766 = vcmp.gt.f32.partialorder %v758, 0.0
        %vm767 = vcmp.gt.f32.partialorder %v759, 0.0
        %vm768 = vcmp.gt.f32.partialorder %v760, 0.0
        %vm769 = vcmp.gt.f32.partialorder %v761, 0.0
        %vm770 = vcmp.gt.f32.partialorder %v762, 0.0
        %v771 = vstv %s763
        %v772 = vmul.f32 %v771, %v756
        %v773 = vmul.f32 %v771, %v757
        %v774 = vmul.f32 %v771, %v758
        %v775 = vmul.f32 %v771, %v759
        %v776 = vmul.f32 %v771, %v760
        %v777 = vmul.f32 %v771, %v761
        %v778 = vmul.f32 %v771, %v762
        %v779 = vsel %vm764, %v756, %v772
        %v780 = vsel %vm765, %v757, %v773
        %v781 = vsel %vm766, %v758, %v774
        %v782 = vsel %vm767, %v759, %v775
        %v783 = vsel %vm768, %v760, %v776
        %v784 = vsel %vm769, %v761, %v777
        %v785 = vsel %vm770, %v762, %v778
        %v786 = vpack.c.bf16 %v779, %v779
        %v787 = vpack.c.bf16 %v780, %v780
        %v788 = vpack.c.bf16 %v781, %v781
        %v789 = vpack.c.bf16 %v782, %v782
        %v790 = vpack.c.bf16 %v783, %v783
        %v791 = vpack.c.bf16 %v784, %v784
        %v792 = vpack.c.bf16 %v785, %v785
        %793 = vst [vmem:[%s465] sm:$0xf] %v786
        %794 = vst [vmem:[%s465 + $0x4] sm:$0xf] %v787
        %795 = vst [vmem:[%s465 + $0x8] sm:$0xf] %v788
        %796 = vst [vmem:[%s465 + $0xc] sm:$0xf] %v789
        %797 = vst [vmem:[%s465 + $0x10] sm:$0xf] %v790
        %798 = vst [vmem:[%s465 + $0x14] sm:$0xf] %v791
        %799 = vst [vmem:[%s465 + $0x18] sm:$0xf] %v792
        %s800 = sand.u32 %s113, 1
        %s801 = sand.u32 %s113, 1
        %s802 = smul.addr %s801, 28
        %s803 = scalar_lea.vmem [#allocation4], %s802
        // Predicated region
        $region99: #{triplet_net_forward.3} parent=93 // pred_check
          %p804 = pneg %p123
        $region100: #{triplet_net_forward.3} parent=93 // pred_check_branch
          %806 = sbr.rel (%p804) target = $region102
        $region101: #{triplet_net_forward.3} parent=93 // pred_region
          %s807 = smul.u32 7, %s16
          %s808 = ssub.s32 27, %s807
          %p809 = scmp.lt.s32.totalorder %s808, 7
          %s810 = scalar_select %p809, %s808, 7
          %s811 = smul.u32 4, %s810
          %p812 = scmp.ne.s32.totalorder 0, %s811
          %s813 = smul.addr %s807, 4
          %s814 = scalar_lea.vmem %s4, %s813
          // Predicated region
          $region103: #{triplet_net_forward.3} parent=101 // pred_check
            %p815 = pneg %p812
          $region104: #{triplet_net_forward.3} parent=101 // pred_check_branch
            %817 = sbr.rel (%p815) target = $region106
          $region105: #{triplet_net_forward.3} parent=101 // pred_region
            // Predicated region
            $region107: #{triplet_net_forward.3} parent=105 // pred_check
              _
            $region108: #{triplet_net_forward.3} parent=105 // pred_check_branch
              %819 = sbr.rel target = $region110
            $region109: #{triplet_net_forward.3} parent=105 // pred_region
              // Predicated region
              $region129: #{triplet_net_forward.3} parent=109 // pred_check
                _
              $region130: #{triplet_net_forward.3} parent=109 // pred_check_branch
                %882 = sbr.rel (0) target = $region132
              $region131: #{triplet_net_forward.3} parent=109 // pred_region
                %s884 = ssub.s32 16, 1
                %s885 = sdiv.u32.pop %s810, 7
                %s886 = srem.u32.pop %s810, 7
                // While loop
                $region133: #{triplet_net_forward.3} parent=131 // loop_pre_header
                  _
                $region134: #{triplet_net_forward.3} parent=131 // loop_header
                  %s888 = sphi 0, %s890
                  %p889 = scmp.ge.s32.totalorder %s888, %s885
                  %s893 = sphi 0, %s912
                  %s894 = sphi %s803, %s915
                  %s895 = sphi %s814, %s916
                $region135: #{triplet_net_forward.3} parent=131 // loop_header_branch
                  %892 = sbr.rel (%p889) target = $region139
                $region136: #{triplet_net_forward.3} parent=131 // loop_body
                  %v896 = vld [vmem:[%s894] sm:%s884]
                  %897 = vst [vmem:[%s895] sm:%s884] %v896
                  %v898 = vld [vmem:[%s894 + $0x4] sm:%s884]
                  %899 = vst [vmem:[%s895 + $0x4] sm:%s884] %v898
                  %v900 = vld [vmem:[%s894 + $0x8] sm:%s884]
                  %901 = vst [vmem:[%s895 + $0x8] sm:%s884] %v900
                  %v902 = vld [vmem:[%s894 + $0xc] sm:%s884]
                  %903 = vst [vmem:[%s895 + $0xc] sm:%s884] %v902
                  %v904 = vld [vmem:[%s894 + $0x10] sm:%s884]
                  %905 = vst [vmem:[%s895 + $0x10] sm:%s884] %v904
                  %v906 = vld [vmem:[%s894 + $0x14] sm:%s884]
                  %907 = vst [vmem:[%s895 + $0x14] sm:%s884] %v906
                  %v908 = vld [vmem:[%s894 + $0x18] sm:%s884]
                  %909 = vst [vmem:[%s895 + $0x18] sm:%s884] %v908
                  %s910 = sadd.s32 1, %s893
                  %p911 = scmp.ge.s32.totalorder %s910, %s885
                  %s912 = scalar_select %p911, 0, %s910
                  %s913 = smul.u32 %s912, 28
                  %s914 = smul.u32 %s912, 28
                  %s915 = scalar_lea.vmem %s803, %s913 [#allocation4]
                  %s916 = scalar_lea.vmem %s814, %s914
                $region137: #{triplet_net_forward.3} parent=131 // loop_footer
                  %s890 = sadd.s32 %s888, 1
                $region138: #{triplet_net_forward.3} parent=131 // loop_footer_branch
                  %887 = sbr.rel target = $region134
                $region139: #{triplet_net_forward.3} parent=131 // loop_exit
                  _
                %s917 = sdiv.u32.pop %s810, 7
                %s918 = srem.u32.pop %s810, 7
                %s919 = smul.u32 %s917, 7
                %s920 = smul.u32 4, %s919
                %s921 = scalar_lea.vmem %s803, %s920 [#allocation4]
                %s922 = smul.u32 4, %s919
                %s923 = scalar_lea.vmem %s814, %s922
                // While loop
                $region140: #{triplet_net_forward.3} parent=131 // loop_pre_header
                  _
                $region141: #{triplet_net_forward.3} parent=131 // loop_header
                  %s925 = sphi 0, %s927
                  %p926 = scmp.ge.s32.totalorder %s925, %s918
                  %s930 = sphi 0, %s937
                  %s931 = sphi %s921, %s940
                  %s932 = sphi %s923, %s941
                $region142: #{triplet_net_forward.3} parent=131 // loop_header_branch
                  %929 = sbr.rel (%p926) target = $region146
                $region143: #{triplet_net_forward.3} parent=131 // loop_body
                  %v933 = vld [vmem:[%s931] sm:%s884]
                  %934 = vst [vmem:[%s932] sm:%s884] %v933
                  %s935 = sadd.s32 1, %s930
                  %p936 = scmp.ge.s32.totalorder %s935, %s918
                  %s937 = scalar_select %p936, 0, %s935
                  %s938 = smul.u32 %s937, 4
                  %s939 = smul.u32 %s937, 4
                  %s940 = scalar_lea.vmem %s921, %s938 [#allocation4]
                  %s941 = scalar_lea.vmem %s923, %s939
                $region144: #{triplet_net_forward.3} parent=131 // loop_footer
                  %s927 = sadd.s32 %s925, 1
                $region145: #{triplet_net_forward.3} parent=131 // loop_footer_branch
                  %924 = sbr.rel target = $region141
                $region146: #{triplet_net_forward.3} parent=131 // loop_exit
                  _
              $region132: #{triplet_net_forward.3} parent=109 // pred_fallthru
                _
            $region110: #{triplet_net_forward.3} parent=105 // pred_fallthru
              _
            // Predicated region
            $region111: #{triplet_net_forward.3} parent=105 // pred_check
              _
            $region112: #{triplet_net_forward.3} parent=105 // pred_check_branch
              %821 = sbr.rel (0) target = $region114
            $region113: #{triplet_net_forward.3} parent=105 // pred_region
              %s823 = ssub.s32 16, 1
              %s824 = sdiv.u32.pop %s810, 7
              %s825 = srem.u32.pop %s810, 7
              // While loop
              $region115: #{triplet_net_forward.3} parent=113 // loop_pre_header
                _
              $region116: #{triplet_net_forward.3} parent=113 // loop_header
                %s827 = sphi 0, %s829
                %p828 = scmp.ge.s32.totalorder %s827, %s824
                %s832 = sphi 0, %s851
                %s833 = sphi %s803, %s854
                %s834 = sphi %s814, %s855
              $region117: #{triplet_net_forward.3} parent=113 // loop_header_branch
                %831 = sbr.rel (%p828) target = $region121
              $region118: #{triplet_net_forward.3} parent=113 // loop_body
                %v835 = vld [vmem:[%s833] sm:%s823]
                %836 = vst [vmem:[%s834] sm:%s823] %v835
                %v837 = vld [vmem:[%s833 + $0x4] sm:%s823]
                %838 = vst [vmem:[%s834 + $0x4] sm:%s823] %v837
                %v839 = vld [vmem:[%s833 + $0x8] sm:%s823]
                %840 = vst [vmem:[%s834 + $0x8] sm:%s823] %v839
                %v841 = vld [vmem:[%s833 + $0xc] sm:%s823]
                %842 = vst [vmem:[%s834 + $0xc] sm:%s823] %v841
                %v843 = vld [vmem:[%s833 + $0x10] sm:%s823]
                %844 = vst [vmem:[%s834 + $0x10] sm:%s823] %v843
                %v845 = vld [vmem:[%s833 + $0x14] sm:%s823]
                %846 = vst [vmem:[%s834 + $0x14] sm:%s823] %v845
                %v847 = vld [vmem:[%s833 + $0x18] sm:%s823]
                %848 = vst [vmem:[%s834 + $0x18] sm:%s823] %v847
                %s849 = sadd.s32 1, %s832
                %p850 = scmp.ge.s32.totalorder %s849, %s824
                %s851 = scalar_select %p850, 0, %s849
                %s852 = smul.u32 %s851, 28
                %s853 = smul.u32 %s851, 28
                %s854 = scalar_lea.vmem %s803, %s852 [#allocation4]
                %s855 = scalar_lea.vmem %s814, %s853
              $region119: #{triplet_net_forward.3} parent=113 // loop_footer
                %s829 = sadd.s32 %s827, 1
              $region120: #{triplet_net_forward.3} parent=113 // loop_footer_branch
                %826 = sbr.rel target = $region116
              $region121: #{triplet_net_forward.3} parent=113 // loop_exit
                _
              %s856 = sdiv.u32.pop %s810, 7
              %s857 = srem.u32.pop %s810, 7
              %s858 = smul.u32 %s856, 7
              %s859 = smul.u32 4, %s858
              %s860 = scalar_lea.vmem %s803, %s859 [#allocation4]
              %s861 = smul.u32 4, %s858
              %s862 = scalar_lea.vmem %s814, %s861
              // While loop
              $region122: #{triplet_net_forward.3} parent=113 // loop_pre_header
                _
              $region123: #{triplet_net_forward.3} parent=113 // loop_header
                %s864 = sphi 0, %s866
                %p865 = scmp.ge.s32.totalorder %s864, %s857
                %s869 = sphi 0, %s876
                %s870 = sphi %s860, %s879
                %s871 = sphi %s862, %s880
              $region124: #{triplet_net_forward.3} parent=113 // loop_header_branch
                %868 = sbr.rel (%p865) target = $region128
              $region125: #{triplet_net_forward.3} parent=113 // loop_body
                %v872 = vld [vmem:[%s870] sm:%s823]
                %873 = vst [vmem:[%s871] sm:%s823] %v872
                %s874 = sadd.s32 1, %s869
                %p875 = scmp.ge.s32.totalorder %s874, %s857
                %s876 = scalar_select %p875, 0, %s874
                %s877 = smul.u32 %s876, 4
                %s878 = smul.u32 %s876, 4
                %s879 = scalar_lea.vmem %s860, %s877 [#allocation4]
                %s880 = scalar_lea.vmem %s862, %s878
              $region126: #{triplet_net_forward.3} parent=113 // loop_footer
                %s866 = sadd.s32 %s864, 1
              $region127: #{triplet_net_forward.3} parent=113 // loop_footer_branch
                %863 = sbr.rel target = $region123
              $region128: #{triplet_net_forward.3} parent=113 // loop_exit
                _
            $region114: #{triplet_net_forward.3} parent=105 // pred_fallthru
              _
          $region106: #{triplet_net_forward.3} parent=101 // pred_fallthru
            _
          %942 = vnop
        $region102: #{triplet_net_forward.3} parent=93 // pred_fallthru
          _
      $region94: #{triplet_net_forward.3} parent=5 // pred_fallthru
        _
      %p943 = scmp.le.s32.totalorder 2, %s11
      // Predicated region
      $region147: #{triplet_net_forward.3} parent=5 // pred_check
        %p944 = pneg %p943
      $region148: #{triplet_net_forward.3} parent=5 // pred_check_branch
        %946 = sbr.rel (%p944) target = $region150
      $region149: #{triplet_net_forward.3} parent=5 // pred_region
        %s947 = ssub.s32 %s11, 2
        // Predicated region
        $region151: #{triplet_net_forward.3} parent=149 // pred_check
          %p948 = pneg %p129
        $region152: #{triplet_net_forward.3} parent=149 // pred_check_branch
          %950 = sbr.rel (%p948) target = $region154
        $region153: #{triplet_net_forward.3} parent=149 // pred_region
          %s951 = sand.u32 %s114, 1
          %s952 = sand.u32 %s114, 1
          %s953 = smul.addr %s952, 28
          %s954 = scalar_lea.vmem [#allocation4], %s953
        $region154: #{triplet_net_forward.3} parent=149 // pred_fallthru
          _
      $region150: #{triplet_net_forward.3} parent=5 // pred_fallthru
        _
    $region6: #{triplet_net_forward.3} parent=1 // loop_footer
      %s15 = sadd.s32 1, %s11
    $region7: #{triplet_net_forward.3} parent=1 // loop_footer_branch
      %10 = sbr.rel target = $region3
    $region8: #{triplet_net_forward.3} parent=1 // loop_exit
      _

// kernel: triplet_net_forward.4
$region0: #{triplet_net_forward.4}
  #allocation0 [shape = 'u32[]', space=smem, size = 0x4, offset = 0x4, fixed_abs, tag = 'smem constant byte address 0x4 - core index']
  #allocation1 [shape = 'u32[72,128]{1,0:T(1,128)}', space=vmem, size = 0x9000, scoped, tag = 'internal scratch']
  #allocation2 [shape = 'f32[1,1]{1,0:T(1,128)S(6)}', space=smem, size = 0x200, scoped, tag = 'scoped memory for triplet_net_forward.4']
  %s0 = inlined_call_operand.vmem [shape: bf16[4,48,1792], index: 0, kind: input, shape index: {}]
  %s1 = inlined_call_operand.vmem [shape: bf16[1792,128], index: 1, kind: input, shape index: {}]
  %s2 = inlined_call_operand.vmem [shape: f32[1,128], index: 2, kind: input, shape index: {}]
  %s3 = inlined_call_operand.<no memory space> [shape: f32[1,1], index: 3, kind: input, shape index: {}]
  %s4 = inlined_call_operand.vmem [shape: bf16[48,128], index: 4, kind: output, shape index: {}]
  %s5 = sld [smem:[#allocation0]]
  $region72: #{triplet_net_forward.4} parent=0
    _
  %s7 = ssub.s32 1, %s5
  %s8 = scalar_select 0, %s7, %s5
  %9 = sst [smem:[#allocation2]] %s3
  $region1: #{triplet_net_forward.4} parent=0
    #allocation3 [shape = 'u8[458752]{0}', space=vmem, size = 0x70000, scoped, tag = 'input window, operand 0']
    loop: start=0, step=1, limit=5
    $region2: #{triplet_net_forward.4} parent=1 // loop_pre_header
      _
    $region3: #{triplet_net_forward.4} parent=1 // loop_header
      %s11 = sphi 0, %s15
      %p12 = scmp.ge.s32.totalorder %s11, 5
      %s21 = sphi 0, %s23
      %s24 = sphi 0, %s21
      %s25 = sphi 0, %s24
      %s41 = sphi 0, %s25
      %s45 = sphi 0, %s45
      %s47 = sphi 0, %s45
      %s48 = sphi 0, %s47
      %s62 = sphi 0, %s48
      %s66 = sphi 0, %s66
      %s68 = sphi 0, %s66
      %s69 = sphi 0, %s68
      %s83 = sphi 0, %s69
      %s87 = sphi 0, %s87
      %s89 = sphi 0, %s87
      %s90 = sphi 0, %s89
      %s104 = sphi 0, %s90
      %s110 = sphi 0, %s112
      %s113 = sphi 0, %s110
      %s114 = sphi 0, %s113
      %s130 = sphi 0, %s114
    $region4: #{triplet_net_forward.4} parent=1 // loop_header_branch
      %14 = sbr.rel (%p12) target = $region8
    $region5: #{triplet_net_forward.4} parent=1 // loop_body
      %s16 = ssub.s32 %s11, 1
      %s17 = ssub.s32 %s11, 2
      %s18 = sadd.s32 %s11, 1
      %s19 = ssub.s32 %s11, %s18
      %p20 = scmp.eq.s32.totalorder %s19, 0
      %s22 = sadd.s32 %s21, 1
      %s23 = scalar_select %p20, %s21, %s22
      %p26 = pneg %p20
      %p27 = scmp.eq.s32.totalorder %s11, 2
      %p28 = por %p26, %p27
      %p29 = scmp.ne.s32.totalorder %s21, %s24
      %p30 = scmp.eq.s32.totalorder %s11, 0
      %p31 = por %p29, %p30
      %p32 = scmp.ne.s32.totalorder %s21, %s24
      %p33 = scmp.eq.s32.totalorder %s16, 2
      %p34 = por %p32, %p33
      %p35 = scmp.ne.s32.totalorder %s24, %s25
      %p36 = scmp.eq.s32.totalorder %s16, 0
      %p37 = por %p35, %p36
      %p38 = scmp.ne.s32.totalorder %s24, %s25
      %p39 = scmp.eq.s32.totalorder %s17, 2
      %p40 = por %p38, %p39
      %p42 = scmp.ne.s32.totalorder %s25, %s41
      %p43 = scmp.eq.s32.totalorder %s17, 0
      %p44 = por %p42, %p43
      %s46 = sadd.s32 %s45, 1
      %p49 = scmp.eq.s32.totalorder %s11, 2
      %p50 = scmp.ne.s32.totalorder %s45, %s47
      %p51 = scmp.eq.s32.totalorder %s11, 0
      %p52 = por %p50, %p51
      %p53 = scmp.ne.s32.totalorder %s45, %s47
      %p54 = scmp.eq.s32.totalorder %s16, 2
      %p55 = por %p53, %p54
      %p56 = scmp.ne.s32.totalorder %s47, %s48
      %p57 = scmp.eq.s32.totalorder %s16, 0
      %p58 = por %p56, %p57
      %p59 = scmp.ne.s32.totalorder %s47, %s48
      %p60 = scmp.eq.s32.totalorder %s17, 2
      %p61 = por %p59, %p60
      %p63 = scmp.ne.s32.totalorder %s48, %s62
      %p64 = scmp.eq.s32.totalorder %s17, 0
      %p65 = por %p63, %p64
      %s67 = sadd.s32 %s66, 1
      %p70 = scmp.eq.s32.totalorder %s11, 2
      %p71 = scmp.ne.s32.totalorder %s66, %s68
      %p72 = scmp.eq.s32.totalorder %s11, 0
      %p73 = por %p71, %p72
      %p74 = scmp.ne.s32.totalorder %s66, %s68
      %p75 = scmp.eq.s32.totalorder %s16, 2
      %p76 = por %p74, %p75
      %p77 = scmp.ne.s32.totalorder %s68, %s69
      %p78 = scmp.eq.s32.totalorder %s16, 0
      %p79 = por %p77, %p78
      %p80 = scmp.ne.s32.totalorder %s68, %s69
      %p81 = scmp.eq.s32.totalorder %s17, 2
      %p82 = por %p80, %p81
      %p84 = scmp.ne.s32.totalorder %s69, %s83
      %p85 = scmp.eq.s32.totalorder %s17, 0
      %p86 = por %p84, %p85
      %s88 = sadd.s32 %s87, 1
      %p91 = scmp.eq.s32.totalorder %s11, 2
      %p92 = scmp.ne.s32.totalorder %s87, %s89
      %p93 = scmp.eq.s32.totalorder %s11, 0
      %p94 = por %p92, %p93
      %p95 = scmp.ne.s32.totalorder %s87, %s89
      %p96 = scmp.eq.s32.totalorder %s16, 2
      %p97 = por %p95, %p96
      %p98 = scmp.ne.s32.totalorder %s89, %s90
      %p99 = scmp.eq.s32.totalorder %s16, 0
      %p100 = por %p98, %p99
      %p101 = scmp.ne.s32.totalorder %s89, %s90
      %p102 = scmp.eq.s32.totalorder %s17, 2
      %p103 = por %p101, %p102
      %p105 = scmp.ne.s32.totalorder %s90, %s104
      %p106 = scmp.eq.s32.totalorder %s17, 0
      %p107 = por %p105, %p106
      %s108 = ssub.s32 %s11, %s18
      %p109 = scmp.eq.s32.totalorder %s108, 0
      %s111 = sadd.s32 %s110, 1
      %s112 = scalar_select %p109, %s110, %s111
      %p115 = pneg %p109
      %p116 = scmp.eq.s32.totalorder %s11, 2
      %p117 = por %p115, %p116
      %p118 = scmp.ne.s32.totalorder %s110, %s113
      %p119 = scmp.eq.s32.totalorder %s11, 0
      %p120 = por %p118, %p119
      %p121 = scmp.ne.s32.totalorder %s110, %s113
      %p122 = scmp.eq.s32.totalorder %s16, 2
      %p123 = por %p121, %p122
      %p124 = scmp.ne.s32.totalorder %s113, %s114
      %p125 = scmp.eq.s32.totalorder %s16, 0
      %p126 = por %p124, %p125
      %p127 = scmp.ne.s32.totalorder %s113, %s114
      %p128 = scmp.eq.s32.totalorder %s17, 2
      %p129 = por %p127, %p128
      %p131 = scmp.ne.s32.totalorder %s114, %s130
      %p132 = scmp.eq.s32.totalorder %s17, 0
      %p133 = por %p131, %p132
      %p134 = scmp.le.s32.totalorder 1, %s11
      %p135 = scmp.lt.s32.totalorder %s11, 4
      %p136 = pnand %p134, %p135
      %p137 = pneg %p136
      // Predicated region
      $region9: #{triplet_net_forward.4} parent=5 // pred_check
        _
      $region10: #{triplet_net_forward.4} parent=5 // pred_check_branch
        %139 = sbr.rel (%p136) target = $region12
      $region11: #{triplet_net_forward.4} parent=5 // pred_region
        %s140 = ssub.s32 %s11, 1
        // Predicated region
        $region13: #{triplet_net_forward.4} parent=11 // pred_check
          %p141 = pneg %p58
        $region14: #{triplet_net_forward.4} parent=11 // pred_check_branch
          %143 = sbr.rel (%p141) target = $region16
        $region15: #{triplet_net_forward.4} parent=11 // pred_region
          _
        $region16: #{triplet_net_forward.4} parent=11 // pred_fallthru
          _
        // Predicated region
        $region17: #{triplet_net_forward.4} parent=11 // pred_check
          %p144 = pneg %p79
        $region18: #{triplet_net_forward.4} parent=11 // pred_check_branch
          %146 = sbr.rel (%p144) target = $region20
        $region19: #{triplet_net_forward.4} parent=11 // pred_region
          _
        $region20: #{triplet_net_forward.4} parent=11 // pred_fallthru
          _
        // Predicated region
        $region21: #{triplet_net_forward.4} parent=11 // pred_check
          %p147 = pneg %p100
        $region22: #{triplet_net_forward.4} parent=11 // pred_check_branch
          %149 = sbr.rel (%p147) target = $region24
        $region23: #{triplet_net_forward.4} parent=11 // pred_region
          _
        $region24: #{triplet_net_forward.4} parent=11 // pred_fallthru
          _
      $region12: #{triplet_net_forward.4} parent=5 // pred_fallthru
        _
      %p150 = scmp.lt.s32.totalorder %s11, 3
      // Predicated region
      $region25: #{triplet_net_forward.4} parent=5 // pred_check
        %p151 = pneg %p150
      $region26: #{triplet_net_forward.4} parent=5 // pred_check_branch
        %153 = sbr.rel (%p151) target = $region28
      $region27: #{triplet_net_forward.4} parent=5 // pred_region
        // Predicated region
        $region29: #{triplet_net_forward.4} parent=27 // pred_check
          %p154 = pneg %p31
        $region30: #{triplet_net_forward.4} parent=27 // pred_check_branch
          %156 = sbr.rel (%p154) target = $region32
        $region31: #{triplet_net_forward.4} parent=27 // pred_region
          %s157 = sand.u32 %s21, 1
          %s158 = sand.u32 %s21, 1
          %s159 = smul.addr %s158, 448
          %s160 = scalar_lea.vmem [#allocation3], %s159
          %s161 = smul.u32 2, %s11
          %s162 = smul.addr %s161, 14
          %s163 = smul.addr %s162, 4
          %s164 = scalar_lea.vmem %s0, %s163
          // Predicated region
          $region33: #{triplet_net_forward.4} parent=31 // pred_check
            _
          $region34: #{triplet_net_forward.4} parent=31 // pred_check_branch
            %166 = sbr.rel (0) target = $region36
          $region35: #{triplet_net_forward.4} parent=31 // pred_region
            // Predicated region
            $region37: #{triplet_net_forward.4} parent=35 // pred_check
              _
            $region38: #{triplet_net_forward.4} parent=35 // pred_check_branch
              %168 = sbr.rel (0) target = $region40
            $region39: #{triplet_net_forward.4} parent=35 // pred_region
              loop: start=0, step=1, limit=1
              $region41: #{triplet_net_forward.4} parent=39 // loop_pre_header
                _
              $region42: #{triplet_net_forward.4} parent=39 // loop_header
                %s170 = sphi 0, %s174
                %p171 = scmp.ge.s32.totalorder %s170, 1
                %s175 = sphi %s164, %s164
                %s176 = sphi %s160, %s160
              $region43: #{triplet_net_forward.4} parent=39 // loop_header_branch
                %173 = sbr.rel (%p171) target = $region47
              $region44: #{triplet_net_forward.4} parent=39 // loop_body
                %v177 = vld [vmem:[%s175] sm:$0xff]
                %178 = vst [vmem:[%s176] sm:$0xff] %v177
                %v179 = vld [vmem:[%s175 + $0x8] sm:$0xff]
                %180 = vst [vmem:[%s176 + $0x8] sm:$0xff] %v179
                %v181 = vld [vmem:[%s175 + $0x10] sm:$0xff]
                %182 = vst [vmem:[%s176 + $0x10] sm:$0xff] %v181
                %v183 = vld [vmem:[%s175 + $0x18] sm:$0xff]
                %184 = vst [vmem:[%s176 + $0x18] sm:$0xff] %v183
                %v185 = vld [vmem:[%s175 + $0x20] sm:$0xff]
                %186 = vst [vmem:[%s176 + $0x20] sm:$0xff] %v185
                %v187 = vld [vmem:[%s175 + $0x28] sm:$0xff]
                %188 = vst [vmem:[%s176 + $0x28] sm:$0xff] %v187
                %v189 = vld [vmem:[%s175 + $0x30] sm:$0xff]
                %190 = vst [vmem:[%s176 + $0x30] sm:$0xff] %v189
                %v191 = vld [vmem:[%s175 + $0x38] sm:$0xff]
                %192 = vst [vmem:[%s176 + $0x38] sm:$0xff] %v191
                %v193 = vld [vmem:[%s175 + $0x40] sm:$0xff]
                %194 = vst [vmem:[%s176 + $0x40] sm:$0xff] %v193
                %v195 = vld [vmem:[%s175 + $0x48] sm:$0xff]
                %196 = vst [vmem:[%s176 + $0x48] sm:$0xff] %v195
                %v197 = vld [vmem:[%s175 + $0x50] sm:$0xff]
                %198 = vst [vmem:[%s176 + $0x50] sm:$0xff] %v197
                %v199 = vld [vmem:[%s175 + $0x58] sm:$0xff]
                %200 = vst [vmem:[%s176 + $0x58] sm:$0xff] %v199
                %v201 = vld [vmem:[%s175 + $0x60] sm:$0xff]
                %202 = vst [vmem:[%s176 + $0x60] sm:$0xff] %v201
                %v203 = vld [vmem:[%s175 + $0x68] sm:$0xff]
                %204 = vst [vmem:[%s176 + $0x68] sm:$0xff] %v203
                %v205 = vld [vmem:[%s175 + $0x150] sm:$0xff]
                %206 = vst [vmem:[%s176 + $0x70] sm:$0xff] %v205
                %v207 = vld [vmem:[%s175 + $0x158] sm:$0xff]
                %208 = vst [vmem:[%s176 + $0x78] sm:$0xff] %v207
                %v209 = vld [vmem:[%s175 + $0x160] sm:$0xff]
                %210 = vst [vmem:[%s176 + $0x80] sm:$0xff] %v209
                %v211 = vld [vmem:[%s175 + $0x168] sm:$0xff]
                %212 = vst [vmem:[%s176 + $0x88] sm:$0xff] %v211
                %v213 = vld [vmem:[%s175 + $0x170] sm:$0xff]
                %214 = vst [vmem:[%s176 + $0x90] sm:$0xff] %v213
                %v215 = vld [vmem:[%s175 + $0x178] sm:$0xff]
                %216 = vst [vmem:[%s176 + $0x98] sm:$0xff] %v215
                %v217 = vld [vmem:[%s175 + $0x180] sm:$0xff]
                %218 = vst [vmem:[%s176 + $0xa0] sm:$0xff] %v217
                %v219 = vld [vmem:[%s175 + $0x188] sm:$0xff]
                %220 = vst [vmem:[%s176 + $0xa8] sm:$0xff] %v219
                %v221 = vld [vmem:[%s175 + $0x190] sm:$0xff]
                %222 = vst [vmem:[%s176 + $0xb0] sm:$0xff] %v221
                %v223 = vld [vmem:[%s175 + $0x198] sm:$0xff]
                %224 = vst [vmem:[%s176 + $0xb8] sm:$0xff] %v223
                %v225 = vld [vmem:[%s175 + $0x1a0] sm:$0xff]
                %226 = vst [vmem:[%s176 + $0xc0] sm:$0xff] %v225
                %v227 = vld [vmem:[%s175 + $0x1a8] sm:$0xff]
                %228 = vst [vmem:[%s176 + $0xc8] sm:$0xff] %v227
                %v229 = vld [vmem:[%s175 + $0x1b0] sm:$0xff]
                %230 = vst [vmem:[%s176 + $0xd0] sm:$0xff] %v229
                %v231 = vld [vmem:[%s175 + $0x1b8] sm:$0xff]
                %232 = vst [vmem:[%s176 + $0xd8] sm:$0xff] %v231
                %v233 = vld [vmem:[%s175 + $0x2a0] sm:$0xff]
                %234 = vst [vmem:[%s176 + $0xe0] sm:$0xff] %v233
                %v235 = vld [vmem:[%s175 + $0x2a8] sm:$0xff]
                %236 = vst [vmem:[%s176 + $0xe8] sm:$0xff] %v235
                %v237 = vld [vmem:[%s175 + $0x2b0] sm:$0xff]
                %238 = vst [vmem:[%s176 + $0xf0] sm:$0xff] %v237
                %v239 = vld [vmem:[%s175 + $0x2b8] sm:$0xff]
                %240 = vst [vmem:[%s176 + $0xf8] sm:$0xff] %v239
                %v241 = vld [vmem:[%s175 + $0x2c0] sm:$0xff]
                %242 = vst [vmem:[%s176 + $0x100] sm:$0xff] %v241
                %v243 = vld [vmem:[%s175 + $0x2c8] sm:$0xff]
                %244 = vst [vmem:[%s176 + $0x108] sm:$0xff] %v243
                %v245 = vld [vmem:[%s175 + $0x2d0] sm:$0xff]
                %246 = vst [vmem:[%s176 + $0x110] sm:$0xff] %v245
                %v247 = vld [vmem:[%s175 + $0x2d8] sm:$0xff]
                %248 = vst [vmem:[%s176 + $0x118] sm:$0xff] %v247
                %v249 = vld [vmem:[%s175 + $0x2e0] sm:$0xff]
                %250 = vst [vmem:[%s176 + $0x120] sm:$0xff] %v249
                %v251 = vld [vmem:[%s175 + $0x2e8] sm:$0xff]
                %252 = vst [vmem:[%s176 + $0x128] sm:$0xff] %v251
                %v253 = vld [vmem:[%s175 + $0x2f0] sm:$0xff]
                %254 = vst [vmem:[%s176 + $0x130] sm:$0xff] %v253
                %v255 = vld [vmem:[%s175 + $0x2f8] sm:$0xff]
                %256 = vst [vmem:[%s176 + $0x138] sm:$0xff] %v255
                %v257 = vld [vmem:[%s175 + $0x300] sm:$0xff]
                %258 = vst [vmem:[%s176 + $0x140] sm:$0xff] %v257
                %v259 = vld [vmem:[%s175 + $0x308] sm:$0xff]
                %260 = vst [vmem:[%s176 + $0x148] sm:$0xff] %v259
                %v261 = vld [vmem:[%s175 + $0x3f0] sm:$0xff]
                %262 = vst [vmem:[%s176 + $0x150] sm:$0xff] %v261
                %v263 = vld [vmem:[%s175 + $0x3f8] sm:$0xff]
                %264 = vst [vmem:[%s176 + $0x158] sm:$0xff] %v263
                %v265 = vld [vmem:[%s175 + $0x400] sm:$0xff]
                %266 = vst [vmem:[%s176 + $0x160] sm:$0xff] %v265
                %v267 = vld [vmem:[%s175 + $0x408] sm:$0xff]
                %268 = vst [vmem:[%s176 + $0x168] sm:$0xff] %v267
                %v269 = vld [vmem:[%s175 + $0x410] sm:$0xff]
                %270 = vst [vmem:[%s176 + $0x170] sm:$0xff] %v269
                %v271 = vld [vmem:[%s175 + $0x418] sm:$0xff]
                %272 = vst [vmem:[%s176 + $0x178] sm:$0xff] %v271
                %v273 = vld [vmem:[%s175 + $0x420] sm:$0xff]
                %274 = vst [vmem:[%s176 + $0x180] sm:$0xff] %v273
                %v275 = vld [vmem:[%s175 + $0x428] sm:$0xff]
                %276 = vst [vmem:[%s176 + $0x188] sm:$0xff] %v275
                %v277 = vld [vmem:[%s175 + $0x430] sm:$0xff]
                %278 = vst [vmem:[%s176 + $0x190] sm:$0xff] %v277
                %v279 = vld [vmem:[%s175 + $0x438] sm:$0xff]
                %280 = vst [vmem:[%s176 + $0x198] sm:$0xff] %v279
                %v281 = vld [vmem:[%s175 + $0x440] sm:$0xff]
                %282 = vst [vmem:[%s176 + $0x1a0] sm:$0xff] %v281
                %v283 = vld [vmem:[%s175 + $0x448] sm:$0xff]
                %284 = vst [vmem:[%s176 + $0x1a8] sm:$0xff] %v283
                %v285 = vld [vmem:[%s175 + $0x450] sm:$0xff]
                %286 = vst [vmem:[%s176 + $0x1b0] sm:$0xff] %v285
                %v287 = vld [vmem:[%s175 + $0x458] sm:$0xff]
                %288 = vst [vmem:[%s176 + $0x1b8] sm:$0xff] %v287
              $region45: #{triplet_net_forward.4} parent=39 // loop_footer
                %s174 = sadd.s32 1, %s170
              $region46: #{triplet_net_forward.4} parent=39 // loop_footer_branch
                %169 = sbr.rel target = $region42
              $region47: #{triplet_net_forward.4} parent=39 // loop_exit
                _
            $region40: #{triplet_net_forward.4} parent=35 // pred_fallthru
              _
            // Predicated region
            $region48: #{triplet_net_forward.4} parent=35 // pred_check
              _
            $region49: #{triplet_net_forward.4} parent=35 // pred_check_branch
              %290 = sbr.rel target = $region51
            $region50: #{triplet_net_forward.4} parent=35 // pred_region
              _
            $region51: #{triplet_net_forward.4} parent=35 // pred_fallthru
              _
          $region36: #{triplet_net_forward.4} parent=31 // pred_fallthru
            _
          %291 = vnop
        $region32: #{triplet_net_forward.4} parent=27 // pred_fallthru
          _
      $region28: #{triplet_net_forward.4} parent=5 // pred_fallthru
        _
      %p292 = scmp.le.s32.totalorder 1, %s11
      %p293 = scmp.lt.s32.totalorder %s11, 4
      %p294 = pnand %p292, %p293
      %p295 = pneg %p294
      // Predicated region
      $region52: #{triplet_net_forward.4} parent=5 // pred_check
        _
      $region53: #{triplet_net_forward.4} parent=5 // pred_check_branch
        %297 = sbr.rel (%p294) target = $region55
      $region54: #{triplet_net_forward.4} parent=5 // pred_region
        %s298 = ssub.s32 %s11, 1
        %s299 = sand.u32 %s24, 1
        %s300 = sand.u32 %s24, 1
        %s301 = smul.addr %s300, 448
        %s302 = scalar_lea.vmem [#allocation3], %s301
        // Predicated region
        $region56: #{triplet_net_forward.4} parent=54 // pred_check
          %p303 = pneg %p37
        $region57: #{triplet_net_forward.4} parent=54 // pred_check_branch
          %305 = sbr.rel (%p303) target = $region59
        $region58: #{triplet_net_forward.4} parent=54 // pred_region
          _
        $region59: #{triplet_net_forward.4} parent=54 // pred_fallthru
          _
        %s306 = sand.u32 %s24, 1
        %s307 = sand.u32 %s24, 1
        %s308 = smul.addr %s307, 448
        %s309 = scalar_lea.vmem [#allocation3], %s308
        %p310 = pneg %p37
        %p311 = pneg %p34
        %p312 = pneg %p58
        %p313 = pneg %p55
        %p314 = pneg %p79
        %p315 = pneg %p76
        %p316 = pneg %p100
        %p317 = pneg %p97
        %p318 = pneg %p126
        %p319 = pneg %p123
        %s320 = smul.u32 2, %s16
        %p321 = scmp.lt.s32.totalorder %s320, 5
        %s322 = scalar_select %p321, %s320, 5
        %s323 = smul.addr %s322, 4
        %s324 = scalar_lea.vmem %s4, %s323
        %s325 = smul.u32 2, %s16
        %s326 = smul.u32 2, %s16
        %p327 = scmp.lt.s32.totalorder %s326, 5
        %s328 = scalar_select %p327, %s326, 5
        %s329 = smul.addr %s328, 4
        %s330 = scalar_lea.vmem %s4, %s329
        %s331 = smul.u32 2, %s16
        %v332 = vld [vmem:[%s302] sm:$0xff]
        %v333 = vld [vmem:[%s302 + $0x8] sm:$0xff]
        %v334 = vld [vmem:[%s302 + $0x10] sm:$0xff]
        %v335 = vld [vmem:[%s302 + $0x18] sm:$0xff]
        %v336 = vld [vmem:[%s302 + $0x20] sm:$0xff]
        %v337 = vld [vmem:[%s302 + $0x28] sm:$0xff]
        %v338 = vld [vmem:[%s302 + $0x30] sm:$0xff]
        %v339 = vld [vmem:[%s302 + $0x38] sm:$0xff]
        %v340 = vld [vmem:[%s302 + $0x40] sm:$0xff]
        %v341 = vld [vmem:[%s302 + $0x48] sm:$0xff]
        %v342 = vld [vmem:[%s302 + $0x50] sm:$0xff]
        %v343 = vld [vmem:[%s302 + $0x58] sm:$0xff]
        %v344 = vld [vmem:[%s302 + $0x60] sm:$0xff]
        %v345 = vld [vmem:[%s302 + $0x68] sm:$0xff]
        %v346 = vld [vmem:[%s302 + $0x70] sm:$0xff]
        %v347 = vld [vmem:[%s302 + $0x78] sm:$0xff]
        %v348 = vld [vmem:[%s302 + $0x80] sm:$0xff]
        %v349 = vld [vmem:[%s302 + $0x88] sm:$0xff]
        %v350 = vld [vmem:[%s302 + $0x90] sm:$0xff]
        %v351 = vld [vmem:[%s302 + $0x98] sm:$0xff]
        %v352 = vld [vmem:[%s302 + $0xa0] sm:$0xff]
        %v353 = vld [vmem:[%s302 + $0xa8] sm:$0xff]
        %v354 = vld [vmem:[%s302 + $0xb0] sm:$0xff]
        %v355 = vld [vmem:[%s302 + $0xb8] sm:$0xff]
        %v356 = vld [vmem:[%s302 + $0xc0] sm:$0xff]
        %v357 = vld [vmem:[%s302 + $0xc8] sm:$0xff]
        %v358 = vld [vmem:[%s302 + $0xd0] sm:$0xff]
        %v359 = vld [vmem:[%s302 + $0xd8] sm:$0xff]
        %v360 = vld [vmem:[%s302 + $0xe0] sm:$0xff]
        %v361 = vld [vmem:[%s302 + $0xe8] sm:$0xff]
        %v362 = vld [vmem:[%s302 + $0xf0] sm:$0xff]
        %v363 = vld [vmem:[%s302 + $0xf8] sm:$0xff]
        %v364 = vld [vmem:[%s302 + $0x100] sm:$0xff]
        %v365 = vld [vmem:[%s302 + $0x108] sm:$0xff]
        %v366 = vld [vmem:[%s302 + $0x110] sm:$0xff]
        %v367 = vld [vmem:[%s302 + $0x118] sm:$0xff]
        %v368 = vld [vmem:[%s302 + $0x120] sm:$0xff]
        %v369 = vld [vmem:[%s302 + $0x128] sm:$0xff]
        %v370 = vld [vmem:[%s302 + $0x130] sm:$0xff]
        %v371 = vld [vmem:[%s302 + $0x138] sm:$0xff]
        %v372 = vld [vmem:[%s302 + $0x140] sm:$0xff]
        %v373 = vld [vmem:[%s302 + $0x148] sm:$0xff]
        %v374 = vld [vmem:[%s302 + $0x150] sm:$0xff]
        %v375 = vld [vmem:[%s302 + $0x158] sm:$0xff]
        %v376 = vld [vmem:[%s302 + $0x160] sm:$0xff]
        %v377 = vld [vmem:[%s302 + $0x168] sm:$0xff]
        %v378 = vld [vmem:[%s302 + $0x170] sm:$0xff]
        %v379 = vld [vmem:[%s302 + $0x178] sm:$0xff]
        %v380 = vld [vmem:[%s302 + $0x180] sm:$0xff]
        %v381 = vld [vmem:[%s302 + $0x188] sm:$0xff]
        %v382 = vld [vmem:[%s302 + $0x190] sm:$0xff]
        %v383 = vld [vmem:[%s302 + $0x198] sm:$0xff]
        %v384 = vld [vmem:[%s302 + $0x1a0] sm:$0xff]
        %v385 = vld [vmem:[%s302 + $0x1a8] sm:$0xff]
        %v386 = vld [vmem:[%s302 + $0x1b0] sm:$0xff]
        %v387 = vld [vmem:[%s302 + $0x1b8] sm:$0xff]
        %v388 = vld [vmem:[%s1] sm:$0xf]
        %v389 = vld [vmem:[%s1 + $0x4] sm:$0xf]
        %v390 = vld [vmem:[%s1 + $0x8] sm:$0xf]
        %v391 = vld [vmem:[%s1 + $0xc] sm:$0xf]
        %v392 = vld [vmem:[%s1 + $0x10] sm:$0xf]
        %v393 = vld [vmem:[%s1 + $0x14] sm:$0xf]
        %v394 = vld [vmem:[%s1 + $0x18] sm:$0xf]
        %v395 = vld [vmem:[%s1 + $0x1c] sm:$0xf]
        %v396 = vld [vmem:[%s1 + $0x20] sm:$0xf]
        %v397 = vld [vmem:[%s1 + $0x24] sm:$0xf]
        %v398 = vld [vmem:[%s1 + $0x28] sm:$0xf]
        %v399 = vld [vmem:[%s1 + $0x2c] sm:$0xf]
        %v400 = vld [vmem:[%s1 + $0x30] sm:$0xf]
        %v401 = vld [vmem:[%s1 + $0x34] sm:$0xf]
        %v402 = vld [vmem:[%s1 + $0x38] sm:$0xf]
        %v403 = vld [vmem:[%s1 + $0x3c] sm:$0xf]
        %v404 = vld [vmem:[%s1 + $0x40] sm:$0xf]
        %v405 = vld [vmem:[%s1 + $0x44] sm:$0xf]
        %v406 = vld [vmem:[%s1 + $0x48] sm:$0xf]
        %v407 = vld [vmem:[%s1 + $0x4c] sm:$0xf]
        %v408 = vld [vmem:[%s1 + $0x50] sm:$0xf]
        %v409 = vld [vmem:[%s1 + $0x54] sm:$0xf]
        %v410 = vld [vmem:[%s1 + $0x58] sm:$0xf]
        %v411 = vld [vmem:[%s1 + $0x5c] sm:$0xf]
        %v412 = vld [vmem:[%s1 + $0x60] sm:$0xf]
        %v413 = vld [vmem:[%s1 + $0x64] sm:$0xf]
        %v414 = vld [vmem:[%s1 + $0x68] sm:$0xf]
        %v415 = vld [vmem:[%s1 + $0x6c] sm:$0xf]
        %v416 = vld [vmem:[%s1 + $0x70] sm:$0xf]
        %v417 = vld [vmem:[%s1 + $0x74] sm:$0xf]
        %v418 = vld [vmem:[%s1 + $0x78] sm:$0xf]
        %v419 = vld [vmem:[%s1 + $0x7c] sm:$0xf]
        %v420 = vld [vmem:[%s1 + $0x80] sm:$0xf]
        %v421 = vld [vmem:[%s1 + $0x84] sm:$0xf]
        %v422 = vld [vmem:[%s1 + $0x88] sm:$0xf]
        %v423 = vld [vmem:[%s1 + $0x8c] sm:$0xf]
        %v424 = vld [vmem:[%s1 + $0x90] sm:$0xf]
        %v425 = vld [vmem:[%s1 + $0x94] sm:$0xf]
        %v426 = vld [vmem:[%s1 + $0x98] sm:$0xf]
        %v427 = vld [vmem:[%s1 + $0x9c] sm:$0xf]
        %v428 = vld [vmem:[%s1 + $0xa0] sm:$0xf]
        %v429 = vld [vmem:[%s1 + $0xa4] sm:$0xf]
        %v430 = vld [vmem:[%s1 + $0xa8] sm:$0xf]
        %v431 = vld [vmem:[%s1 + $0xac] sm:$0xf]
        %v432 = vld [vmem:[%s1 + $0xb0] sm:$0xf]
        %v433 = vld [vmem:[%s1 + $0xb4] sm:$0xf]
        %v434 = vld [vmem:[%s1 + $0xb8] sm:$0xf]
        %v435 = vld [vmem:[%s1 + $0xbc] sm:$0xf]
        %v436 = vld [vmem:[%s1 + $0xc0] sm:$0xf]
        %v437 = vld [vmem:[%s1 + $0xc4] sm:$0xf]
        %v438 = vld [vmem:[%s1 + $0xc8] sm:$0xf]
        %v439 = vld [vmem:[%s1 + $0xcc] sm:$0xf]
        %v440 = vld [vmem:[%s1 + $0xd0] sm:$0xf]
        %v441 = vld [vmem:[%s1 + $0xd4] sm:$0xf]
        %v442 = vld [vmem:[%s1 + $0xd8] sm:$0xf]
        %v443 = vld [vmem:[%s1 + $0xdc] sm:$0xf]
        %v444 = vld [vmem:[%s1 + $0xe0] sm:$0xf]
        %v445 = vld [vmem:[%s1 + $0xe4] sm:$0xf]
        %v446 = vld [vmem:[%s1 + $0xe8] sm:$0xf]
        %v447 = vld [vmem:[%s1 + $0xec] sm:$0xf]
        %v448 = vld [vmem:[%s1 + $0xf0] sm:$0xf]
        %v449 = vld [vmem:[%s1 + $0xf4] sm:$0xf]
        %v450 = vld [vmem:[%s1 + $0xf8] sm:$0xf]
        %v451 = vld [vmem:[%s1 + $0xfc] sm:$0xf]
        %v452 = vld [vmem:[%s1 + $0x100] sm:$0xf]
        %v453 = vld [vmem:[%s1 + $0x104] sm:$0xf]
        %v454 = vld [vmem:[%s1 + $0x108] sm:$0xf]
        %v455 = vld [vmem:[%s1 + $0x10c] sm:$0xf]
        %v456 = vld [vmem:[%s1 + $0x110] sm:$0xf]
        %v457 = vld [vmem:[%s1 + $0x114] sm:$0xf]
        %v458 = vld [vmem:[%s1 + $0x118] sm:$0xf]
        %v459 = vld [vmem:[%s1 + $0x11c] sm:$0xf]
        %v460 = vld [vmem:[%s1 + $0x120] sm:$0xf]
        %v461 = vld [vmem:[%s1 + $0x124] sm:$0xf]
        %v462 = vld [vmem:[%s1 + $0x128] sm:$0xf]
        %v463 = vld [vmem:[%s1 + $0x12c] sm:$0xf]
        %v464 = vld [vmem:[%s1 + $0x130] sm:$0xf]
        %v465 = vld [vmem:[%s1 + $0x134] sm:$0xf]
        %v466 = vld [vmem:[%s1 + $0x138] sm:$0xf]
        %v467 = vld [vmem:[%s1 + $0x13c] sm:$0xf]
        %v468 = vld [vmem:[%s1 + $0x140] sm:$0xf]
        %v469 = vld [vmem:[%s1 + $0x144] sm:$0xf]
        %v470 = vld [vmem:[%s1 + $0x148] sm:$0xf]
        %v471 = vld [vmem:[%s1 + $0x14c] sm:$0xf]
        %v472 = vld [vmem:[%s1 + $0x150] sm:$0xf]
        %v473 = vld [vmem:[%s1 + $0x154] sm:$0xf]
        %v474 = vld [vmem:[%s1 + $0x158] sm:$0xf]
        %v475 = vld [vmem:[%s1 + $0x15c] sm:$0xf]
        %v476 = vld [vmem:[%s1 + $0x160] sm:$0xf]
        %v477 = vld [vmem:[%s1 + $0x164] sm:$0xf]
        %v478 = vld [vmem:[%s1 + $0x168] sm:$0xf]
        %v479 = vld [vmem:[%s1 + $0x16c] sm:$0xf]
        %v480 = vld [vmem:[%s1 + $0x170] sm:$0xf]
        %v481 = vld [vmem:[%s1 + $0x174] sm:$0xf]
        %v482 = vld [vmem:[%s1 + $0x178] sm:$0xf]
        %v483 = vld [vmem:[%s1 + $0x17c] sm:$0xf]
        %v484 = vld [vmem:[%s1 + $0x180] sm:$0xf]
        %v485 = vld [vmem:[%s1 + $0x184] sm:$0xf]
        %v486 = vld [vmem:[%s1 + $0x188] sm:$0xf]
        %v487 = vld [vmem:[%s1 + $0x18c] sm:$0xf]
        %v488 = vld [vmem:[%s1 + $0x190] sm:$0xf]
        %v489 = vld [vmem:[%s1 + $0x194] sm:$0xf]
        %v490 = vld [vmem:[%s1 + $0x198] sm:$0xf]
        %v491 = vld [vmem:[%s1 + $0x19c] sm:$0xf]
        %v492 = vld [vmem:[%s1 + $0x1a0] sm:$0xf]
        %v493 = vld [vmem:[%s1 + $0x1a4] sm:$0xf]
        %v494 = vld [vmem:[%s1 + $0x1a8] sm:$0xf]
        %v495 = vld [vmem:[%s1 + $0x1ac] sm:$0xf]
        %v496 = vld [vmem:[%s1 + $0x1b0] sm:$0xf]
        %v497 = vld [vmem:[%s1 + $0x1b4] sm:$0xf]
        %v498 = vld [vmem:[%s1 + $0x1b8] sm:$0xf]
        %v499 = vld [vmem:[%s1 + $0x1bc] sm:$0xf]
        %v500 = vld [vmem:[%s1 + $0x1c0] sm:$0xf]
        %v501 = vld [vmem:[%s1 + $0x1c4] sm:$0xf]
        %v502 = vld [vmem:[%s1 + $0x1c8] sm:$0xf]
        %v503 = vld [vmem:[%s1 + $0x1cc] sm:$0xf]
        %v504 = vld [vmem:[%s1 + $0x1d0] sm:$0xf]
        %v505 = vld [vmem:[%s1 + $0x1d4] sm:$0xf]
        %v506 = vld [vmem:[%s1 + $0x1d8] sm:$0xf]
        %v507 = vld [vmem:[%s1 + $0x1dc] sm:$0xf]
        %v508 = vld [vmem:[%s1 + $0x1e0] sm:$0xf]
        %v509 = vld [vmem:[%s1 + $0x1e4] sm:$0xf]
        %v510 = vld [vmem:[%s1 + $0x1e8] sm:$0xf]
        %v511 = vld [vmem:[%s1 + $0x1ec] sm:$0xf]
        %v512 = vld [vmem:[%s1 + $0x1f0] sm:$0xf]
        %v513 = vld [vmem:[%s1 + $0x1f4] sm:$0xf]
        %v514 = vld [vmem:[%s1 + $0x1f8] sm:$0xf]
        %v515 = vld [vmem:[%s1 + $0x1fc] sm:$0xf]
        %v516 = vld [vmem:[%s1 + $0x200] sm:$0xf]
        %v517 = vld [vmem:[%s1 + $0x204] sm:$0xf]
        %v518 = vld [vmem:[%s1 + $0x208] sm:$0xf]
        %v519 = vld [vmem:[%s1 + $0x20c] sm:$0xf]
        %v520 = vld [vmem:[%s1 + $0x210] sm:$0xf]
        %v521 = vld [vmem:[%s1 + $0x214] sm:$0xf]
        %v522 = vld [vmem:[%s1 + $0x218] sm:$0xf]
        %v523 = vld [vmem:[%s1 + $0x21c] sm:$0xf]
        %v524 = vld [vmem:[%s1 + $0x220] sm:$0xf]
        %v525 = vld [vmem:[%s1 + $0x224] sm:$0xf]
        %v526 = vld [vmem:[%s1 + $0x228] sm:$0xf]
        %v527 = vld [vmem:[%s1 + $0x22c] sm:$0xf]
        %v528 = vld [vmem:[%s1 + $0x230] sm:$0xf]
        %v529 = vld [vmem:[%s1 + $0x234] sm:$0xf]
        %v530 = vld [vmem:[%s1 + $0x238] sm:$0xf]
        %v531 = vld [vmem:[%s1 + $0x23c] sm:$0xf]
        %v532 = vld [vmem:[%s1 + $0x240] sm:$0xf]
        %v533 = vld [vmem:[%s1 + $0x244] sm:$0xf]
        %v534 = vld [vmem:[%s1 + $0x248] sm:$0xf]
        %v535 = vld [vmem:[%s1 + $0x24c] sm:$0xf]
        %v536 = vld [vmem:[%s1 + $0x250] sm:$0xf]
        %v537 = vld [vmem:[%s1 + $0x254] sm:$0xf]
        %v538 = vld [vmem:[%s1 + $0x258] sm:$0xf]
        %v539 = vld [vmem:[%s1 + $0x25c] sm:$0xf]
        %v540 = vld [vmem:[%s1 + $0x260] sm:$0xf]
        %v541 = vld [vmem:[%s1 + $0x264] sm:$0xf]
        %v542 = vld [vmem:[%s1 + $0x268] sm:$0xf]
        %v543 = vld [vmem:[%s1 + $0x26c] sm:$0xf]
        %v544 = vld [vmem:[%s1 + $0x270] sm:$0xf]
        %v545 = vld [vmem:[%s1 + $0x274] sm:$0xf]
        %v546 = vld [vmem:[%s1 + $0x278] sm:$0xf]
        %v547 = vld [vmem:[%s1 + $0x27c] sm:$0xf]
        %v548 = vld [vmem:[%s1 + $0x280] sm:$0xf]
        %v549 = vld [vmem:[%s1 + $0x284] sm:$0xf]
        %v550 = vld [vmem:[%s1 + $0x288] sm:$0xf]
        %v551 = vld [vmem:[%s1 + $0x28c] sm:$0xf]
        %v552 = vld [vmem:[%s1 + $0x290] sm:$0xf]
        %v553 = vld [vmem:[%s1 + $0x294] sm:$0xf]
        %v554 = vld [vmem:[%s1 + $0x298] sm:$0xf]
        %v555 = vld [vmem:[%s1 + $0x29c] sm:$0xf]
        %v556 = vld [vmem:[%s1 + $0x2a0] sm:$0xf]
        %v557 = vld [vmem:[%s1 + $0x2a4] sm:$0xf]
        %v558 = vld [vmem:[%s1 + $0x2a8] sm:$0xf]
        %v559 = vld [vmem:[%s1 + $0x2ac] sm:$0xf]
        %v560 = vld [vmem:[%s1 + $0x2b0] sm:$0xf]
        %v561 = vld [vmem:[%s1 + $0x2b4] sm:$0xf]
        %v562 = vld [vmem:[%s1 + $0x2b8] sm:$0xf]
        %v563 = vld [vmem:[%s1 + $0x2bc] sm:$0xf]
        %v564 = vld [vmem:[%s1 + $0x2c0] sm:$0xf]
        %v565 = vld [vmem:[%s1 + $0x2c4] sm:$0xf]
        %v566 = vld [vmem:[%s1 + $0x2c8] sm:$0xf]
        %v567 = vld [vmem:[%s1 + $0x2cc] sm:$0xf]
        %v568 = vld [vmem:[%s1 + $0x2d0] sm:$0xf]
        %v569 = vld [vmem:[%s1 + $0x2d4] sm:$0xf]
        %v570 = vld [vmem:[%s1 + $0x2d8] sm:$0xf]
        %v571 = vld [vmem:[%s1 + $0x2dc] sm:$0xf]
        %v572 = vld [vmem:[%s1 + $0x2e0] sm:$0xf]
        %v573 = vld [vmem:[%s1 + $0x2e4] sm:$0xf]
        %v574 = vld [vmem:[%s1 + $0x2e8] sm:$0xf]
        %v575 = vld [vmem:[%s1 + $0x2ec] sm:$0xf]
        %v576 = vld [vmem:[%s1 + $0x2f0] sm:$0xf]
        %v577 = vld [vmem:[%s1 + $0x2f4] sm:$0xf]
        %v578 = vld [vmem:[%s1 + $0x2f8] sm:$0xf]
        %v579 = vld [vmem:[%s1 + $0x2fc] sm:$0xf]
        %v580 = vld [vmem:[%s1 + $0x300] sm:$0xf]
        %v581 = vld [vmem:[%s1 + $0x304] sm:$0xf]
        %v582 = vld [vmem:[%s1 + $0x308] sm:$0xf]
        %v583 = vld [vmem:[%s1 + $0x30c] sm:$0xf]
        %v584 = vld [vmem:[%s1 + $0x310] sm:$0xf]
        %v585 = vld [vmem:[%s1 + $0x314] sm:$0xf]
        %v586 = vld [vmem:[%s1 + $0x318] sm:$0xf]
        %v587 = vld [vmem:[%s1 + $0x31c] sm:$0xf]
        %v588 = vld [vmem:[%s1 + $0x320] sm:$0xf]
        %v589 = vld [vmem:[%s1 + $0x324] sm:$0xf]
        %v590 = vld [vmem:[%s1 + $0x328] sm:$0xf]
        %v591 = vld [vmem:[%s1 + $0x32c] sm:$0xf]
        %v592 = vld [vmem:[%s1 + $0x330] sm:$0xf]
        %v593 = vld [vmem:[%s1 + $0x334] sm:$0xf]
        %v594 = vld [vmem:[%s1 + $0x338] sm:$0xf]
        %v595 = vld [vmem:[%s1 + $0x33c] sm:$0xf]
        %v596 = vld [vmem:[%s1 + $0x340] sm:$0xf]
        %v597 = vld [vmem:[%s1 + $0x344] sm:$0xf]
        %v598 = vld [vmem:[%s1 + $0x348] sm:$0xf]
        %v599 = vld [vmem:[%s1 + $0x34c] sm:$0xf]
        %v600 = vld [vmem:[%s1 + $0x350] sm:$0xf]
        %v601 = vld [vmem:[%s1 + $0x354] sm:$0xf]
        %v602 = vld [vmem:[%s1 + $0x358] sm:$0xf]
        %v603 = vld [vmem:[%s1 + $0x35c] sm:$0xf]
        %v604 = vld [vmem:[%s1 + $0x360] sm:$0xf]
        %v605 = vld [vmem:[%s1 + $0x364] sm:$0xf]
        %v606 = vld [vmem:[%s1 + $0x368] sm:$0xf]
        %v607 = vld [vmem:[%s1 + $0x36c] sm:$0xf]
        %v608 = vld [vmem:[%s1 + $0x370] sm:$0xf]
        %v609 = vld [vmem:[%s1 + $0x374] sm:$0xf]
        %v610 = vld [vmem:[%s1 + $0x378] sm:$0xf]
        %v611 = vld [vmem:[%s1 + $0x37c] sm:$0xf]
        %v668 = vunpack.c.l.b16 %v332
        %v669 = vunpack.c.h.b16 %v332
        %v670 = vunpack.c.l.b16 %v333
        %v671 = vunpack.c.h.b16 %v333
        %v672 = vunpack.c.l.b16 %v334
        %v673 = vunpack.c.h.b16 %v334
        %v674 = vunpack.c.l.b16 %v335
        %v675 = vunpack.c.h.b16 %v335
        %v676 = vunpack.c.l.b16 %v336
        %v677 = vunpack.c.h.b16 %v336
        %v678 = vunpack.c.l.b16 %v337
        %v679 = vunpack.c.h.b16 %v337
        %v680 = vunpack.c.l.b16 %v338
        %v681 = vunpack.c.h.b16 %v338
        %v682 = vunpack.c.l.b16 %v339
        %v683 = vunpack.c.h.b16 %v339
        %v684 = vunpack.c.l.b16 %v340
        %v685 = vunpack.c.h.b16 %v340
        %v686 = vunpack.c.l.b16 %v341
        %v687 = vunpack.c.h.b16 %v341
        %v688 = vunpack.c.l.b16 %v342
        %v689 = vunpack.c.h.b16 %v342
        %v690 = vunpack.c.l.b16 %v343
        %v691 = vunpack.c.h.b16 %v343
        %v692 = vunpack.c.l.b16 %v344
        %v693 = vunpack.c.h.b16 %v344
        %v694 = vunpack.c.l.b16 %v345
        %v695 = vunpack.c.h.b16 %v345
        %v696 = vunpack.c.l.b16 %v346
        %v697 = vunpack.c.h.b16 %v346
        %v698 = vunpack.c.l.b16 %v347
        %v699 = vunpack.c.h.b16 %v347
        %v700 = vunpack.c.l.b16 %v348
        %v701 = vunpack.c.h.b16 %v348
        %v702 = vunpack.c.l.b16 %v349
        %v703 = vunpack.c.h.b16 %v349
        %v704 = vunpack.c.l.b16 %v350
        %v705 = vunpack.c.h.b16 %v350
        %v706 = vunpack.c.l.b16 %v351
        %v707 = vunpack.c.h.b16 %v351
        %v708 = vunpack.c.l.b16 %v352
        %v709 = vunpack.c.h.b16 %v352
        %v710 = vunpack.c.l.b16 %v353
        %v711 = vunpack.c.h.b16 %v353
        %v712 = vunpack.c.l.b16 %v354
        %v713 = vunpack.c.h.b16 %v354
        %v714 = vunpack.c.l.b16 %v355
        %v715 = vunpack.c.h.b16 %v355
        %v716 = vunpack.c.l.b16 %v356
        %v717 = vunpack.c.h.b16 %v356
        %v718 = vunpack.c.l.b16 %v357
        %v719 = vunpack.c.h.b16 %v357
        %v720 = vunpack.c.l.b16 %v358
        %v721 = vunpack.c.h.b16 %v358
        %v722 = vunpack.c.l.b16 %v359
        %v723 = vunpack.c.h.b16 %v359
        %v724 = vunpack.c.l.b16 %v360
        %v725 = vunpack.c.h.b16 %v360
        %v726 = vunpack.c.l.b16 %v361
        %v727 = vunpack.c.h.b16 %v361
        %v728 = vunpack.c.l.b16 %v362
        %v729 = vunpack.c.h.b16 %v362
        %v730 = vunpack.c.l.b16 %v363
        %v731 = vunpack.c.h.b16 %v363
        %v732 = vunpack.c.l.b16 %v364
        %v733 = vunpack.c.h.b16 %v364
        %v734 = vunpack.c.l.b16 %v365
        %v735 = vunpack.c.h.b16 %v365
        %v736 = vunpack.c.l.b16 %v366
        %v737 = vunpack.c.h.b16 %v366
        %v738 = vunpack.c.l.b16 %v367
        %v739 = vunpack.c.h.b16 %v367
        %v740 = vunpack.c.l.b16 %v368
        %v741 = vunpack.c.h.b16 %v368
        %v742 = vunpack.c.l.b16 %v369
        %v743 = vunpack.c.h.b16 %v369
        %v744 = vunpack.c.l.b16 %v370
        %v745 = vunpack.c.h.b16 %v370
        %v746 = vunpack.c.l.b16 %v371
        %v747 = vunpack.c.h.b16 %v371
        %v748 = vunpack.c.l.b16 %v372
        %v749 = vunpack.c.h.b16 %v372
        %v750 = vunpack.c.l.b16 %v373
        %v751 = vunpack.c.h.b16 %v373
        %v752 = vunpack.c.l.b16 %v374
        %v753 = vunpack.c.h.b16 %v374
        %v754 = vunpack.c.l.b16 %v375
        %v755 = vunpack.c.h.b16 %v375
        %v756 = vunpack.c.l.b16 %v376
        %v757 = vunpack.c.h.b16 %v376
        %v758 = vunpack.c.l.b16 %v377
        %v759 = vunpack.c.h.b16 %v377
        %v760 = vunpack.c.l.b16 %v378
        %v761 = vunpack.c.h.b16 %v378
        %v762 = vunpack.c.l.b16 %v379
        %v763 = vunpack.c.h.b16 %v379
        %v764 = vunpack.c.l.b16 %v380
        %v765 = vunpack.c.h.b16 %v380
        %v766 = vunpack.c.l.b16 %v381
        %v767 = vunpack.c.h.b16 %v381
        %v768 = vunpack.c.l.b16 %v382
        %v769 = vunpack.c.h.b16 %v382
        %v770 = vunpack.c.l.b16 %v383
        %v771 = vunpack.c.h.b16 %v383
        %v772 = vunpack.c.l.b16 %v384
        %v773 = vunpack.c.h.b16 %v384
        %v774 = vunpack.c.l.b16 %v385
        %v775 = vunpack.c.h.b16 %v385
        %v776 = vunpack.c.l.b16 %v386
        %v777 = vunpack.c.h.b16 %v386
        %v778 = vunpack.c.l.b16 %v387
        %v779 = vunpack.c.h.b16 %v387
        %v780 = vpack.c.b16 %v682, %v668
        %v781 = vpack.c.b16 %v683, %v669
        %v782 = vpack.c.b16 %v684, %v670
        %v783 = vpack.c.b16 %v685, %v671
        %v784 = vpack.c.b16 %v686, %v672
        %v785 = vpack.c.b16 %v687, %v673
        %v786 = vpack.c.b16 %v688, %v674
        %v787 = vpack.c.b16 %v689, %v675
        %v788 = vpack.c.b16 %v690, %v676
        %v789 = vpack.c.b16 %v691, %v677
        %v790 = vpack.c.b16 %v692, %v678
        %v791 = vpack.c.b16 %v693, %v679
        %v792 = vpack.c.b16 %v694, %v680
        %v793 = vpack.c.b16 %v695, %v681
        %v794 = vpack.c.b16 %v710, %v696
        %v795 = vpack.c.b16 %v711, %v697
        %v796 = vpack.c.b16 %v712, %v698
        %v797 = vpack.c.b16 %v713, %v699
        %v798 = vpack.c.b16 %v714, %v700
        %v799 = vpack.c.b16 %v715, %v701
        %v800 = vpack.c.b16 %v716, %v702
        %v801 = vpack.c.b16 %v717, %v703
        %v802 = vpack.c.b16 %v718, %v704
        %v803 = vpack.c.b16 %v719, %v705
        %v804 = vpack.c.b16 %v720, %v706
        %v805 = vpack.c.b16 %v721, %v707
        %v806 = vpack.c.b16 %v722, %v708
        %v807 = vpack.c.b16 %v723, %v709
        %v808 = vpack.c.b16 %v738, %v724
        %v809 = vpack.c.b16 %v739, %v725
        %v810 = vpack.c.b16 %v740, %v726
        %v811 = vpack.c.b16 %v741, %v727
        %v812 = vpack.c.b16 %v742, %v728
        %v813 = vpack.c.b16 %v743, %v729
        %v814 = vpack.c.b16 %v744, %v730
        %v815 = vpack.c.b16 %v745, %v731
        %v816 = vpack.c.b16 %v746, %v732
        %v817 = vpack.c.b16 %v747, %v733
        %v818 = vpack.c.b16 %v748, %v734
        %v819 = vpack.c.b16 %v749, %v735
        %v820 = vpack.c.b16 %v750, %v736
        %v821 = vpack.c.b16 %v751, %v737
        %v822 = vpack.c.b16 %v766, %v752
        %v823 = vpack.c.b16 %v767, %v753
        %v824 = vpack.c.b16 %v768, %v754
        %v825 = vpack.c.b16 %v769, %v755
        %v826 = vpack.c.b16 %v770, %v756
        %v827 = vpack.c.b16 %v771, %v757
        %v828 = vpack.c.b16 %v772, %v758
        %v829 = vpack.c.b16 %v773, %v759
        %v830 = vpack.c.b16 %v774, %v760
        %v831 = vpack.c.b16 %v775, %v761
        %v832 = vpack.c.b16 %v776, %v762
        %v833 = vpack.c.b16 %v777, %v763
        %v834 = vpack.c.b16 %v778, %v764
        %v835 = vpack.c.b16 %v779, %v765
        %v1116 = vunpack.c.l.b16 %v388
        %v1117 = vunpack.c.l.b16 %v389
        %v1118 = vunpack.c.l.b16 %v390
        %v1119 = vunpack.c.l.b16 %v391
        %v1120 = vunpack.c.l.b16 %v392
        %v1121 = vunpack.c.l.b16 %v393
        %v1122 = vunpack.c.l.b16 %v394
        %v1123 = vunpack.c.l.b16 %v395
        %v1124 = vunpack.c.l.b16 %v396
        %v1125 = vunpack.c.l.b16 %v397
        %v1126 = vunpack.c.l.b16 %v398
        %v1127 = vunpack.c.l.b16 %v399
        %v1128 = vunpack.c.l.b16 %v400
        %v1129 = vunpack.c.l.b16 %v401
        %v1130 = vunpack.c.l.b16 %v402
        %v1131 = vunpack.c.l.b16 %v403
        %v1132 = vunpack.c.l.b16 %v404
        %v1133 = vunpack.c.l.b16 %v405
        %v1134 = vunpack.c.l.b16 %v406
        %v1135 = vunpack.c.l.b16 %v407
        %v1136 = vunpack.c.l.b16 %v408
        %v1137 = vunpack.c.l.b16 %v409
        %v1138 = vunpack.c.l.b16 %v410
        %v1139 = vunpack.c.l.b16 %v411
        %v1140 = vunpack.c.l.b16 %v412
        %v1141 = vunpack.c.l.b16 %v413
        %v1142 = vunpack.c.l.b16 %v414
        %v1143 = vunpack.c.l.b16 %v415
        %v1144 = vunpack.c.l.b16 %v416
        %v1145 = vunpack.c.l.b16 %v417
        %v1146 = vunpack.c.l.b16 %v418
        %v1147 = vunpack.c.l.b16 %v419
        %v1148 = vunpack.c.l.b16 %v420
        %v1149 = vunpack.c.l.b16 %v421
        %v1150 = vunpack.c.l.b16 %v422
        %v1151 = vunpack.c.l.b16 %v423
        %v1152 = vunpack.c.l.b16 %v424
        %v1153 = vunpack.c.l.b16 %v425
        %v1154 = vunpack.c.l.b16 %v426
        %v1155 = vunpack.c.l.b16 %v427
        %v1156 = vunpack.c.l.b16 %v428
        %v1157 = vunpack.c.l.b16 %v429
        %v1158 = vunpack.c.l.b16 %v430
        %v1159 = vunpack.c.l.b16 %v431
        %v1160 = vunpack.c.l.b16 %v432
        %v1161 = vunpack.c.l.b16 %v433
        %v1162 = vunpack.c.l.b16 %v434
        %v1163 = vunpack.c.l.b16 %v435
        %v1164 = vunpack.c.l.b16 %v436
        %v1165 = vunpack.c.l.b16 %v437
        %v1166 = vunpack.c.l.b16 %v438
        %v1167 = vunpack.c.l.b16 %v439
        %v1168 = vunpack.c.l.b16 %v440
        %v1169 = vunpack.c.l.b16 %v441
        %v1170 = vunpack.c.l.b16 %v442
        %v1171 = vunpack.c.l.b16 %v443
        %v1172 = vunpack.c.l.b16 %v444
        %v1173 = vunpack.c.l.b16 %v445
        %v1174 = vunpack.c.l.b16 %v446
        %v1175 = vunpack.c.l.b16 %v447
        %v1176 = vunpack.c.l.b16 %v448
        %v1177 = vunpack.c.l.b16 %v449
        %v1178 = vunpack.c.l.b16 %v450
        %v1179 = vunpack.c.l.b16 %v451
        %v1180 = vunpack.c.l.b16 %v452
        %v1181 = vunpack.c.l.b16 %v453
        %v1182 = vunpack.c.l.b16 %v454
        %v1183 = vunpack.c.l.b16 %v455
        %v1184 = vunpack.c.l.b16 %v456
        %v1185 = vunpack.c.l.b16 %v457
        %v1186 = vunpack.c.l.b16 %v458
        %v1187 = vunpack.c.l.b16 %v459
        %v1188 = vunpack.c.l.b16 %v460
        %v1189 = vunpack.c.l.b16 %v461
        %v1190 = vunpack.c.l.b16 %v462
        %v1191 = vunpack.c.l.b16 %v463
        %v1192 = vunpack.c.l.b16 %v464
        %v1193 = vunpack.c.l.b16 %v465
        %v1194 = vunpack.c.l.b16 %v466
        %v1195 = vunpack.c.l.b16 %v467
        %v1196 = vunpack.c.l.b16 %v468
        %v1197 = vunpack.c.l.b16 %v469
        %v1198 = vunpack.c.l.b16 %v470
        %v1199 = vunpack.c.l.b16 %v471
        %v1200 = vunpack.c.l.b16 %v472
        %v1201 = vunpack.c.l.b16 %v473
        %v1202 = vunpack.c.l.b16 %v474
        %v1203 = vunpack.c.l.b16 %v475
        %v1204 = vunpack.c.l.b16 %v476
        %v1205 = vunpack.c.l.b16 %v477
        %v1206 = vunpack.c.l.b16 %v478
        %v1207 = vunpack.c.l.b16 %v479
        %v1208 = vunpack.c.l.b16 %v480
        %v1209 = vunpack.c.l.b16 %v481
        %v1210 = vunpack.c.l.b16 %v482
        %v1211 = vunpack.c.l.b16 %v483
        %v1212 = vunpack.c.l.b16 %v484
        %v1213 = vunpack.c.l.b16 %v485
        %v1214 = vunpack.c.l.b16 %v486
        %v1215 = vunpack.c.l.b16 %v487
        %v1216 = vunpack.c.l.b16 %v488
        %v1217 = vunpack.c.l.b16 %v489
        %v1218 = vunpack.c.l.b16 %v490
        %v1219 = vunpack.c.l.b16 %v491
        %v1220 = vunpack.c.l.b16 %v492
        %v1221 = vunpack.c.l.b16 %v493
        %v1222 = vunpack.c.l.b16 %v494
        %v1223 = vunpack.c.l.b16 %v495
        %v1224 = vunpack.c.l.b16 %v496
        %v1225 = vunpack.c.l.b16 %v497
        %v1226 = vunpack.c.l.b16 %v498
        %v1227 = vunpack.c.l.b16 %v499
        %v1228 = vunpack.c.l.b16 %v500
        %v1229 = vunpack.c.l.b16 %v501
        %v1230 = vunpack.c.l.b16 %v502
        %v1231 = vunpack.c.l.b16 %v503
        %v1232 = vunpack.c.l.b16 %v504
        %v1233 = vunpack.c.l.b16 %v505
        %v1234 = vunpack.c.l.b16 %v506
        %v1235 = vunpack.c.l.b16 %v507
        %v1236 = vunpack.c.l.b16 %v508
        %v1237 = vunpack.c.l.b16 %v509
        %v1238 = vunpack.c.l.b16 %v510
        %v1239 = vunpack.c.l.b16 %v511
        %v1240 = vunpack.c.l.b16 %v512
        %v1241 = vunpack.c.l.b16 %v513
        %v1242 = vunpack.c.l.b16 %v514
        %v1243 = vunpack.c.l.b16 %v515
        %v1244 = vunpack.c.l.b16 %v516
        %v1245 = vunpack.c.l.b16 %v517
        %v1246 = vunpack.c.l.b16 %v518
        %v1247 = vunpack.c.l.b16 %v519
        %v1248 = vunpack.c.l.b16 %v520
        %v1249 = vunpack.c.l.b16 %v521
        %v1250 = vunpack.c.l.b16 %v522
        %v1251 = vunpack.c.l.b16 %v523
        %v1252 = vunpack.c.l.b16 %v524
        %v1253 = vunpack.c.l.b16 %v525
        %v1254 = vunpack.c.l.b16 %v526
        %v1255 = vunpack.c.l.b16 %v527
        %v1256 = vunpack.c.l.b16 %v528
        %v1257 = vunpack.c.l.b16 %v529
        %v1258 = vunpack.c.l.b16 %v530
        %v1259 = vunpack.c.l.b16 %v531
        %v1260 = vunpack.c.l.b16 %v532
        %v1261 = vunpack.c.l.b16 %v533
        %v1262 = vunpack.c.l.b16 %v534
        %v1263 = vunpack.c.l.b16 %v535
        %v1264 = vunpack.c.l.b16 %v536
        %v1265 = vunpack.c.l.b16 %v537
        %v1266 = vunpack.c.l.b16 %v538
        %v1267 = vunpack.c.l.b16 %v539
        %v1268 = vunpack.c.l.b16 %v540
        %v1269 = vunpack.c.l.b16 %v541
        %v1270 = vunpack.c.l.b16 %v542
        %v1271 = vunpack.c.l.b16 %v543
        %v1272 = vunpack.c.l.b16 %v544
        %v1273 = vunpack.c.l.b16 %v545
        %v1274 = vunpack.c.l.b16 %v546
        %v1275 = vunpack.c.l.b16 %v547
        %v1276 = vunpack.c.l.b16 %v548
        %v1277 = vunpack.c.l.b16 %v549
        %v1278 = vunpack.c.l.b16 %v550
        %v1279 = vunpack.c.l.b16 %v551
        %v1280 = vunpack.c.l.b16 %v552
        %v1281 = vunpack.c.l.b16 %v553
        %v1282 = vunpack.c.l.b16 %v554
        %v1283 = vunpack.c.l.b16 %v555
        %v1284 = vunpack.c.l.b16 %v556
        %v1285 = vunpack.c.l.b16 %v557
        %v1286 = vunpack.c.l.b16 %v558
        %v1287 = vunpack.c.l.b16 %v559
        %v1288 = vunpack.c.l.b16 %v560
        %v1289 = vunpack.c.l.b16 %v561
        %v1290 = vunpack.c.l.b16 %v562
        %v1291 = vunpack.c.l.b16 %v563
        %v1292 = vunpack.c.l.b16 %v564
        %v1293 = vunpack.c.l.b16 %v565
        %v1294 = vunpack.c.l.b16 %v566
        %v1295 = vunpack.c.l.b16 %v567
        %v1296 = vunpack.c.l.b16 %v568
        %v1297 = vunpack.c.l.b16 %v569
        %v1298 = vunpack.c.l.b16 %v570
        %v1299 = vunpack.c.l.b16 %v571
        %v1300 = vunpack.c.l.b16 %v572
        %v1301 = vunpack.c.l.b16 %v573
        %v1302 = vunpack.c.l.b16 %v574
        %v1303 = vunpack.c.l.b16 %v575
        %v1304 = vunpack.c.l.b16 %v576
        %v1305 = vunpack.c.l.b16 %v577
        %v1306 = vunpack.c.l.b16 %v578
        %v1307 = vunpack.c.l.b16 %v579
        %v1308 = vunpack.c.l.b16 %v580
        %v1309 = vunpack.c.l.b16 %v581
        %v1310 = vunpack.c.l.b16 %v582
        %v1311 = vunpack.c.l.b16 %v583
        %v1312 = vunpack.c.l.b16 %v584
        %v1313 = vunpack.c.l.b16 %v585
        %v1314 = vunpack.c.l.b16 %v586
        %v1315 = vunpack.c.l.b16 %v587
        %v1316 = vunpack.c.l.b16 %v588
        %v1317 = vunpack.c.l.b16 %v589
        %v1318 = vunpack.c.l.b16 %v590
        %v1319 = vunpack.c.l.b16 %v591
        %v1320 = vunpack.c.l.b16 %v592
        %v1321 = vunpack.c.l.b16 %v593
        %v1322 = vunpack.c.l.b16 %v594
        %v1323 = vunpack.c.l.b16 %v595
        %v1324 = vunpack.c.l.b16 %v596
        %v1325 = vunpack.c.l.b16 %v597
        %v1326 = vunpack.c.l.b16 %v598
        %v1327 = vunpack.c.l.b16 %v599
        %v1328 = vunpack.c.l.b16 %v600
        %v1329 = vunpack.c.l.b16 %v601
        %v1330 = vunpack.c.l.b16 %v602
        %v1331 = vunpack.c.l.b16 %v603
        %v1332 = vunpack.c.l.b16 %v604
        %v1333 = vunpack.c.l.b16 %v605
        %v1334 = vunpack.c.l.b16 %v606
        %v1335 = vunpack.c.l.b16 %v607
        %v1336 = vunpack.c.l.b16 %v608
        %v1337 = vunpack.c.l.b16 %v609
        %v1338 = vunpack.c.l.b16 %v610
        %v1339 = vunpack.c.l.b16 %v611
        %v1340 = vpack.c.b16 %v1117, %v1116
        %v1341 = vpack.c.b16 %v1119, %v1118
        %v1342 = vpack.c.b16 %v1121, %v1120
        %v1343 = vpack.c.b16 %v1123, %v1122
        %v1344 = vpack.c.b16 %v1125, %v1124
        %v1345 = vpack.c.b16 %v1127, %v1126
        %v1346 = vpack.c.b16 %v1129, %v1128
        %v1347 = vpack.c.b16 %v1131, %v1130
        %v1348 = vpack.c.b16 %v1133, %v1132
        %v1349 = vpack.c.b16 %v1135, %v1134
        %v1350 = vpack.c.b16 %v1137, %v1136
        %v1351 = vpack.c.b16 %v1139, %v1138
        %v1352 = vpack.c.b16 %v1141, %v1140
        %v1353 = vpack.c.b16 %v1143, %v1142
        %v1354 = vpack.c.b16 %v1145, %v1144
        %v1355 = vpack.c.b16 %v1147, %v1146
        %v1356 = vpack.c.b16 %v1149, %v1148
        %v1357 = vpack.c.b16 %v1151, %v1150
        %v1358 = vpack.c.b16 %v1153, %v1152
        %v1359 = vpack.c.b16 %v1155, %v1154
        %v1360 = vpack.c.b16 %v1157, %v1156
        %v1361 = vpack.c.b16 %v1159, %v1158
        %v1362 = vpack.c.b16 %v1161, %v1160
        %v1363 = vpack.c.b16 %v1163, %v1162
        %v1364 = vpack.c.b16 %v1165, %v1164
        %v1365 = vpack.c.b16 %v1167, %v1166
        %v1366 = vpack.c.b16 %v1169, %v1168
        %v1367 = vpack.c.b16 %v1171, %v1170
        %v1368 = vpack.c.b16 %v1173, %v1172
        %v1369 = vpack.c.b16 %v1175, %v1174
        %v1370 = vpack.c.b16 %v1177, %v1176
        %v1371 = vpack.c.b16 %v1179, %v1178
        %v1372 = vpack.c.b16 %v1181, %v1180
        %v1373 = vpack.c.b16 %v1183, %v1182
        %v1374 = vpack.c.b16 %v1185, %v1184
        %v1375 = vpack.c.b16 %v1187, %v1186
        %v1376 = vpack.c.b16 %v1189, %v1188
        %v1377 = vpack.c.b16 %v1191, %v1190
        %v1378 = vpack.c.b16 %v1193, %v1192
        %v1379 = vpack.c.b16 %v1195, %v1194
        %v1380 = vpack.c.b16 %v1197, %v1196
        %v1381 = vpack.c.b16 %v1199, %v1198
        %v1382 = vpack.c.b16 %v1201, %v1200
        %v1383 = vpack.c.b16 %v1203, %v1202
        %v1384 = vpack.c.b16 %v1205, %v1204
        %v1385 = vpack.c.b16 %v1207, %v1206
        %v1386 = vpack.c.b16 %v1209, %v1208
        %v1387 = vpack.c.b16 %v1211, %v1210
        %v1388 = vpack.c.b16 %v1213, %v1212
        %v1389 = vpack.c.b16 %v1215, %v1214
        %v1390 = vpack.c.b16 %v1217, %v1216
        %v1391 = vpack.c.b16 %v1219, %v1218
        %v1392 = vpack.c.b16 %v1221, %v1220
        %v1393 = vpack.c.b16 %v1223, %v1222
        %v1394 = vpack.c.b16 %v1225, %v1224
        %v1395 = vpack.c.b16 %v1227, %v1226
        %v1396 = vpack.c.b16 %v1229, %v1228
        %v1397 = vpack.c.b16 %v1231, %v1230
        %v1398 = vpack.c.b16 %v1233, %v1232
        %v1399 = vpack.c.b16 %v1235, %v1234
        %v1400 = vpack.c.b16 %v1237, %v1236
        %v1401 = vpack.c.b16 %v1239, %v1238
        %v1402 = vpack.c.b16 %v1241, %v1240
        %v1403 = vpack.c.b16 %v1243, %v1242
        %v1404 = vpack.c.b16 %v1245, %v1244
        %v1405 = vpack.c.b16 %v1247, %v1246
        %v1406 = vpack.c.b16 %v1249, %v1248
        %v1407 = vpack.c.b16 %v1251, %v1250
        %v1408 = vpack.c.b16 %v1253, %v1252
        %v1409 = vpack.c.b16 %v1255, %v1254
        %v1410 = vpack.c.b16 %v1257, %v1256
        %v1411 = vpack.c.b16 %v1259, %v1258
        %v1412 = vpack.c.b16 %v1261, %v1260
        %v1413 = vpack.c.b16 %v1263, %v1262
        %v1414 = vpack.c.b16 %v1265, %v1264
        %v1415 = vpack.c.b16 %v1267, %v1266
        %v1416 = vpack.c.b16 %v1269, %v1268
        %v1417 = vpack.c.b16 %v1271, %v1270
        %v1418 = vpack.c.b16 %v1273, %v1272
        %v1419 = vpack.c.b16 %v1275, %v1274
        %v1420 = vpack.c.b16 %v1277, %v1276
        %v1421 = vpack.c.b16 %v1279, %v1278
        %v1422 = vpack.c.b16 %v1281, %v1280
        %v1423 = vpack.c.b16 %v1283, %v1282
        %v1424 = vpack.c.b16 %v1285, %v1284
        %v1425 = vpack.c.b16 %v1287, %v1286
        %v1426 = vpack.c.b16 %v1289, %v1288
        %v1427 = vpack.c.b16 %v1291, %v1290
        %v1428 = vpack.c.b16 %v1293, %v1292
        %v1429 = vpack.c.b16 %v1295, %v1294
        %v1430 = vpack.c.b16 %v1297, %v1296
        %v1431 = vpack.c.b16 %v1299, %v1298
        %v1432 = vpack.c.b16 %v1301, %v1300
        %v1433 = vpack.c.b16 %v1303, %v1302
        %v1434 = vpack.c.b16 %v1305, %v1304
        %v1435 = vpack.c.b16 %v1307, %v1306
        %v1436 = vpack.c.b16 %v1309, %v1308
        %v1437 = vpack.c.b16 %v1311, %v1310
        %v1438 = vpack.c.b16 %v1313, %v1312
        %v1439 = vpack.c.b16 %v1315, %v1314
        %v1440 = vpack.c.b16 %v1317, %v1316
        %v1441 = vpack.c.b16 %v1319, %v1318
        %v1442 = vpack.c.b16 %v1321, %v1320
        %v1443 = vpack.c.b16 %v1323, %v1322
        %v1444 = vpack.c.b16 %v1325, %v1324
        %v1445 = vpack.c.b16 %v1327, %v1326
        %v1446 = vpack.c.b16 %v1329, %v1328
        %v1447 = vpack.c.b16 %v1331, %v1330
        %v1448 = vpack.c.b16 %v1333, %v1332
        %v1449 = vpack.c.b16 %v1335, %v1334
        %v1450 = vpack.c.b16 %v1337, %v1336
        %v1451 = vpack.c.b16 %v1339, %v1338
        %1564 = vmatpush.bf16.msra.mxu0 %v1347
        %1565 = vmatpush.bf16.msra.mxu0 %v1346
        %1566 = vmatpush.bf16.msra.mxu0 %v1345
        %1567 = vmatpush.bf16.msra.mxu0 %v1344
        %1568 = vmatpush.bf16.msra.mxu0 %v1343
        %1569 = vmatpush.bf16.msra.mxu0 %v1342
        %1570 = vmatpush.bf16.msra.mxu0 %v1341
        %1571 = vmatpush.bf16.msra.mxu0 %v1340
        %1572 = vmatmul.bf16.gmra.mxu0 %v780
        %v1573 = vpop.f32.mrf.mxu0
        %v1574 = vadd.f32 0.0, %v1573
        %v1575 = vpop.f32.mrf.mxu0
        %v1576 = vadd.f32 0.0, %v1575
        %1577 = vmatmul.bf16.gmra.mxu0 %v794
        %v1578 = vpop.f32.mrf.mxu0
        %v1579 = vadd.f32 0.0, %v1578
        %v1580 = vpop.f32.mrf.mxu0
        %v1581 = vadd.f32 0.0, %v1580
        %1582 = vmatmul.bf16.gmra.mxu0 %v808
        %v1583 = vpop.f32.mrf.mxu0
        %v1584 = vadd.f32 0.0, %v1583
        %v1585 = vpop.f32.mrf.mxu0
        %v1586 = vadd.f32 0.0, %v1585
        %1587 = vmatmul.bf16.gmra.mxu0 %v822
        %v1588 = vpop.f32.mrf.mxu0
        %v1589 = vadd.f32 0.0, %v1588
        %v1590 = vpop.f32.mrf.mxu0
        %v1591 = vadd.f32 0.0, %v1590
        %1592 = vdwg.mxu0
        %1593 = vmatpush.bf16.msra.mxu0 %v1355
        %1594 = vmatpush.bf16.msra.mxu0 %v1354
        %1595 = vmatpush.bf16.msra.mxu0 %v1353
        %1596 = vmatpush.bf16.msra.mxu0 %v1352
        %1597 = vmatpush.bf16.msra.mxu0 %v1351
        %1598 = vmatpush.bf16.msra.mxu0 %v1350
        %1599 = vmatpush.bf16.msra.mxu0 %v1349
        %1600 = vmatpush.bf16.msra.mxu0 %v1348
        %1601 = vmatmul.bf16.gmra.mxu0 %v781
        %v1602 = vpop.f32.mrf.mxu0
        %v1603 = vadd.f32 %v1574, %v1602
        %v1604 = vpop.f32.mrf.mxu0
        %v1605 = vadd.f32 %v1576, %v1604
        %1606 = vmatmul.bf16.gmra.mxu0 %v795
        %v1607 = vpop.f32.mrf.mxu0
        %v1608 = vadd.f32 %v1579, %v1607
        %v1609 = vpop.f32.mrf.mxu0
        %v1610 = vadd.f32 %v1581, %v1609
        %1611 = vmatmul.bf16.gmra.mxu0 %v809
        %v1612 = vpop.f32.mrf.mxu0
        %v1613 = vadd.f32 %v1584, %v1612
        %v1614 = vpop.f32.mrf.mxu0
        %v1615 = vadd.f32 %v1586, %v1614
        %1616 = vmatmul.bf16.gmra.mxu0 %v823
        %v1617 = vpop.f32.mrf.mxu0
        %v1618 = vadd.f32 %v1589, %v1617
        %v1619 = vpop.f32.mrf.mxu0
        %v1620 = vadd.f32 %v1591, %v1619
        %1621 = vdwg.mxu0
        %1622 = vmatpush.bf16.msra.mxu0 %v1363
        %1623 = vmatpush.bf16.msra.mxu0 %v1362
        %1624 = vmatpush.bf16.msra.mxu0 %v1361
        %1625 = vmatpush.bf16.msra.mxu0 %v1360
        %1626 = vmatpush.bf16.msra.mxu0 %v1359
        %1627 = vmatpush.bf16.msra.mxu0 %v1358
        %1628 = vmatpush.bf16.msra.mxu0 %v1357
        %1629 = vmatpush.bf16.msra.mxu0 %v1356
        %1630 = vmatmul.bf16.gmra.mxu0 %v782
        %v1631 = vpop.f32.mrf.mxu0
        %v1632 = vadd.f32 %v1603, %v1631
        %v1633 = vpop.f32.mrf.mxu0
        %v1634 = vadd.f32 %v1605, %v1633
        %1635 = vmatmul.bf16.gmra.mxu0 %v796
        %v1636 = vpop.f32.mrf.mxu0
        %v1637 = vadd.f32 %v1608, %v1636
        %v1638 = vpop.f32.mrf.mxu0
        %v1639 = vadd.f32 %v1610, %v1638
        %1640 = vmatmul.bf16.gmra.mxu0 %v810
        %v1641 = vpop.f32.mrf.mxu0
        %v1642 = vadd.f32 %v1613, %v1641
        %v1643 = vpop.f32.mrf.mxu0
        %v1644 = vadd.f32 %v1615, %v1643
        %1645 = vmatmul.bf16.gmra.mxu0 %v824
        %v1646 = vpop.f32.mrf.mxu0
        %v1647 = vadd.f32 %v1618, %v1646
        %v1648 = vpop.f32.mrf.mxu0
        %v1649 = vadd.f32 %v1620, %v1648
        %1650 = vdwg.mxu0
        %1651 = vmatpush.bf16.msra.mxu0 %v1371
        %1652 = vmatpush.bf16.msra.mxu0 %v1370
        %1653 = vmatpush.bf16.msra.mxu0 %v1369
        %1654 = vmatpush.bf16.msra.mxu0 %v1368
        %1655 = vmatpush.bf16.msra.mxu0 %v1367
        %1656 = vmatpush.bf16.msra.mxu0 %v1366
        %1657 = vmatpush.bf16.msra.mxu0 %v1365
        %1658 = vmatpush.bf16.msra.mxu0 %v1364
        %1659 = vmatmul.bf16.gmra.mxu0 %v783
        %v1660 = vpop.f32.mrf.mxu0
        %v1661 = vadd.f32 %v1632, %v1660
        %v1662 = vpop.f32.mrf.mxu0
        %v1663 = vadd.f32 %v1634, %v1662
        %1664 = vmatmul.bf16.gmra.mxu0 %v797
        %v1665 = vpop.f32.mrf.mxu0
        %v1666 = vadd.f32 %v1637, %v1665
        %v1667 = vpop.f32.mrf.mxu0
        %v1668 = vadd.f32 %v1639, %v1667
        %1669 = vmatmul.bf16.gmra.mxu0 %v811
        %v1670 = vpop.f32.mrf.mxu0
        %v1671 = vadd.f32 %v1642, %v1670
        %v1672 = vpop.f32.mrf.mxu0
        %v1673 = vadd.f32 %v1644, %v1672
        %1674 = vmatmul.bf16.gmra.mxu0 %v825
        %v1675 = vpop.f32.mrf.mxu0
        %v1676 = vadd.f32 %v1647, %v1675
        %v1677 = vpop.f32.mrf.mxu0
        %v1678 = vadd.f32 %v1649, %v1677
        %1679 = vdwg.mxu0
        %1680 = vmatpush.bf16.msra.mxu0 %v1379
        %1681 = vmatpush.bf16.msra.mxu0 %v1378
        %1682 = vmatpush.bf16.msra.mxu0 %v1377
        %1683 = vmatpush.bf16.msra.mxu0 %v1376
        %1684 = vmatpush.bf16.msra.mxu0 %v1375
        %1685 = vmatpush.bf16.msra.mxu0 %v1374
        %1686 = vmatpush.bf16.msra.mxu0 %v1373
        %1687 = vmatpush.bf16.msra.mxu0 %v1372
        %1688 = vmatmul.bf16.gmra.mxu0 %v784
        %v1689 = vpop.f32.mrf.mxu0
        %v1690 = vadd.f32 %v1661, %v1689
        %v1691 = vpop.f32.mrf.mxu0
        %v1692 = vadd.f32 %v1663, %v1691
        %1693 = vmatmul.bf16.gmra.mxu0 %v798
        %v1694 = vpop.f32.mrf.mxu0
        %v1695 = vadd.f32 %v1666, %v1694
        %v1696 = vpop.f32.mrf.mxu0
        %v1697 = vadd.f32 %v1668, %v1696
        %1698 = vmatmul.bf16.gmra.mxu0 %v812
        %v1699 = vpop.f32.mrf.mxu0
        %v1700 = vadd.f32 %v1671, %v1699
        %v1701 = vpop.f32.mrf.mxu0
        %v1702 = vadd.f32 %v1673, %v1701
        %1703 = vmatmul.bf16.gmra.mxu0 %v826
        %v1704 = vpop.f32.mrf.mxu0
        %v1705 = vadd.f32 %v1676, %v1704
        %v1706 = vpop.f32.mrf.mxu0
        %v1707 = vadd.f32 %v1678, %v1706
        %1708 = vdwg.mxu0
        %1709 = vmatpush.bf16.msra.mxu0 %v1387
        %1710 = vmatpush.bf16.msra.mxu0 %v1386
        %1711 = vmatpush.bf16.msra.mxu0 %v1385
        %1712 = vmatpush.bf16.msra.mxu0 %v1384
        %1713 = vmatpush.bf16.msra.mxu0 %v1383
        %1714 = vmatpush.bf16.msra.mxu0 %v1382
        %1715 = vmatpush.bf16.msra.mxu0 %v1381
        %1716 = vmatpush.bf16.msra.mxu0 %v1380
        %1717 = vmatmul.bf16.gmra.mxu0 %v785
        %v1718 = vpop.f32.mrf.mxu0
        %v1719 = vadd.f32 %v1690, %v1718
        %v1720 = vpop.f32.mrf.mxu0
        %v1721 = vadd.f32 %v1692, %v1720
        %1722 = vmatmul.bf16.gmra.mxu0 %v799
        %v1723 = vpop.f32.mrf.mxu0
        %v1724 = vadd.f32 %v1695, %v1723
        %v1725 = vpop.f32.mrf.mxu0
        %v1726 = vadd.f32 %v1697, %v1725
        %1727 = vmatmul.bf16.gmra.mxu0 %v813
        %v1728 = vpop.f32.mrf.mxu0
        %v1729 = vadd.f32 %v1700, %v1728
        %v1730 = vpop.f32.mrf.mxu0
        %v1731 = vadd.f32 %v1702, %v1730
        %1732 = vmatmul.bf16.gmra.mxu0 %v827
        %v1733 = vpop.f32.mrf.mxu0
        %v1734 = vadd.f32 %v1705, %v1733
        %v1735 = vpop.f32.mrf.mxu0
        %v1736 = vadd.f32 %v1707, %v1735
        %1737 = vdwg.mxu0
        %1738 = vmatpush.bf16.msra.mxu0 %v1395
        %1739 = vmatpush.bf16.msra.mxu0 %v1394
        %1740 = vmatpush.bf16.msra.mxu0 %v1393
        %1741 = vmatpush.bf16.msra.mxu0 %v1392
        %1742 = vmatpush.bf16.msra.mxu0 %v1391
        %1743 = vmatpush.bf16.msra.mxu0 %v1390
        %1744 = vmatpush.bf16.msra.mxu0 %v1389
        %1745 = vmatpush.bf16.msra.mxu0 %v1388
        %1746 = vmatmul.bf16.gmra.mxu0 %v786
        %v1747 = vpop.f32.mrf.mxu0
        %v1748 = vadd.f32 %v1719, %v1747
        %v1749 = vpop.f32.mrf.mxu0
        %v1750 = vadd.f32 %v1721, %v1749
        %1751 = vmatmul.bf16.gmra.mxu0 %v800
        %v1752 = vpop.f32.mrf.mxu0
        %v1753 = vadd.f32 %v1724, %v1752
        %v1754 = vpop.f32.mrf.mxu0
        %v1755 = vadd.f32 %v1726, %v1754
        %1756 = vmatmul.bf16.gmra.mxu0 %v814
        %v1757 = vpop.f32.mrf.mxu0
        %v1758 = vadd.f32 %v1729, %v1757
        %v1759 = vpop.f32.mrf.mxu0
        %v1760 = vadd.f32 %v1731, %v1759
        %1761 = vmatmul.bf16.gmra.mxu0 %v828
        %v1762 = vpop.f32.mrf.mxu0
        %v1763 = vadd.f32 %v1734, %v1762
        %v1764 = vpop.f32.mrf.mxu0
        %v1765 = vadd.f32 %v1736, %v1764
        %1766 = vdwg.mxu0
        %1767 = vmatpush.bf16.msra.mxu0 %v1403
        %1768 = vmatpush.bf16.msra.mxu0 %v1402
        %1769 = vmatpush.bf16.msra.mxu0 %v1401
        %1770 = vmatpush.bf16.msra.mxu0 %v1400
        %1771 = vmatpush.bf16.msra.mxu0 %v1399
        %1772 = vmatpush.bf16.msra.mxu0 %v1398
        %1773 = vmatpush.bf16.msra.mxu0 %v1397
        %1774 = vmatpush.bf16.msra.mxu0 %v1396
        %1775 = vmatmul.bf16.gmra.mxu0 %v787
        %v1776 = vpop.f32.mrf.mxu0
        %v1777 = vadd.f32 %v1748, %v1776
        %v1778 = vpop.f32.mrf.mxu0
        %v1779 = vadd.f32 %v1750, %v1778
        %1780 = vmatmul.bf16.gmra.mxu0 %v801
        %v1781 = vpop.f32.mrf.mxu0
        %v1782 = vadd.f32 %v1753, %v1781
        %v1783 = vpop.f32.mrf.mxu0
        %v1784 = vadd.f32 %v1755, %v1783
        %1785 = vmatmul.bf16.gmra.mxu0 %v815
        %v1786 = vpop.f32.mrf.mxu0
        %v1787 = vadd.f32 %v1758, %v1786
        %v1788 = vpop.f32.mrf.mxu0
        %v1789 = vadd.f32 %v1760, %v1788
        %1790 = vmatmul.bf16.gmra.mxu0 %v829
        %v1791 = vpop.f32.mrf.mxu0
        %v1792 = vadd.f32 %v1763, %v1791
        %v1793 = vpop.f32.mrf.mxu0
        %v1794 = vadd.f32 %v1765, %v1793
        %1795 = vdwg.mxu0
        %1796 = vmatpush.bf16.msra.mxu0 %v1411
        %1797 = vmatpush.bf16.msra.mxu0 %v1410
        %1798 = vmatpush.bf16.msra.mxu0 %v1409
        %1799 = vmatpush.bf16.msra.mxu0 %v1408
        %1800 = vmatpush.bf16.msra.mxu0 %v1407
        %1801 = vmatpush.bf16.msra.mxu0 %v1406
        %1802 = vmatpush.bf16.msra.mxu0 %v1405
        %1803 = vmatpush.bf16.msra.mxu0 %v1404
        %1804 = vmatmul.bf16.gmra.mxu0 %v788
        %v1805 = vpop.f32.mrf.mxu0
        %v1806 = vadd.f32 %v1777, %v1805
        %v1807 = vpop.f32.mrf.mxu0
        %v1808 = vadd.f32 %v1779, %v1807
        %1809 = vmatmul.bf16.gmra.mxu0 %v802
        %v1810 = vpop.f32.mrf.mxu0
        %v1811 = vadd.f32 %v1782, %v1810
        %v1812 = vpop.f32.mrf.mxu0
        %v1813 = vadd.f32 %v1784, %v1812
        %1814 = vmatmul.bf16.gmra.mxu0 %v816
        %v1815 = vpop.f32.mrf.mxu0
        %v1816 = vadd.f32 %v1787, %v1815
        %v1817 = vpop.f32.mrf.mxu0
        %v1818 = vadd.f32 %v1789, %v1817
        %1819 = vmatmul.bf16.gmra.mxu0 %v830
        %v1820 = vpop.f32.mrf.mxu0
        %v1821 = vadd.f32 %v1792, %v1820
        %v1822 = vpop.f32.mrf.mxu0
        %v1823 = vadd.f32 %v1794, %v1822
        %1824 = vdwg.mxu0
        %1825 = vmatpush.bf16.msra.mxu0 %v1419
        %1826 = vmatpush.bf16.msra.mxu0 %v1418
        %1827 = vmatpush.bf16.msra.mxu0 %v1417
        %1828 = vmatpush.bf16.msra.mxu0 %v1416
        %1829 = vmatpush.bf16.msra.mxu0 %v1415
        %1830 = vmatpush.bf16.msra.mxu0 %v1414
        %1831 = vmatpush.bf16.msra.mxu0 %v1413
        %1832 = vmatpush.bf16.msra.mxu0 %v1412
        %1833 = vmatmul.bf16.gmra.mxu0 %v789
        %v1834 = vpop.f32.mrf.mxu0
        %v1835 = vadd.f32 %v1806, %v1834
        %v1836 = vpop.f32.mrf.mxu0
        %v1837 = vadd.f32 %v1808, %v1836
        %1838 = vmatmul.bf16.gmra.mxu0 %v803
        %v1839 = vpop.f32.mrf.mxu0
        %v1840 = vadd.f32 %v1811, %v1839
        %v1841 = vpop.f32.mrf.mxu0
        %v1842 = vadd.f32 %v1813, %v1841
        %1843 = vmatmul.bf16.gmra.mxu0 %v817
        %v1844 = vpop.f32.mrf.mxu0
        %v1845 = vadd.f32 %v1816, %v1844
        %v1846 = vpop.f32.mrf.mxu0
        %v1847 = vadd.f32 %v1818, %v1846
        %1848 = vmatmul.bf16.gmra.mxu0 %v831
        %v1849 = vpop.f32.mrf.mxu0
        %v1850 = vadd.f32 %v1821, %v1849
        %v1851 = vpop.f32.mrf.mxu0
        %v1852 = vadd.f32 %v1823, %v1851
        %1853 = vdwg.mxu0
        %1854 = vmatpush.bf16.msra.mxu0 %v1427
        %1855 = vmatpush.bf16.msra.mxu0 %v1426
        %1856 = vmatpush.bf16.msra.mxu0 %v1425
        %1857 = vmatpush.bf16.msra.mxu0 %v1424
        %1858 = vmatpush.bf16.msra.mxu0 %v1423
        %1859 = vmatpush.bf16.msra.mxu0 %v1422
        %1860 = vmatpush.bf16.msra.mxu0 %v1421
        %1861 = vmatpush.bf16.msra.mxu0 %v1420
        %1862 = vmatmul.bf16.gmra.mxu0 %v790
        %v1863 = vpop.f32.mrf.mxu0
        %v1864 = vadd.f32 %v1835, %v1863
        %v1865 = vpop.f32.mrf.mxu0
        %v1866 = vadd.f32 %v1837, %v1865
        %1867 = vmatmul.bf16.gmra.mxu0 %v804
        %v1868 = vpop.f32.mrf.mxu0
        %v1869 = vadd.f32 %v1840, %v1868
        %v1870 = vpop.f32.mrf.mxu0
        %v1871 = vadd.f32 %v1842, %v1870
        %1872 = vmatmul.bf16.gmra.mxu0 %v818
        %v1873 = vpop.f32.mrf.mxu0
        %v1874 = vadd.f32 %v1845, %v1873
        %v1875 = vpop.f32.mrf.mxu0
        %v1876 = vadd.f32 %v1847, %v1875
        %1877 = vmatmul.bf16.gmra.mxu0 %v832
        %v1878 = vpop.f32.mrf.mxu0
        %v1879 = vadd.f32 %v1850, %v1878
        %v1880 = vpop.f32.mrf.mxu0
        %v1881 = vadd.f32 %v1852, %v1880
        %1882 = vdwg.mxu0
        %1883 = vmatpush.bf16.msra.mxu0 %v1435
        %1884 = vmatpush.bf16.msra.mxu0 %v1434
        %1885 = vmatpush.bf16.msra.mxu0 %v1433
        %1886 = vmatpush.bf16.msra.mxu0 %v1432
        %1887 = vmatpush.bf16.msra.mxu0 %v1431
        %1888 = vmatpush.bf16.msra.mxu0 %v1430
        %1889 = vmatpush.bf16.msra.mxu0 %v1429
        %1890 = vmatpush.bf16.msra.mxu0 %v1428
        %1891 = vmatmul.bf16.gmra.mxu0 %v791
        %v1892 = vpop.f32.mrf.mxu0
        %v1893 = vadd.f32 %v1864, %v1892
        %v1894 = vpop.f32.mrf.mxu0
        %v1895 = vadd.f32 %v1866, %v1894
        %1896 = vmatmul.bf16.gmra.mxu0 %v805
        %v1897 = vpop.f32.mrf.mxu0
        %v1898 = vadd.f32 %v1869, %v1897
        %v1899 = vpop.f32.mrf.mxu0
        %v1900 = vadd.f32 %v1871, %v1899
        %1901 = vmatmul.bf16.gmra.mxu0 %v819
        %v1902 = vpop.f32.mrf.mxu0
        %v1903 = vadd.f32 %v1874, %v1902
        %v1904 = vpop.f32.mrf.mxu0
        %v1905 = vadd.f32 %v1876, %v1904
        %1906 = vmatmul.bf16.gmra.mxu0 %v833
        %v1907 = vpop.f32.mrf.mxu0
        %v1908 = vadd.f32 %v1879, %v1907
        %v1909 = vpop.f32.mrf.mxu0
        %v1910 = vadd.f32 %v1881, %v1909
        %1911 = vdwg.mxu0
        %1912 = vmatpush.bf16.msra.mxu0 %v1443
        %1913 = vmatpush.bf16.msra.mxu0 %v1442
        %1914 = vmatpush.bf16.msra.mxu0 %v1441
        %1915 = vmatpush.bf16.msra.mxu0 %v1440
        %1916 = vmatpush.bf16.msra.mxu0 %v1439
        %1917 = vmatpush.bf16.msra.mxu0 %v1438
        %1918 = vmatpush.bf16.msra.mxu0 %v1437
        %1919 = vmatpush.bf16.msra.mxu0 %v1436
        %1920 = vmatmul.bf16.gmra.mxu0 %v792
        %v1921 = vpop.f32.mrf.mxu0
        %v1922 = vadd.f32 %v1893, %v1921
        %v1923 = vpop.f32.mrf.mxu0
        %v1924 = vadd.f32 %v1895, %v1923
        %1925 = vmatmul.bf16.gmra.mxu0 %v806
        %v1926 = vpop.f32.mrf.mxu0
        %v1927 = vadd.f32 %v1898, %v1926
        %v1928 = vpop.f32.mrf.mxu0
        %v1929 = vadd.f32 %v1900, %v1928
        %1930 = vmatmul.bf16.gmra.mxu0 %v820
        %v1931 = vpop.f32.mrf.mxu0
        %v1932 = vadd.f32 %v1903, %v1931
        %v1933 = vpop.f32.mrf.mxu0
        %v1934 = vadd.f32 %v1905, %v1933
        %1935 = vmatmul.bf16.gmra.mxu0 %v834
        %v1936 = vpop.f32.mrf.mxu0
        %v1937 = vadd.f32 %v1908, %v1936
        %v1938 = vpop.f32.mrf.mxu0
        %v1939 = vadd.f32 %v1910, %v1938
        %1940 = vdwg.mxu0
        %1941 = vmatpush.bf16.msra.mxu0 %v1451
        %1942 = vmatpush.bf16.msra.mxu0 %v1450
        %1943 = vmatpush.bf16.msra.mxu0 %v1449
        %1944 = vmatpush.bf16.msra.mxu0 %v1448
        %1945 = vmatpush.bf16.msra.mxu0 %v1447
        %1946 = vmatpush.bf16.msra.mxu0 %v1446
        %1947 = vmatpush.bf16.msra.mxu0 %v1445
        %1948 = vmatpush.bf16.msra.mxu0 %v1444
        %1949 = vmatmul.bf16.gmra.mxu0 %v793
        %v1950 = vpop.f32.mrf.mxu0
        %v1951 = vadd.f32 %v1922, %v1950
        %v1952 = vpop.f32.mrf.mxu0
        %v1953 = vadd.f32 %v1924, %v1952
        %1954 = vmatmul.bf16.gmra.mxu0 %v807
        %v1955 = vpop.f32.mrf.mxu0
        %v1956 = vadd.f32 %v1927, %v1955
        %v1957 = vpop.f32.mrf.mxu0
        %v1958 = vadd.f32 %v1929, %v1957
        %1959 = vmatmul.bf16.gmra.mxu0 %v821
        %v1960 = vpop.f32.mrf.mxu0
        %v1961 = vadd.f32 %v1932, %v1960
        %v1962 = vpop.f32.mrf.mxu0
        %v1963 = vadd.f32 %v1934, %v1962
        %1964 = vmatmul.bf16.gmra.mxu0 %v835
        %v1965 = vpop.f32.mrf.mxu0
        %v1966 = vadd.f32 %v1937, %v1965
        %v1967 = vpop.f32.mrf.mxu0
        %v1968 = vadd.f32 %v1939, %v1967
        %1969 = vdwg.mxu0
        %v1970 = vmax.f32 %v1951, %v1961
        %v1971 = vmax.f32 %v1956, %v1966
        %v1972 = vmax.f32 %v1970, %v1971
        %v1973 = vmax.f32 %v1953, %v1963
        %v1974 = vmax.f32 %v1958, %v1968
        %v1975 = vmax.f32 %v1973, %v1974
        %v1976 = vld [vmem:[%s2] sm:$0x1]
        %v1978 = vperm.slane %v1976, 0
        %v1980 = vadd.f32 %v1972, %v1978
        %v1981 = vadd.f32 %v1975, %v1978
        %s1982 = sld [smem:[#allocation2]]
        %vm1983 = vcmp.gt.f32.partialorder %v1980, 0.0
        %vm1984 = vcmp.gt.f32.partialorder %v1981, 0.0
        %v1985 = vstv %s1982
        %v1986 = vmul.f32 %v1985, %v1980
        %v1987 = vmul.f32 %v1985, %v1981
        %v1988 = vsel %vm1983, %v1980, %v1986
        %v1989 = vsel %vm1984, %v1981, %v1987
        %v1990 = vpack.c.bf16 %v1988, %v1988
        %v1991 = vpack.c.bf16 %v1989, %v1989
        %1992 = vst [vmem:[%s330] sm:$0xf] %v1990
        %1993 = vst [vmem:[%s330 + $0x4] sm:$0xf] %v1991
        %s1994 = smul.u32 2, %s16
        %p1995 = scmp.lt.s32.totalorder %s1994, 5
        %s1996 = scalar_select %p1995, %s1994, 5
        %s1997 = smul.addr %s1996, 4
        %s1998 = scalar_lea.vmem %s4, %s1997
        // Predicated region
        $region60: #{triplet_net_forward.4} parent=54 // pred_check
          %p1999 = pneg %p123
        $region61: #{triplet_net_forward.4} parent=54 // pred_check_branch
          %2001 = sbr.rel (%p1999) target = $region63
        $region62: #{triplet_net_forward.4} parent=54 // pred_region
          %s2002 = smul.u32 2, %s16
        $region63: #{triplet_net_forward.4} parent=54 // pred_fallthru
          _
      $region55: #{triplet_net_forward.4} parent=5 // pred_fallthru
        _
      %p2003 = scmp.le.s32.totalorder 2, %s11
      // Predicated region
      $region64: #{triplet_net_forward.4} parent=5 // pred_check
        %p2004 = pneg %p2003
      $region65: #{triplet_net_forward.4} parent=5 // pred_check_branch
        %2006 = sbr.rel (%p2004) target = $region67
      $region66: #{triplet_net_forward.4} parent=5 // pred_region
        %s2007 = ssub.s32 %s11, 2
        // Predicated region
        $region68: #{triplet_net_forward.4} parent=66 // pred_check
          %p2008 = pneg %p129
        $region69: #{triplet_net_forward.4} parent=66 // pred_check_branch
          %2010 = sbr.rel (%p2008) target = $region71
        $region70: #{triplet_net_forward.4} parent=66 // pred_region
          %s2011 = smul.u32 2, %s17
          %p2012 = scmp.lt.s32.totalorder %s2011, 5
          %s2013 = scalar_select %p2012, %s2011, 5
          %s2014 = smul.addr %s2013, 4
          %s2015 = scalar_lea.vmem %s4, %s2014
        $region71: #{triplet_net_forward.4} parent=66 // pred_fallthru
          _
      $region67: #{triplet_net_forward.4} parent=5 // pred_fallthru
        _
    $region6: #{triplet_net_forward.4} parent=1 // loop_footer
      %s15 = sadd.s32 1, %s11
    $region7: #{triplet_net_forward.4} parent=1 // loop_footer_branch
      %10 = sbr.rel target = $region3
    $region8: #{triplet_net_forward.4} parent=1 // loop_exit
      _

// kernel: triplet_net_forward.5
$region0: #{triplet_net_forward.5}
  #allocation0 [shape = 'u32[]', space=smem, size = 0x4, offset = 0x4, fixed_abs, tag = 'smem constant byte address 0x4 - core index']
  #allocation1 [shape = 'u32[72,128]{1,0:T(1,128)}', space=vmem, size = 0x9000, scoped, tag = 'internal scratch']
  #allocation2 [shape = 'f32[1,1]{1,0:T(1,128)S(6)}', space=smem, size = 0x200, scoped, tag = 'scoped memory for triplet_net_forward.5']
  %s0 = inlined_call_operand.vmem [shape: bf16[6,1024], index: 0, kind: input, shape index: {}]
  %s1 = inlined_call_operand.vmem [shape: bf16[1024,256], index: 1, kind: input, shape index: {}]
  %s2 = inlined_call_operand.vmem [shape: f32[1,256], index: 2, kind: input, shape index: {}]
  %s3 = inlined_call_operand.<no memory space> [shape: f32[1,1], index: 3, kind: input, shape index: {}]
  %s4 = inlined_call_operand.vmem [shape: bf16[256,256], index: 4, kind: input, shape index: {}]
  %s5 = inlined_call_operand.vmem [shape: f32[1,256], index: 5, kind: input, shape index: {}]
  %s6 = inlined_call_operand.vmem [shape: f32[6,256], index: 6, kind: output, shape index: {}]
  %s7 = sld [smem:[#allocation0]]
  $region34: #{triplet_net_forward.5} parent=0
    _
  %s9 = ssub.s32 1, %s7
  %s10 = scalar_select 0, %s9, %s7
  %11 = sst [smem:[#allocation2]] %s3
  // Predicated region
  $region2: #{triplet_net_forward.5} parent=0 // pred_check
    _
  $region3: #{triplet_net_forward.5} parent=0 // pred_check_branch
    %13 = sbr.rel (0) target = $region5
  $region4: #{triplet_net_forward.5} parent=0 // pred_region
    _
  $region5: #{triplet_net_forward.5} parent=0 // pred_fallthru
    _
  // Predicated region
  $region6: #{triplet_net_forward.5} parent=0 // pred_check
    _
  $region7: #{triplet_net_forward.5} parent=0 // pred_check_branch
    %15 = sbr.rel (0) target = $region9
  $region8: #{triplet_net_forward.5} parent=0 // pred_region
    _
  $region9: #{triplet_net_forward.5} parent=0 // pred_fallthru
    _
  // Predicated region
  $region10: #{triplet_net_forward.5} parent=0 // pred_check
    _
  $region11: #{triplet_net_forward.5} parent=0 // pred_check_branch
    %17 = sbr.rel (0) target = $region13
  $region12: #{triplet_net_forward.5} parent=0 // pred_region
    _
  $region13: #{triplet_net_forward.5} parent=0 // pred_fallthru
    _
  // Predicated region
  $region14: #{triplet_net_forward.5} parent=0 // pred_check
    _
  $region15: #{triplet_net_forward.5} parent=0 // pred_check_branch
    %19 = sbr.rel (0) target = $region17
  $region16: #{triplet_net_forward.5} parent=0 // pred_region
    _
  $region17: #{triplet_net_forward.5} parent=0 // pred_fallthru
    _
  // Predicated region
  $region18: #{triplet_net_forward.5} parent=0 // pred_check
    _
  $region19: #{triplet_net_forward.5} parent=0 // pred_check_branch
    %21 = sbr.rel (0) target = $region21
  $region20: #{triplet_net_forward.5} parent=0 // pred_region
    _
  $region21: #{triplet_net_forward.5} parent=0 // pred_fallthru
    _
  // Predicated region
  $region22: #{triplet_net_forward.5} parent=0 // pred_check
    _
  $region23: #{triplet_net_forward.5} parent=0 // pred_check_branch
    %23 = sbr.rel (0) target = $region25
  $region24: #{triplet_net_forward.5} parent=0 // pred_region
    _
  $region25: #{triplet_net_forward.5} parent=0 // pred_fallthru
    _
  %v24 = vld [vmem:[%s0] sm:$0xff]
  %v25 = vld [vmem:[%s0 + $0x8] sm:$0xff]
  %v26 = vld [vmem:[%s0 + $0x10] sm:$0xff]
  %v27 = vld [vmem:[%s0 + $0x18] sm:$0xff]
  %v28 = vld [vmem:[%s1] sm:$0xff]
  %v29 = vld [vmem:[%s1 + $0x8] sm:$0xff]
  %v30 = vld [vmem:[%s1 + $0x10] sm:$0xff]
  %v31 = vld [vmem:[%s1 + $0x18] sm:$0xff]
  %v32 = vld [vmem:[%s1 + $0x20] sm:$0xff]
  %v33 = vld [vmem:[%s1 + $0x28] sm:$0xff]
  %v34 = vld [vmem:[%s1 + $0x30] sm:$0xff]
  %v35 = vld [vmem:[%s1 + $0x38] sm:$0xff]
  %v36 = vld [vmem:[%s1 + $0x40] sm:$0xff]
  %v37 = vld [vmem:[%s1 + $0x48] sm:$0xff]
  %v38 = vld [vmem:[%s1 + $0x50] sm:$0xff]
  %v39 = vld [vmem:[%s1 + $0x58] sm:$0xff]
  %v40 = vld [vmem:[%s1 + $0x60] sm:$0xff]
  %v41 = vld [vmem:[%s1 + $0x68] sm:$0xff]
  %v42 = vld [vmem:[%s1 + $0x70] sm:$0xff]
  %v43 = vld [vmem:[%s1 + $0x78] sm:$0xff]
  %v44 = vld [vmem:[%s1 + $0x80] sm:$0xff]
  %v45 = vld [vmem:[%s1 + $0x88] sm:$0xff]
  %v46 = vld [vmem:[%s1 + $0x90] sm:$0xff]
  %v47 = vld [vmem:[%s1 + $0x98] sm:$0xff]
  %v48 = vld [vmem:[%s1 + $0xa0] sm:$0xff]
  %v49 = vld [vmem:[%s1 + $0xa8] sm:$0xff]
  %v50 = vld [vmem:[%s1 + $0xb0] sm:$0xff]
  %v51 = vld [vmem:[%s1 + $0xb8] sm:$0xff]
  %v52 = vld [vmem:[%s1 + $0xc0] sm:$0xff]
  %v53 = vld [vmem:[%s1 + $0xc8] sm:$0xff]
  %v54 = vld [vmem:[%s1 + $0xd0] sm:$0xff]
  %v55 = vld [vmem:[%s1 + $0xd8] sm:$0xff]
  %v56 = vld [vmem:[%s1 + $0xe0] sm:$0xff]
  %v57 = vld [vmem:[%s1 + $0xe8] sm:$0xff]
  %v58 = vld [vmem:[%s1 + $0xf0] sm:$0xff]
  %v59 = vld [vmem:[%s1 + $0xf8] sm:$0xff]
  %v60 = vld [vmem:[%s1 + $0x100] sm:$0xff]
  %v61 = vld [vmem:[%s1 + $0x108] sm:$0xff]
  %v62 = vld [vmem:[%s1 + $0x110] sm:$0xff]
  %v63 = vld [vmem:[%s1 + $0x118] sm:$0xff]
  %v64 = vld [vmem:[%s1 + $0x120] sm:$0xff]
  %v65 = vld [vmem:[%s1 + $0x128] sm:$0xff]
  %v66 = vld [vmem:[%s1 + $0x130] sm:$0xff]
  %v67 = vld [vmem:[%s1 + $0x138] sm:$0xff]
  %v68 = vld [vmem:[%s1 + $0x140] sm:$0xff]
  %v69 = vld [vmem:[%s1 + $0x148] sm:$0xff]
  %v70 = vld [vmem:[%s1 + $0x150] sm:$0xff]
  %v71 = vld [vmem:[%s1 + $0x158] sm:$0xff]
  %v72 = vld [vmem:[%s1 + $0x160] sm:$0xff]
  %v73 = vld [vmem:[%s1 + $0x168] sm:$0xff]
  %v74 = vld [vmem:[%s1 + $0x170] sm:$0xff]
  %v75 = vld [vmem:[%s1 + $0x178] sm:$0xff]
  %v76 = vld [vmem:[%s1 + $0x180] sm:$0xff]
  %v77 = vld [vmem:[%s1 + $0x188] sm:$0xff]
  %v78 = vld [vmem:[%s1 + $0x190] sm:$0xff]
  %v79 = vld [vmem:[%s1 + $0x198] sm:$0xff]
  %v80 = vld [vmem:[%s1 + $0x1a0] sm:$0xff]
  %v81 = vld [vmem:[%s1 + $0x1a8] sm:$0xff]
  %v82 = vld [vmem:[%s1 + $0x1b0] sm:$0xff]
  %v83 = vld [vmem:[%s1 + $0x1b8] sm:$0xff]
  %v84 = vld [vmem:[%s1 + $0x1c0] sm:$0xff]
  %v85 = vld [vmem:[%s1 + $0x1c8] sm:$0xff]
  %v86 = vld [vmem:[%s1 + $0x1d0] sm:$0xff]
  %v87 = vld [vmem:[%s1 + $0x1d8] sm:$0xff]
  %v88 = vld [vmem:[%s1 + $0x1e0] sm:$0xff]
  %v89 = vld [vmem:[%s1 + $0x1e8] sm:$0xff]
  %v90 = vld [vmem:[%s1 + $0x1f0] sm:$0xff]
  %v91 = vld [vmem:[%s1 + $0x1f8] sm:$0xff]
  %v92 = vld [vmem:[%s1 + $0x200] sm:$0xff]
  %v93 = vld [vmem:[%s1 + $0x208] sm:$0xff]
  %v94 = vld [vmem:[%s1 + $0x210] sm:$0xff]
  %v95 = vld [vmem:[%s1 + $0x218] sm:$0xff]
  %v96 = vld [vmem:[%s1 + $0x220] sm:$0xff]
  %v97 = vld [vmem:[%s1 + $0x228] sm:$0xff]
  %v98 = vld [vmem:[%s1 + $0x230] sm:$0xff]
  %v99 = vld [vmem:[%s1 + $0x238] sm:$0xff]
  %v100 = vld [vmem:[%s1 + $0x240] sm:$0xff]
  %v101 = vld [vmem:[%s1 + $0x248] sm:$0xff]
  %v102 = vld [vmem:[%s1 + $0x250] sm:$0xff]
  %v103 = vld [vmem:[%s1 + $0x258] sm:$0xff]
  %v104 = vld [vmem:[%s1 + $0x260] sm:$0xff]
  %v105 = vld [vmem:[%s1 + $0x268] sm:$0xff]
  %v106 = vld [vmem:[%s1 + $0x270] sm:$0xff]
  %v107 = vld [vmem:[%s1 + $0x278] sm:$0xff]
  %v108 = vld [vmem:[%s1 + $0x280] sm:$0xff]
  %v109 = vld [vmem:[%s1 + $0x288] sm:$0xff]
  %v110 = vld [vmem:[%s1 + $0x290] sm:$0xff]
  %v111 = vld [vmem:[%s1 + $0x298] sm:$0xff]
  %v112 = vld [vmem:[%s1 + $0x2a0] sm:$0xff]
  %v113 = vld [vmem:[%s1 + $0x2a8] sm:$0xff]
  %v114 = vld [vmem:[%s1 + $0x2b0] sm:$0xff]
  %v115 = vld [vmem:[%s1 + $0x2b8] sm:$0xff]
  %v116 = vld [vmem:[%s1 + $0x2c0] sm:$0xff]
  %v117 = vld [vmem:[%s1 + $0x2c8] sm:$0xff]
  %v118 = vld [vmem:[%s1 + $0x2d0] sm:$0xff]
  %v119 = vld [vmem:[%s1 + $0x2d8] sm:$0xff]
  %v120 = vld [vmem:[%s1 + $0x2e0] sm:$0xff]
  %v121 = vld [vmem:[%s1 + $0x2e8] sm:$0xff]
  %v122 = vld [vmem:[%s1 + $0x2f0] sm:$0xff]
  %v123 = vld [vmem:[%s1 + $0x2f8] sm:$0xff]
  %v124 = vld [vmem:[%s1 + $0x300] sm:$0xff]
  %v125 = vld [vmem:[%s1 + $0x308] sm:$0xff]
  %v126 = vld [vmem:[%s1 + $0x310] sm:$0xff]
  %v127 = vld [vmem:[%s1 + $0x318] sm:$0xff]
  %v128 = vld [vmem:[%s1 + $0x320] sm:$0xff]
  %v129 = vld [vmem:[%s1 + $0x328] sm:$0xff]
  %v130 = vld [vmem:[%s1 + $0x330] sm:$0xff]
  %v131 = vld [vmem:[%s1 + $0x338] sm:$0xff]
  %v132 = vld [vmem:[%s1 + $0x340] sm:$0xff]
  %v133 = vld [vmem:[%s1 + $0x348] sm:$0xff]
  %v134 = vld [vmem:[%s1 + $0x350] sm:$0xff]
  %v135 = vld [vmem:[%s1 + $0x358] sm:$0xff]
  %v136 = vld [vmem:[%s1 + $0x360] sm:$0xff]
  %v137 = vld [vmem:[%s1 + $0x368] sm:$0xff]
  %v138 = vld [vmem:[%s1 + $0x370] sm:$0xff]
  %v139 = vld [vmem:[%s1 + $0x378] sm:$0xff]
  %v140 = vld [vmem:[%s1 + $0x380] sm:$0xff]
  %v141 = vld [vmem:[%s1 + $0x388] sm:$0xff]
  %v142 = vld [vmem:[%s1 + $0x390] sm:$0xff]
  %v143 = vld [vmem:[%s1 + $0x398] sm:$0xff]
  %v144 = vld [vmem:[%s1 + $0x3a0] sm:$0xff]
  %v145 = vld [vmem:[%s1 + $0x3a8] sm:$0xff]
  %v146 = vld [vmem:[%s1 + $0x3b0] sm:$0xff]
  %v147 = vld [vmem:[%s1 + $0x3b8] sm:$0xff]
  %v148 = vld [vmem:[%s1 + $0x3c0] sm:$0xff]
  %v149 = vld [vmem:[%s1 + $0x3c8] sm:$0xff]
  %v150 = vld [vmem:[%s1 + $0x3d0] sm:$0xff]
  %v151 = vld [vmem:[%s1 + $0x3d8] sm:$0xff]
  %v152 = vld [vmem:[%s1 + $0x3e0] sm:$0xff]
  %v153 = vld [vmem:[%s1 + $0x3e8] sm:$0xff]
  %v154 = vld [vmem:[%s1 + $0x3f0] sm:$0xff]
  %v155 = vld [vmem:[%s1 + $0x3f8] sm:$0xff]
  %v156 = vld [vmem:[%s2] sm:$0x3]
  %v158 = vperm.slane %v156, 0
  %v159 = vperm.slane %v156, 1
  %v166 = vunpack.c.l.b16 %v24
  %v167 = vunpack.c.h.b16 %v24
  %v168 = vunpack.c.l.b16 %v25
  %v169 = vunpack.c.h.b16 %v25
  %v170 = vunpack.c.l.b16 %v26
  %v171 = vunpack.c.h.b16 %v26
  %v172 = vunpack.c.l.b16 %v27
  %v173 = vunpack.c.h.b16 %v27
  %v174 = vpack.c.b16 %v166, %v166
  %v175 = vpack.c.b16 %v167, %v167
  %v176 = vpack.c.b16 %v168, %v168
  %v177 = vpack.c.b16 %v169, %v169
  %v178 = vpack.c.b16 %v170, %v170
  %v179 = vpack.c.b16 %v171, %v171
  %v180 = vpack.c.b16 %v172, %v172
  %v181 = vpack.c.b16 %v173, %v173
  %v318 = vunpack.c.l.b16 %v28
  %v319 = vunpack.c.h.b16 %v28
  %v320 = vunpack.c.l.b16 %v29
  %v321 = vunpack.c.h.b16 %v29
  %v322 = vunpack.c.l.b16 %v30
  %v323 = vunpack.c.h.b16 %v30
  %v324 = vunpack.c.l.b16 %v31
  %v325 = vunpack.c.h.b16 %v31
  %v326 = vunpack.c.l.b16 %v32
  %v327 = vunpack.c.h.b16 %v32
  %v328 = vunpack.c.l.b16 %v33
  %v329 = vunpack.c.h.b16 %v33
  %v330 = vunpack.c.l.b16 %v34
  %v331 = vunpack.c.h.b16 %v34
  %v332 = vunpack.c.l.b16 %v35
  %v333 = vunpack.c.h.b16 %v35
  %v334 = vunpack.c.l.b16 %v36
  %v335 = vunpack.c.h.b16 %v36
  %v336 = vunpack.c.l.b16 %v37
  %v337 = vunpack.c.h.b16 %v37
  %v338 = vunpack.c.l.b16 %v38
  %v339 = vunpack.c.h.b16 %v38
  %v340 = vunpack.c.l.b16 %v39
  %v341 = vunpack.c.h.b16 %v39
  %v342 = vunpack.c.l.b16 %v40
  %v343 = vunpack.c.h.b16 %v40
  %v344 = vunpack.c.l.b16 %v41
  %v345 = vunpack.c.h.b16 %v41
  %v346 = vunpack.c.l.b16 %v42
  %v347 = vunpack.c.h.b16 %v42
  %v348 = vunpack.c.l.b16 %v43
  %v349 = vunpack.c.h.b16 %v43
  %v350 = vunpack.c.l.b16 %v44
  %v351 = vunpack.c.h.b16 %v44
  %v352 = vunpack.c.l.b16 %v45
  %v353 = vunpack.c.h.b16 %v45
  %v354 = vunpack.c.l.b16 %v46
  %v355 = vunpack.c.h.b16 %v46
  %v356 = vunpack.c.l.b16 %v47
  %v357 = vunpack.c.h.b16 %v47
  %v358 = vunpack.c.l.b16 %v48
  %v359 = vunpack.c.h.b16 %v48
  %v360 = vunpack.c.l.b16 %v49
  %v361 = vunpack.c.h.b16 %v49
  %v362 = vunpack.c.l.b16 %v50
  %v363 = vunpack.c.h.b16 %v50
  %v364 = vunpack.c.l.b16 %v51
  %v365 = vunpack.c.h.b16 %v51
  %v366 = vunpack.c.l.b16 %v52
  %v367 = vunpack.c.h.b16 %v52
  %v368 = vunpack.c.l.b16 %v53
  %v369 = vunpack.c.h.b16 %v53
  %v370 = vunpack.c.l.b16 %v54
  %v371 = vunpack.c.h.b16 %v54
  %v372 = vunpack.c.l.b16 %v55
  %v373 = vunpack.c.h.b16 %v55
  %v374 = vunpack.c.l.b16 %v56
  %v375 = vunpack.c.h.b16 %v56
  %v376 = vunpack.c.l.b16 %v57
  %v377 = vunpack.c.h.b16 %v57
  %v378 = vunpack.c.l.b16 %v58
  %v379 = vunpack.c.h.b16 %v58
  %v380 = vunpack.c.l.b16 %v59
  %v381 = vunpack.c.h.b16 %v59
  %v382 = vunpack.c.l.b16 %v60
  %v383 = vunpack.c.h.b16 %v60
  %v384 = vunpack.c.l.b16 %v61
  %v385 = vunpack.c.h.b16 %v61
  %v386 = vunpack.c.l.b16 %v62
  %v387 = vunpack.c.h.b16 %v62
  %v388 = vunpack.c.l.b16 %v63
  %v389 = vunpack.c.h.b16 %v63
  %v390 = vunpack.c.l.b16 %v64
  %v391 = vunpack.c.h.b16 %v64
  %v392 = vunpack.c.l.b16 %v65
  %v393 = vunpack.c.h.b16 %v65
  %v394 = vunpack.c.l.b16 %v66
  %v395 = vunpack.c.h.b16 %v66
  %v396 = vunpack.c.l.b16 %v67
  %v397 = vunpack.c.h.b16 %v67
  %v398 = vunpack.c.l.b16 %v68
  %v399 = vunpack.c.h.b16 %v68
  %v400 = vunpack.c.l.b16 %v69
  %v401 = vunpack.c.h.b16 %v69
  %v402 = vunpack.c.l.b16 %v70
  %v403 = vunpack.c.h.b16 %v70
  %v404 = vunpack.c.l.b16 %v71
  %v405 = vunpack.c.h.b16 %v71
  %v406 = vunpack.c.l.b16 %v72
  %v407 = vunpack.c.h.b16 %v72
  %v408 = vunpack.c.l.b16 %v73
  %v409 = vunpack.c.h.b16 %v73
  %v410 = vunpack.c.l.b16 %v74
  %v411 = vunpack.c.h.b16 %v74
  %v412 = vunpack.c.l.b16 %v75
  %v413 = vunpack.c.h.b16 %v75
  %v414 = vunpack.c.l.b16 %v76
  %v415 = vunpack.c.h.b16 %v76
  %v416 = vunpack.c.l.b16 %v77
  %v417 = vunpack.c.h.b16 %v77
  %v418 = vunpack.c.l.b16 %v78
  %v419 = vunpack.c.h.b16 %v78
  %v420 = vunpack.c.l.b16 %v79
  %v421 = vunpack.c.h.b16 %v79
  %v422 = vunpack.c.l.b16 %v80
  %v423 = vunpack.c.h.b16 %v80
  %v424 = vunpack.c.l.b16 %v81
  %v425 = vunpack.c.h.b16 %v81
  %v426 = vunpack.c.l.b16 %v82
  %v427 = vunpack.c.h.b16 %v82
  %v428 = vunpack.c.l.b16 %v83
  %v429 = vunpack.c.h.b16 %v83
  %v430 = vunpack.c.l.b16 %v84
  %v431 = vunpack.c.h.b16 %v84
  %v432 = vunpack.c.l.b16 %v85
  %v433 = vunpack.c.h.b16 %v85
  %v434 = vunpack.c.l.b16 %v86
  %v435 = vunpack.c.h.b16 %v86
  %v436 = vunpack.c.l.b16 %v87
  %v437 = vunpack.c.h.b16 %v87
  %v438 = vunpack.c.l.b16 %v88
  %v439 = vunpack.c.h.b16 %v88
  %v440 = vunpack.c.l.b16 %v89
  %v441 = vunpack.c.h.b16 %v89
  %v442 = vunpack.c.l.b16 %v90
  %v443 = vunpack.c.h.b16 %v90
  %v444 = vunpack.c.l.b16 %v91
  %v445 = vunpack.c.h.b16 %v91
  %v446 = vunpack.c.l.b16 %v92
  %v447 = vunpack.c.h.b16 %v92
  %v448 = vunpack.c.l.b16 %v93
  %v449 = vunpack.c.h.b16 %v93
  %v450 = vunpack.c.l.b16 %v94
  %v451 = vunpack.c.h.b16 %v94
  %v452 = vunpack.c.l.b16 %v95
  %v453 = vunpack.c.h.b16 %v95
  %v454 = vunpack.c.l.b16 %v96
  %v455 = vunpack.c.h.b16 %v96
  %v456 = vunpack.c.l.b16 %v97
  %v457 = vunpack.c.h.b16 %v97
  %v458 = vunpack.c.l.b16 %v98
  %v459 = vunpack.c.h.b16 %v98
  %v460 = vunpack.c.l.b16 %v99
  %v461 = vunpack.c.h.b16 %v99
  %v462 = vunpack.c.l.b16 %v100
  %v463 = vunpack.c.h.b16 %v100
  %v464 = vunpack.c.l.b16 %v101
  %v465 = vunpack.c.h.b16 %v101
  %v466 = vunpack.c.l.b16 %v102
  %v467 = vunpack.c.h.b16 %v102
  %v468 = vunpack.c.l.b16 %v103
  %v469 = vunpack.c.h.b16 %v103
  %v470 = vunpack.c.l.b16 %v104
  %v471 = vunpack.c.h.b16 %v104
  %v472 = vunpack.c.l.b16 %v105
  %v473 = vunpack.c.h.b16 %v105
  %v474 = vunpack.c.l.b16 %v106
  %v475 = vunpack.c.h.b16 %v106
  %v476 = vunpack.c.l.b16 %v107
  %v477 = vunpack.c.h.b16 %v107
  %v478 = vunpack.c.l.b16 %v108
  %v479 = vunpack.c.h.b16 %v108
  %v480 = vunpack.c.l.b16 %v109
  %v481 = vunpack.c.h.b16 %v109
  %v482 = vunpack.c.l.b16 %v110
  %v483 = vunpack.c.h.b16 %v110
  %v484 = vunpack.c.l.b16 %v111
  %v485 = vunpack.c.h.b16 %v111
  %v486 = vunpack.c.l.b16 %v112
  %v487 = vunpack.c.h.b16 %v112
  %v488 = vunpack.c.l.b16 %v113
  %v489 = vunpack.c.h.b16 %v113
  %v490 = vunpack.c.l.b16 %v114
  %v491 = vunpack.c.h.b16 %v114
  %v492 = vunpack.c.l.b16 %v115
  %v493 = vunpack.c.h.b16 %v115
  %v494 = vunpack.c.l.b16 %v116
  %v495 = vunpack.c.h.b16 %v116
  %v496 = vunpack.c.l.b16 %v117
  %v497 = vunpack.c.h.b16 %v117
  %v498 = vunpack.c.l.b16 %v118
  %v499 = vunpack.c.h.b16 %v118
  %v500 = vunpack.c.l.b16 %v119
  %v501 = vunpack.c.h.b16 %v119
  %v502 = vunpack.c.l.b16 %v120
  %v503 = vunpack.c.h.b16 %v120
  %v504 = vunpack.c.l.b16 %v121
  %v505 = vunpack.c.h.b16 %v121
  %v506 = vunpack.c.l.b16 %v122
  %v507 = vunpack.c.h.b16 %v122
  %v508 = vunpack.c.l.b16 %v123
  %v509 = vunpack.c.h.b16 %v123
  %v510 = vunpack.c.l.b16 %v124
  %v511 = vunpack.c.h.b16 %v124
  %v512 = vunpack.c.l.b16 %v125
  %v513 = vunpack.c.h.b16 %v125
  %v514 = vunpack.c.l.b16 %v126
  %v515 = vunpack.c.h.b16 %v126
  %v516 = vunpack.c.l.b16 %v127
  %v517 = vunpack.c.h.b16 %v127
  %v518 = vunpack.c.l.b16 %v128
  %v519 = vunpack.c.h.b16 %v128
  %v520 = vunpack.c.l.b16 %v129
  %v521 = vunpack.c.h.b16 %v129
  %v522 = vunpack.c.l.b16 %v130
  %v523 = vunpack.c.h.b16 %v130
  %v524 = vunpack.c.l.b16 %v131
  %v525 = vunpack.c.h.b16 %v131
  %v526 = vunpack.c.l.b16 %v132
  %v527 = vunpack.c.h.b16 %v132
  %v528 = vunpack.c.l.b16 %v133
  %v529 = vunpack.c.h.b16 %v133
  %v530 = vunpack.c.l.b16 %v134
  %v531 = vunpack.c.h.b16 %v134
  %v532 = vunpack.c.l.b16 %v135
  %v533 = vunpack.c.h.b16 %v135
  %v534 = vunpack.c.l.b16 %v136
  %v535 = vunpack.c.h.b16 %v136
  %v536 = vunpack.c.l.b16 %v137
  %v537 = vunpack.c.h.b16 %v137
  %v538 = vunpack.c.l.b16 %v138
  %v539 = vunpack.c.h.b16 %v138
  %v540 = vunpack.c.l.b16 %v139
  %v541 = vunpack.c.h.b16 %v139
  %v542 = vunpack.c.l.b16 %v140
  %v543 = vunpack.c.h.b16 %v140
  %v544 = vunpack.c.l.b16 %v141
  %v545 = vunpack.c.h.b16 %v141
  %v546 = vunpack.c.l.b16 %v142
  %v547 = vunpack.c.h.b16 %v142
  %v548 = vunpack.c.l.b16 %v143
  %v549 = vunpack.c.h.b16 %v143
  %v550 = vunpack.c.l.b16 %v144
  %v551 = vunpack.c.h.b16 %v144
  %v552 = vunpack.c.l.b16 %v145
  %v553 = vunpack.c.h.b16 %v145
  %v554 = vunpack.c.l.b16 %v146
  %v555 = vunpack.c.h.b16 %v146
  %v556 = vunpack.c.l.b16 %v147
  %v557 = vunpack.c.h.b16 %v147
  %v558 = vunpack.c.l.b16 %v148
  %v559 = vunpack.c.h.b16 %v148
  %v560 = vunpack.c.l.b16 %v149
  %v561 = vunpack.c.h.b16 %v149
  %v562 = vunpack.c.l.b16 %v150
  %v563 = vunpack.c.h.b16 %v150
  %v564 = vunpack.c.l.b16 %v151
  %v565 = vunpack.c.h.b16 %v151
  %v566 = vunpack.c.l.b16 %v152
  %v567 = vunpack.c.h.b16 %v152
  %v568 = vunpack.c.l.b16 %v153
  %v569 = vunpack.c.h.b16 %v153
  %v570 = vunpack.c.l.b16 %v154
  %v571 = vunpack.c.h.b16 %v154
  %v572 = vunpack.c.l.b16 %v155
  %v573 = vunpack.c.h.b16 %v155
  %v574 = vpack.c.b16 %v320, %v318
  %v575 = vpack.c.b16 %v321, %v319
  %v576 = vpack.c.b16 %v324, %v322
  %v577 = vpack.c.b16 %v325, %v323
  %v578 = vpack.c.b16 %v328, %v326
  %v579 = vpack.c.b16 %v329, %v327
  %v580 = vpack.c.b16 %v332, %v330
  %v581 = vpack.c.b16 %v333, %v331
  %v582 = vpack.c.b16 %v336, %v334
  %v583 = vpack.c.b16 %v337, %v335
  %v584 = vpack.c.b16 %v340, %v338
  %v585 = vpack.c.b16 %v341, %v339
  %v586 = vpack.c.b16 %v344, %v342
  %v587 = vpack.c.b16 %v345, %v343
  %v588 = vpack.c.b16 %v348, %v346
  %v589 = vpack.c.b16 %v349, %v347
  %v590 = vpack.c.b16 %v352, %v350
  %v591 = vpack.c.b16 %v353, %v351
  %v592 = vpack.c.b16 %v356, %v354
  %v593 = vpack.c.b16 %v357, %v355
  %v594 = vpack.c.b16 %v360, %v358
  %v595 = vpack.c.b16 %v361, %v359
  %v596 = vpack.c.b16 %v364, %v362
  %v597 = vpack.c.b16 %v365, %v363
  %v598 = vpack.c.b16 %v368, %v366
  %v599 = vpack.c.b16 %v369, %v367
  %v600 = vpack.c.b16 %v372, %v370
  %v601 = vpack.c.b16 %v373, %v371
  %v602 = vpack.c.b16 %v376, %v374
  %v603 = vpack.c.b16 %v377, %v375
  %v604 = vpack.c.b16 %v380, %v378
  %v605 = vpack.c.b16 %v381, %v379
  %v606 = vpack.c.b16 %v384, %v382
  %v607 = vpack.c.b16 %v385, %v383
  %v608 = vpack.c.b16 %v388, %v386
  %v609 = vpack.c.b16 %v389, %v387
  %v610 = vpack.c.b16 %v392, %v390
  %v611 = vpack.c.b16 %v393, %v391
  %v612 = vpack.c.b16 %v396, %v394
  %v613 = vpack.c.b16 %v397, %v395
  %v614 = vpack.c.b16 %v400, %v398
  %v615 = vpack.c.b16 %v401, %v399
  %v616 = vpack.c.b16 %v404, %v402
  %v617 = vpack.c.b16 %v405, %v403
  %v618 = vpack.c.b16 %v408, %v406
  %v619 = vpack.c.b16 %v409, %v407
  %v620 = vpack.c.b16 %v412, %v410
  %v621 = vpack.c.b16 %v413, %v411
  %v622 = vpack.c.b16 %v416, %v414
  %v623 = vpack.c.b16 %v417, %v415
  %v624 = vpack.c.b16 %v420, %v418
  %v625 = vpack.c.b16 %v421, %v419
  %v626 = vpack.c.b16 %v424, %v422
  %v627 = vpack.c.b16 %v425, %v423
  %v628 = vpack.c.b16 %v428, %v426
  %v629 = vpack.c.b16 %v429, %v427
  %v630 = vpack.c.b16 %v432, %v430
  %v631 = vpack.c.b16 %v433, %v431
  %v632 = vpack.c.b16 %v436, %v434
  %v633 = vpack.c.b16 %v437, %v435
  %v634 = vpack.c.b16 %v440, %v438
  %v635 = vpack.c.b16 %v441, %v439
  %v636 = vpack.c.b16 %v444, %v442
  %v637 = vpack.c.b16 %v445, %v443
  %v638 = vpack.c.b16 %v448, %v446
  %v639 = vpack.c.b16 %v449, %v447
  %v640 = vpack.c.b16 %v452, %v450
  %v641 = vpack.c.b16 %v453, %v451
  %v642 = vpack.c.b16 %v456, %v454
  %v643 = vpack.c.b16 %v457, %v455
  %v644 = vpack.c.b16 %v460, %v458
  %v645 = vpack.c.b16 %v461, %v459
  %v646 = vpack.c.b16 %v464, %v462
  %v647 = vpack.c.b16 %v465, %v463
  %v648 = vpack.c.b16 %v468, %v466
  %v649 = vpack.c.b16 %v469, %v467
  %v650 = vpack.c.b16 %v472, %v470
  %v651 = vpack.c.b16 %v473, %v471
  %v652 = vpack.c.b16 %v476, %v474
  %v653 = vpack.c.b16 %v477, %v475
  %v654 = vpack.c.b16 %v480, %v478
  %v655 = vpack.c.b16 %v481, %v479
  %v656 = vpack.c.b16 %v484, %v482
  %v657 = vpack.c.b16 %v485, %v483
  %v658 = vpack.c.b16 %v488, %v486
  %v659 = vpack.c.b16 %v489, %v487
  %v660 = vpack.c.b16 %v492, %v490
  %v661 = vpack.c.b16 %v493, %v491
  %v662 = vpack.c.b16 %v496, %v494
  %v663 = vpack.c.b16 %v497, %v495
  %v664 = vpack.c.b16 %v500, %v498
  %v665 = vpack.c.b16 %v501, %v499
  %v666 = vpack.c.b16 %v504, %v502
  %v667 = vpack.c.b16 %v505, %v503
  %v668 = vpack.c.b16 %v508, %v506
  %v669 = vpack.c.b16 %v509, %v507
  %v670 = vpack.c.b16 %v512, %v510
  %v671 = vpack.c.b16 %v513, %v511
  %v672 = vpack.c.b16 %v516, %v514
  %v673 = vpack.c.b16 %v517, %v515
  %v674 = vpack.c.b16 %v520, %v518
  %v675 = vpack.c.b16 %v521, %v519
  %v676 = vpack.c.b16 %v524, %v522
  %v677 = vpack.c.b16 %v525, %v523
  %v678 = vpack.c.b16 %v528, %v526
  %v679 = vpack.c.b16 %v529, %v527
  %v680 = vpack.c.b16 %v532, %v530
  %v681 = vpack.c.b16 %v533, %v531
  %v682 = vpack.c.b16 %v536, %v534
  %v683 = vpack.c.b16 %v537, %v535
  %v684 = vpack.c.b16 %v540, %v538
  %v685 = vpack.c.b16 %v541, %v539
  %v686 = vpack.c.b16 %v544, %v542
  %v687 = vpack.c.b16 %v545, %v543
  %v688 = vpack.c.b16 %v548, %v546
  %v689 = vpack.c.b16 %v549, %v547
  %v690 = vpack.c.b16 %v552, %v550
  %v691 = vpack.c.b16 %v553, %v551
  %v692 = vpack.c.b16 %v556, %v554
  %v693 = vpack.c.b16 %v557, %v555
  %v694 = vpack.c.b16 %v560, %v558
  %v695 = vpack.c.b16 %v561, %v559
  %v696 = vpack.c.b16 %v564, %v562
  %v697 = vpack.c.b16 %v565, %v563
  %v698 = vpack.c.b16 %v568, %v566
  %v699 = vpack.c.b16 %v569, %v567
  %v700 = vpack.c.b16 %v572, %v570
  %v701 = vpack.c.b16 %v573, %v571
  %830 = vmatpush.bf16.msra.mxu0 %v588
  %831 = vmatpush.bf16.msra.mxu0 %v586
  %832 = vmatpush.bf16.msra.mxu0 %v584
  %833 = vmatpush.bf16.msra.mxu0 %v582
  %834 = vmatpush.bf16.msra.mxu0 %v580
  %835 = vmatpush.bf16.msra.mxu0 %v578
  %836 = vmatpush.bf16.msra.mxu0 %v576
  %837 = vmatpush.bf16.msra.mxu0 %v574
  %838 = vmatmul.bf16.gmra.mxu0 %v174
  %v839 = vpop.f32.mrf.mxu0
  %v840 = vadd.f32 %v158, %v839
  %v841 = vpop.f32.mrf.mxu0
  %842 = vdwg.mxu0
  %843 = vmatpush.bf16.msra.mxu0 %v604
  %844 = vmatpush.bf16.msra.mxu0 %v602
  %845 = vmatpush.bf16.msra.mxu0 %v600
  %846 = vmatpush.bf16.msra.mxu0 %v598
  %847 = vmatpush.bf16.msra.mxu0 %v596
  %848 = vmatpush.bf16.msra.mxu0 %v594
  %849 = vmatpush.bf16.msra.mxu0 %v592
  %850 = vmatpush.bf16.msra.mxu0 %v590
  %851 = vmatmul.bf16.gmra.mxu0 %v175
  %v852 = vpop.f32.mrf.mxu0
  %v853 = vadd.f32 %v840, %v852
  %v854 = vpop.f32.mrf.mxu0
  %855 = vdwg.mxu0
  %856 = vmatpush.bf16.msra.mxu0 %v620
  %857 = vmatpush.bf16.msra.mxu0 %v618
  %858 = vmatpush.bf16.msra.mxu0 %v616
  %859 = vmatpush.bf16.msra.mxu0 %v614
  %860 = vmatpush.bf16.msra.mxu0 %v612
  %861 = vmatpush.bf16.msra.mxu0 %v610
  %862 = vmatpush.bf16.msra.mxu0 %v608
  %863 = vmatpush.bf16.msra.mxu0 %v606
  %864 = vmatmul.bf16.gmra.mxu0 %v176
  %v865 = vpop.f32.mrf.mxu0
  %v866 = vadd.f32 %v853, %v865
  %v867 = vpop.f32.mrf.mxu0
  %868 = vdwg.mxu0
  %869 = vmatpush.bf16.msra.mxu0 %v636
  %870 = vmatpush.bf16.msra.mxu0 %v634
  %871 = vmatpush.bf16.msra.mxu0 %v632
  %872 = vmatpush.bf16.msra.mxu0 %v630
  %873 = vmatpush.bf16.msra.mxu0 %v628
  %874 = vmatpush.bf16.msra.mxu0 %v626
  %875 = vmatpush.bf16.msra.mxu0 %v624
  %876 = vmatpush.bf16.msra.mxu0 %v622
  %877 = vmatmul.bf16.gmra.mxu0 %v177
  %v878 = vpop.f32.mrf.mxu0
  %v879 = vadd.f32 %v866, %v878
  %v880 = vpop.f32.mrf.mxu0
  %881 = vdwg.mxu0
  %882 = vmatpush.bf16.msra.mxu0 %v652
  %883 = vmatpush.bf16.msra.mxu0 %v650
  %884 = vmatpush.bf16.msra.mxu0 %v648
  %885 = vmatpush.bf16.msra.mxu0 %v646
  %886 = vmatpush.bf16.msra.mxu0 %v644
  %887 = vmatpush.bf16.msra.mxu0 %v642
  %888 = vmatpush.bf16.msra.mxu0 %v640
  %889 = vmatpush.bf16.msra.mxu0 %v638
  %890 = vmatmul.bf16.gmra.mxu0 %v178
  %v891 = vpop.f32.mrf.mxu0
  %v892 = vadd.f32 %v879, %v891
  %v893 = vpop.f32.mrf.mxu0
  %894 = vdwg.mxu0
  %895 = vmatpush.bf16.msra.mxu0 %v668
  %896 = vmatpush.bf16.msra.mxu0 %v666
  %897 = vmatpush.bf16.msra.mxu0 %v664
  %898 = vmatpush.bf16.msra.mxu0 %v662
  %899 = vmatpush.bf16.msra.mxu0 %v660
  %900 = vmatpush.bf16.msra.mxu0 %v658
  %901 = vmatpush.bf16.msra.mxu0 %v656
  %902 = vmatpush.bf16.msra.mxu0 %v654
  %903 = vmatmul.bf16.gmra.mxu0 %v179
  %v904 = vpop.f32.mrf.mxu0
  %v905 = vadd.f32 %v892, %v904
  %v906 = vpop.f32.mrf.mxu0
  %907 = vdwg.mxu0
  %908 = vmatpush.bf16.msra.mxu0 %v684
  %909 = vmatpush.bf16.msra.mxu0 %v682
  %910 = vmatpush.bf16.msra.mxu0 %v680
  %911 = vmatpush.bf16.msra.mxu0 %v678
  %912 = vmatpush.bf16.msra.mxu0 %v676
  %913 = vmatpush.bf16.msra.mxu0 %v674
  %914 = vmatpush.bf16.msra.mxu0 %v672
  %915 = vmatpush.bf16.msra.mxu0 %v670
  %916 = vmatmul.bf16.gmra.mxu0 %v180
  %v917 = vpop.f32.mrf.mxu0
  %v918 = vadd.f32 %v905, %v917
  %v919 = vpop.f32.mrf.mxu0
  %920 = vdwg.mxu0
  %921 = vmatpush.bf16.msra.mxu0 %v700
  %922 = vmatpush.bf16.msra.mxu0 %v698
  %923 = vmatpush.bf16.msra.mxu0 %v696
  %924 = vmatpush.bf16.msra.mxu0 %v694
  %925 = vmatpush.bf16.msra.mxu0 %v692
  %926 = vmatpush.bf16.msra.mxu0 %v690
  %927 = vmatpush.bf16.msra.mxu0 %v688
  %928 = vmatpush.bf16.msra.mxu0 %v686
  %929 = vmatmul.bf16.gmra.mxu0 %v181
  %v930 = vpop.f32.mrf.mxu0
  %v931 = vadd.f32 %v918, %v930
  %v932 = vpop.f32.mrf.mxu0
  %933 = vdwg.mxu0
  %934 = vmatpush.bf16.msra.mxu0 %v589
  %935 = vmatpush.bf16.msra.mxu0 %v587
  %936 = vmatpush.bf16.msra.mxu0 %v585
  %937 = vmatpush.bf16.msra.mxu0 %v583
  %938 = vmatpush.bf16.msra.mxu0 %v581
  %939 = vmatpush.bf16.msra.mxu0 %v579
  %940 = vmatpush.bf16.msra.mxu0 %v577
  %941 = vmatpush.bf16.msra.mxu0 %v575
  %942 = vmatmul.bf16.gmra.mxu0 %v174
  %v943 = vpop.f32.mrf.mxu0
  %v944 = vadd.f32 %v159, %v943
  %v945 = vpop.f32.mrf.mxu0
  %946 = vdwg.mxu0
  %947 = vmatpush.bf16.msra.mxu0 %v605
  %948 = vmatpush.bf16.msra.mxu0 %v603
  %949 = vmatpush.bf16.msra.mxu0 %v601
  %950 = vmatpush.bf16.msra.mxu0 %v599
  %951 = vmatpush.bf16.msra.mxu0 %v597
  %952 = vmatpush.bf16.msra.mxu0 %v595
  %953 = vmatpush.bf16.msra.mxu0 %v593
  %954 = vmatpush.bf16.msra.mxu0 %v591
  %955 = vmatmul.bf16.gmra.mxu0 %v175
  %v956 = vpop.f32.mrf.mxu0
  %v957 = vadd.f32 %v944, %v956
  %v958 = vpop.f32.mrf.mxu0
  %959 = vdwg.mxu0
  %960 = vmatpush.bf16.msra.mxu0 %v621
  %961 = vmatpush.bf16.msra.mxu0 %v619
  %962 = vmatpush.bf16.msra.mxu0 %v617
  %963 = vmatpush.bf16.msra.mxu0 %v615
  %964 = vmatpush.bf16.msra.mxu0 %v613
  %965 = vmatpush.bf16.msra.mxu0 %v611
  %966 = vmatpush.bf16.msra.mxu0 %v609
  %967 = vmatpush.bf16.msra.mxu0 %v607
  %968 = vmatmul.bf16.gmra.mxu0 %v176
  %v969 = vpop.f32.mrf.mxu0
  %v970 = vadd.f32 %v957, %v969
  %v971 = vpop.f32.mrf.mxu0
  %972 = vdwg.mxu0
  %973 = vmatpush.bf16.msra.mxu0 %v637
  %974 = vmatpush.bf16.msra.mxu0 %v635
  %975 = vmatpush.bf16.msra.mxu0 %v633
  %976 = vmatpush.bf16.msra.mxu0 %v631
  %977 = vmatpush.bf16.msra.mxu0 %v629
  %978 = vmatpush.bf16.msra.mxu0 %v627
  %979 = vmatpush.bf16.msra.mxu0 %v625
  %980 = vmatpush.bf16.msra.mxu0 %v623
  %981 = vmatmul.bf16.gmra.mxu0 %v177
  %v982 = vpop.f32.mrf.mxu0
  %v983 = vadd.f32 %v970, %v982
  %v984 = vpop.f32.mrf.mxu0
  %985 = vdwg.mxu0
  %986 = vmatpush.bf16.msra.mxu0 %v653
  %987 = vmatpush.bf16.msra.mxu0 %v651
  %988 = vmatpush.bf16.msra.mxu0 %v649
  %989 = vmatpush.bf16.msra.mxu0 %v647
  %990 = vmatpush.bf16.msra.mxu0 %v645
  %991 = vmatpush.bf16.msra.mxu0 %v643
  %992 = vmatpush.bf16.msra.mxu0 %v641
  %993 = vmatpush.bf16.msra.mxu0 %v639
  %994 = vmatmul.bf16.gmra.mxu0 %v178
  %v995 = vpop.f32.mrf.mxu0
  %v996 = vadd.f32 %v983, %v995
  %v997 = vpop.f32.mrf.mxu0
  %998 = vdwg.mxu0
  %999 = vmatpush.bf16.msra.mxu0 %v669
  %1000 = vmatpush.bf16.msra.mxu0 %v667
  %1001 = vmatpush.bf16.msra.mxu0 %v665
  %1002 = vmatpush.bf16.msra.mxu0 %v663
  %1003 = vmatpush.bf16.msra.mxu0 %v661
  %1004 = vmatpush.bf16.msra.mxu0 %v659
  %1005 = vmatpush.bf16.msra.mxu0 %v657
  %1006 = vmatpush.bf16.msra.mxu0 %v655
  %1007 = vmatmul.bf16.gmra.mxu0 %v179
  %v1008 = vpop.f32.mrf.mxu0
  %v1009 = vadd.f32 %v996, %v1008
  %v1010 = vpop.f32.mrf.mxu0
  %1011 = vdwg.mxu0
  %1012 = vmatpush.bf16.msra.mxu0 %v685
  %1013 = vmatpush.bf16.msra.mxu0 %v683
  %1014 = vmatpush.bf16.msra.mxu0 %v681
  %1015 = vmatpush.bf16.msra.mxu0 %v679
  %1016 = vmatpush.bf16.msra.mxu0 %v677
  %1017 = vmatpush.bf16.msra.mxu0 %v675
  %1018 = vmatpush.bf16.msra.mxu0 %v673
  %1019 = vmatpush.bf16.msra.mxu0 %v671
  %1020 = vmatmul.bf16.gmra.mxu0 %v180
  %v1021 = vpop.f32.mrf.mxu0
  %v1022 = vadd.f32 %v1009, %v1021
  %v1023 = vpop.f32.mrf.mxu0
  %1024 = vdwg.mxu0
  %1025 = vmatpush.bf16.msra.mxu0 %v701
  %1026 = vmatpush.bf16.msra.mxu0 %v699
  %1027 = vmatpush.bf16.msra.mxu0 %v697
  %1028 = vmatpush.bf16.msra.mxu0 %v695
  %1029 = vmatpush.bf16.msra.mxu0 %v693
  %1030 = vmatpush.bf16.msra.mxu0 %v691
  %1031 = vmatpush.bf16.msra.mxu0 %v689
  %1032 = vmatpush.bf16.msra.mxu0 %v687
  %1033 = vmatmul.bf16.gmra.mxu0 %v181
  %v1034 = vpop.f32.mrf.mxu0
  %v1035 = vadd.f32 %v1022, %v1034
  %v1036 = vpop.f32.mrf.mxu0
  %1037 = vdwg.mxu0
  %s1038 = sld [smem:[#allocation2]]
  %vm1039 = vcmp.gt.f32.partialorder %v931, 0.0
  %vm1040 = vcmp.gt.f32.partialorder %v1035, 0.0
  %v1041 = vstv %s1038
  %v1042 = vmul.f32 %v1041, %v931
  %v1043 = vmul.f32 %v1041, %v1035
  %v1044 = vsel %vm1039, %v931, %v1042
  %v1045 = vsel %vm1040, %v1035, %v1043
  %v1046 = vpack.c.bf16 %v1044, %v1044
  %v1047 = vpack.c.bf16 %v1045, %v1045
  %v1048 = vld [vmem:[%s4] sm:$0xff]
  %v1049 = vld [vmem:[%s4 + $0x8] sm:$0xff]
  %v1050 = vld [vmem:[%s4 + $0x10] sm:$0xff]
  %v1051 = vld [vmem:[%s4 + $0x18] sm:$0xff]
  %v1052 = vld [vmem:[%s4 + $0x20] sm:$0xff]
  %v1053 = vld [vmem:[%s4 + $0x28] sm:$0xff]
  %v1054 = vld [vmem:[%s4 + $0x30] sm:$0xff]
  %v1055 = vld [vmem:[%s4 + $0x38] sm:$0xff]
  %v1056 = vld [vmem:[%s4 + $0x40] sm:$0xff]
  %v1057 = vld [vmem:[%s4 + $0x48] sm:$0xff]
  %v1058 = vld [vmem:[%s4 + $0x50] sm:$0xff]
  %v1059 = vld [vmem:[%s4 + $0x58] sm:$0xff]
  %v1060 = vld [vmem:[%s4 + $0x60] sm:$0xff]
  %v1061 = vld [vmem:[%s4 + $0x68] sm:$0xff]
  %v1062 = vld [vmem:[%s4 + $0x70] sm:$0xff]
  %v1063 = vld [vmem:[%s4 + $0x78] sm:$0xff]
  %v1064 = vld [vmem:[%s4 + $0x80] sm:$0xff]
  %v1065 = vld [vmem:[%s4 + $0x88] sm:$0xff]
  %v1066 = vld [vmem:[%s4 + $0x90] sm:$0xff]
  %v1067 = vld [vmem:[%s4 + $0x98] sm:$0xff]
  %v1068 = vld [vmem:[%s4 + $0xa0] sm:$0xff]
  %v1069 = vld [vmem:[%s4 + $0xa8] sm:$0xff]
  %v1070 = vld [vmem:[%s4 + $0xb0] sm:$0xff]
  %v1071 = vld [vmem:[%s4 + $0xb8] sm:$0xff]
  %v1072 = vld [vmem:[%s4 + $0xc0] sm:$0xff]
  %v1073 = vld [vmem:[%s4 + $0xc8] sm:$0xff]
  %v1074 = vld [vmem:[%s4 + $0xd0] sm:$0xff]
  %v1075 = vld [vmem:[%s4 + $0xd8] sm:$0xff]
  %v1076 = vld [vmem:[%s4 + $0xe0] sm:$0xff]
  %v1077 = vld [vmem:[%s4 + $0xe8] sm:$0xff]
  %v1078 = vld [vmem:[%s4 + $0xf0] sm:$0xff]
  %v1079 = vld [vmem:[%s4 + $0xf8] sm:$0xff]
  %v1080 = vld [vmem:[%s5] sm:$0x3]
  %v1082 = vperm.slane %v1080, 0
  %v1083 = vperm.slane %v1080, 1
  %v1118 = vunpack.c.l.b16 %v1048
  %v1119 = vunpack.c.h.b16 %v1048
  %v1120 = vunpack.c.l.b16 %v1049
  %v1121 = vunpack.c.h.b16 %v1049
  %v1122 = vunpack.c.l.b16 %v1050
  %v1123 = vunpack.c.h.b16 %v1050
  %v1124 = vunpack.c.l.b16 %v1051
  %v1125 = vunpack.c.h.b16 %v1051
  %v1126 = vunpack.c.l.b16 %v1052
  %v1127 = vunpack.c.h.b16 %v1052
  %v1128 = vunpack.c.l.b16 %v1053
  %v1129 = vunpack.c.h.b16 %v1053
  %v1130 = vunpack.c.l.b16 %v1054
  %v1131 = vunpack.c.h.b16 %v1054
  %v1132 = vunpack.c.l.b16 %v1055
  %v1133 = vunpack.c.h.b16 %v1055
  %v1134 = vunpack.c.l.b16 %v1056
  %v1135 = vunpack.c.h.b16 %v1056
  %v1136 = vunpack.c.l.b16 %v1057
  %v1137 = vunpack.c.h.b16 %v1057
  %v1138 = vunpack.c.l.b16 %v1058
  %v1139 = vunpack.c.h.b16 %v1058
  %v1140 = vunpack.c.l.b16 %v1059
  %v1141 = vunpack.c.h.b16 %v1059
  %v1142 = vunpack.c.l.b16 %v1060
  %v1143 = vunpack.c.h.b16 %v1060
  %v1144 = vunpack.c.l.b16 %v1061
  %v1145 = vunpack.c.h.b16 %v1061
  %v1146 = vunpack.c.l.b16 %v1062
  %v1147 = vunpack.c.h.b16 %v1062
  %v1148 = vunpack.c.l.b16 %v1063
  %v1149 = vunpack.c.h.b16 %v1063
  %v1150 = vunpack.c.l.b16 %v1064
  %v1151 = vunpack.c.h.b16 %v1064
  %v1152 = vunpack.c.l.b16 %v1065
  %v1153 = vunpack.c.h.b16 %v1065
  %v1154 = vunpack.c.l.b16 %v1066
  %v1155 = vunpack.c.h.b16 %v1066
  %v1156 = vunpack.c.l.b16 %v1067
  %v1157 = vunpack.c.h.b16 %v1067
  %v1158 = vunpack.c.l.b16 %v1068
  %v1159 = vunpack.c.h.b16 %v1068
  %v1160 = vunpack.c.l.b16 %v1069
  %v1161 = vunpack.c.h.b16 %v1069
  %v1162 = vunpack.c.l.b16 %v1070
  %v1163 = vunpack.c.h.b16 %v1070
  %v1164 = vunpack.c.l.b16 %v1071
  %v1165 = vunpack.c.h.b16 %v1071
  %v1166 = vunpack.c.l.b16 %v1072
  %v1167 = vunpack.c.h.b16 %v1072
  %v1168 = vunpack.c.l.b16 %v1073
  %v1169 = vunpack.c.h.b16 %v1073
  %v1170 = vunpack.c.l.b16 %v1074
  %v1171 = vunpack.c.h.b16 %v1074
  %v1172 = vunpack.c.l.b16 %v1075
  %v1173 = vunpack.c.h.b16 %v1075
  %v1174 = vunpack.c.l.b16 %v1076
  %v1175 = vunpack.c.h.b16 %v1076
  %v1176 = vunpack.c.l.b16 %v1077
  %v1177 = vunpack.c.h.b16 %v1077
  %v1178 = vunpack.c.l.b16 %v1078
  %v1179 = vunpack.c.h.b16 %v1078
  %v1180 = vunpack.c.l.b16 %v1079
  %v1181 = vunpack.c.h.b16 %v1079
  %v1182 = vpack.c.b16 %v1120, %v1118
  %v1183 = vpack.c.b16 %v1121, %v1119
  %v1184 = vpack.c.b16 %v1124, %v1122
  %v1185 = vpack.c.b16 %v1125, %v1123
  %v1186 = vpack.c.b16 %v1128, %v1126
  %v1187 = vpack.c.b16 %v1129, %v1127
  %v1188 = vpack.c.b16 %v1132, %v1130
  %v1189 = vpack.c.b16 %v1133, %v1131
  %v1190 = vpack.c.b16 %v1136, %v1134
  %v1191 = vpack.c.b16 %v1137, %v1135
  %v1192 = vpack.c.b16 %v1140, %v1138
  %v1193 = vpack.c.b16 %v1141, %v1139
  %v1194 = vpack.c.b16 %v1144, %v1142
  %v1195 = vpack.c.b16 %v1145, %v1143
  %v1196 = vpack.c.b16 %v1148, %v1146
  %v1197 = vpack.c.b16 %v1149, %v1147
  %v1198 = vpack.c.b16 %v1152, %v1150
  %v1199 = vpack.c.b16 %v1153, %v1151
  %v1200 = vpack.c.b16 %v1156, %v1154
  %v1201 = vpack.c.b16 %v1157, %v1155
  %v1202 = vpack.c.b16 %v1160, %v1158
  %v1203 = vpack.c.b16 %v1161, %v1159
  %v1204 = vpack.c.b16 %v1164, %v1162
  %v1205 = vpack.c.b16 %v1165, %v1163
  %v1206 = vpack.c.b16 %v1168, %v1166
  %v1207 = vpack.c.b16 %v1169, %v1167
  %v1208 = vpack.c.b16 %v1172, %v1170
  %v1209 = vpack.c.b16 %v1173, %v1171
  %v1210 = vpack.c.b16 %v1176, %v1174
  %v1211 = vpack.c.b16 %v1177, %v1175
  %v1212 = vpack.c.b16 %v1180, %v1178
  %v1213 = vpack.c.b16 %v1181, %v1179
  %1246 = vmatpush.bf16.msra.mxu0 %v1196
  %1247 = vmatpush.bf16.msra.mxu0 %v1194
  %1248 = vmatpush.bf16.msra.mxu0 %v1192
  %1249 = vmatpush.bf16.msra.mxu0 %v1190
  %1250 = vmatpush.bf16.msra.mxu0 %v1188
  %1251 = vmatpush.bf16.msra.mxu0 %v1186
  %1252 = vmatpush.bf16.msra.mxu0 %v1184
  %1253 = vmatpush.bf16.msra.mxu0 %v1182
  %1254 = vmatmul.bf16.gmra.mxu0 %v1046
  %v1255 = vpop.f32.mrf.mxu0
  %v1256 = vadd.f32 %v1082, %v1255
  %v1257 = vpop.f32.mrf.mxu0
  %1258 = vdwg.mxu0
  %1259 = vmatpush.bf16.msra.mxu0 %v1212
  %1260 = vmatpush.bf16.msra.mxu0 %v1210
  %1261 = vmatpush.bf16.msra.mxu0 %v1208
  %1262 = vmatpush.bf16.msra.mxu0 %v1206
  %1263 = vmatpush.bf16.msra.mxu0 %v1204
  %1264 = vmatpush.bf16.msra.mxu0 %v1202
  %1265 = vmatpush.bf16.msra.mxu0 %v1200
  %1266 = vmatpush.bf16.msra.mxu0 %v1198
  %1267 = vmatmul.bf16.gmra.mxu0 %v1047
  %v1268 = vpop.f32.mrf.mxu0
  %v1269 = vadd.f32 %v1256, %v1268
  %v1270 = vpop.f32.mrf.mxu0
  %1271 = vdwg.mxu0
  %1272 = vmatpush.bf16.msra.mxu0 %v1197
  %1273 = vmatpush.bf16.msra.mxu0 %v1195
  %1274 = vmatpush.bf16.msra.mxu0 %v1193
  %1275 = vmatpush.bf16.msra.mxu0 %v1191
  %1276 = vmatpush.bf16.msra.mxu0 %v1189
  %1277 = vmatpush.bf16.msra.mxu0 %v1187
  %1278 = vmatpush.bf16.msra.mxu0 %v1185
  %1279 = vmatpush.bf16.msra.mxu0 %v1183
  %1280 = vmatmul.bf16.gmra.mxu0 %v1046
  %v1281 = vpop.f32.mrf.mxu0
  %v1282 = vadd.f32 %v1083, %v1281
  %v1283 = vpop.f32.mrf.mxu0
  %1284 = vdwg.mxu0
  %1285 = vmatpush.bf16.msra.mxu0 %v1213
  %1286 = vmatpush.bf16.msra.mxu0 %v1211
  %1287 = vmatpush.bf16.msra.mxu0 %v1209
  %1288 = vmatpush.bf16.msra.mxu0 %v1207
  %1289 = vmatpush.bf16.msra.mxu0 %v1205
  %1290 = vmatpush.bf16.msra.mxu0 %v1203
  %1291 = vmatpush.bf16.msra.mxu0 %v1201
  %1292 = vmatpush.bf16.msra.mxu0 %v1199
  %1293 = vmatmul.bf16.gmra.mxu0 %v1047
  %v1294 = vpop.f32.mrf.mxu0
  %v1295 = vadd.f32 %v1282, %v1294
  %v1296 = vpop.f32.mrf.mxu0
  %1297 = vdwg.mxu0
  %1298 = vst [vmem:[%s6] sm:$0xff] %v1269
  %1299 = vst [vmem:[%s6 + $0x8] sm:$0xff] %v1295
  // Predicated region
  $region26: #{triplet_net_forward.5} parent=0 // pred_check
    _
  $region27: #{triplet_net_forward.5} parent=0 // pred_check_branch
    %1301 = sbr.rel (0) target = $region29
  $region28: #{triplet_net_forward.5} parent=0 // pred_region
    _
  $region29: #{triplet_net_forward.5} parent=0 // pred_fallthru
    _
  // Predicated region
  $region30: #{triplet_net_forward.5} parent=0 // pred_check
    _
  $region31: #{triplet_net_forward.5} parent=0 // pred_check_branch
    %1303 = sbr.rel (0) target = $region33
  $region32: #{triplet_net_forward.5} parent=0 // pred_region
    _
  $region33: #{triplet_net_forward.5} parent=0 // pred_fallthru
    _

</llo_original>
